<compile_context>
chip_gen: v5e
topology: v5e:2x2
jax: 0.10.0
libtpu: 0.0.40
codegen_flags: <defaults>
</compile_context>

<pallas_src>
import functools

import jax
import jax.numpy as jnp
from jax.experimental import pallas as pl
from jax.experimental.pallas import tpu as pltpu


def _round_up(x, m):
    return (x + m - 1) // m * m


def multihead_kernel(x_ref, w0_ref, w_ref, b_ref, o_ref, *, n_layers):
    """One batch tile through all (zero-padded, stacked) layers.

    x_ref : (tile_b, F)     activations, streamed in caller dtype (f32 or bf16)
    w0_ref: (F, D)          first-layer weight (compute dtype), zero padded cols
    w_ref : (L-1, D, D)     stacked remaining weights (compute dtype), zero padded
    b_ref : (L, 1, D)       stacked biases (f32), zero padded
    o_ref : (tile_b, D)     lane-dense padded output; cols [:n_output] are real
    """
    cdt = w0_ref.dtype                      # compute dtype for MXU operands
    # Layer 0: (tile_b, F) @ (F, D); x is never column-padded.
    h = jnp.dot(x_ref[...].astype(cdt), w0_ref[...],
                preferred_element_type=jnp.float32)
    h = jnp.maximum(h + b_ref[0], 0.0)      # ReLU; zero-padded cols stay zero
    for i in range(1, n_layers):            # static unroll (5 more virtual layers)
        acc = jnp.dot(h.astype(cdt), w_ref[i - 1],
                      preferred_element_type=jnp.float32)
        acc = acc + b_ref[i]                # (1, D) broadcast, f32
        if i < n_layers - 1:
            acc = jnp.maximum(acc, 0.0)
        h = acc
    o_ref[...] = h.astype(o_ref.dtype)


def multihead_forward(x, w0, packed_w, packed_b, n_output, *, block_b=1024):
    """x: (B, F) in f32 or bf16.  Returns (B, n_output) f32."""
    B, F = x.shape
    L = packed_b.shape[0]
    D = packed_w.shape[-1]

    # Batch tile: as large as block_b allows (amortizes per-step overhead),
    # 16-row aligned (bf16 sublane packing).  Keep >=2 grid steps when the batch
    # is big enough so the "parallel" axis can split across v7x's two TensorCores.
    tile_b = min(block_b, _round_up(B, 16))
    b_pad = _round_up(B, tile_b)
    if b_pad // tile_b == 1 and B >= 512:
        tile_b = _round_up((B + 1) // 2, 16)
        b_pad = _round_up(B, tile_b)
    grid = (b_pad // tile_b,)

    # Only pad batch rows (and only when needed) -- no materialized (b_pad, D) pad.
    x_in = x if b_pad == B else jnp.pad(x, ((0, b_pad - B), (0, 0)))

    flops = 2 * b_pad * (F * D + (L - 1) * D * D)
    bytes_accessed = (x_in.size * x_in.dtype.itemsize
                      + w0.size * w0.dtype.itemsize
                      + packed_w.size * packed_w.dtype.itemsize
                      + packed_b.size * 4
                      + b_pad * D * 4)

    kernel = functools.partial(multihead_kernel, n_layers=L)
    out = pl.pallas_call(
        kernel,
        out_shape=jax.ShapeDtypeStruct((b_pad, D), jnp.float32),
        grid=grid,
        in_specs=[
            pl.BlockSpec((tile_b, F), lambda i: (i, 0)),       # batch tile, pipelined
            pl.BlockSpec((F, D), lambda i: (0, 0)),            # first-layer weight, resident
            pl.BlockSpec((L - 1, D, D), lambda i: (0, 0, 0)),  # remaining weights, resident
            pl.BlockSpec((L, 1, D), lambda i: (0, 0, 0)),      # biases, resident
        ],
        out_specs=pl.BlockSpec((tile_b, D), lambda i: (i, 0)),
        compiler_params=pltpu.CompilerParams(
            dimension_semantics=("parallel",)),                # tiles over TCs (v7x)
        cost_estimate=pl.CostEstimate(flops=flops, transcendentals=0,
                                      bytes_accessed=bytes_accessed),
    )(x_in, w0, packed_w, packed_b)
    # VMEM note: per-core live set at tile_b=1024, D=128 is ~2*(x + out) blocks
    # + 2x resident weights ~= 2.5 MiB -- far under v7x's 32 MiB scoped limit,
    # so no vmem_limit_bytes override needed.
    return out[:B, :n_output]


def init_params(key, n_feature, n_hidden, n_output):
    """PyTorch-default-equivalent init; weights stored (in, out) = W_pt.T."""
    def linear(k, fan_in, fan_out):
        kw, kb = jax.random.split(k)
        bound = 1.0 / (fan_in ** 0.5)
        w = jax.random.uniform(kw, (fan_in, fan_out), jnp.float32, -bound, bound)
        b = jax.random.uniform(kb, (fan_out,), jnp.float32, -bound, bound)
        return w, b

    trunk_dims = [(n_feature, n_hidden), (n_hidden, 2 * n_hidden),
                  (2 * n_hidden, n_hidden), (n_hidden, n_hidden // 2)]
    trunk = []
    for din, dout in trunk_dims:
        key, sub = jax.random.split(key)
        trunk.append(linear(sub, din, dout))

    heads = []
    for _ in range(n_output):
        key, k1, k2 = jax.random.split(key, 3)
        heads.append((linear(k1, n_hidden // 2, n_hidden // 4),
                      linear(k2, n_hidden // 4, 1)))
    return trunk, heads


def pack_params(trunk, heads, compute_dtype=jnp.float32):
    """Fold trunk + heads into 6 virtual layers; lane-pad to D = multiple of 128."""
    n_output = len(heads)
    q = heads[0][0][0].shape[1]                                   # n_hidden // 4

    layers = list(trunk)
    w_h1 = jnp.concatenate([h[0][0] for h in heads], axis=1)      # (H/2, n_out*q)
    b_h1 = jnp.concatenate([h[0][1] for h in heads], axis=0)      # (n_out*q,)
    w_h2 = jnp.zeros((n_output * q, n_output), jnp.float32)       # block-diagonal
    for i, (_, (w2, _)) in enumerate(heads):
        w_h2 = w_h2.at[i * q:(i + 1) * q, i].set(w2[:, 0])
    b_h2 = jnp.concatenate([h[1][1] for h in heads], axis=0)      # (n_output,)
    layers += [(w_h1, b_h1), (w_h2, b_h2)]

    # Shared lane width D: multiple of 128 (full vreg lanes, unmasked stores,
    # MXU-aligned).  The first layer's fan_in (n_feature) is kept out of D so
    # x can stream unpadded.
    dims = ([w.shape[1] for (w, _) in layers]
            + [w.shape[0] for (w, _) in layers[1:]])
    D = _round_up(max(dims), 128)
    L = len(layers)

    w0, b0 = layers[0]
    F = w0.shape[0]
    w0_p = jnp.zeros((F, D), jnp.float32).at[:, :w0.shape[1]].set(w0)
    packed_w = jnp.zeros((L - 1, D, D), jnp.float32)
    packed_b = jnp.zeros((L, 1, D), jnp.float32)
    packed_b = packed_b.at[0, 0, :b0.shape[0]].set(b0)
    for i, (w, b) in enumerate(layers[1:], start=1):
        packed_w = packed_w.at[i - 1, :w.shape[0], :w.shape[1]].set(w)
        packed_b = packed_b.at[i, 0, :b.shape[0]].set(b)
    return (w0_p.astype(compute_dtype), packed_w.astype(compute_dtype),
            packed_b, D)


def reference_forward(x, trunk, heads, compute_dtype=jnp.float32):
    """Structurally mirrors the PyTorch forward (trunk, then per-head + concat)."""
    h = x
    for w, b in trunk:
        h = jnp.dot(h.astype(compute_dtype), w.astype(compute_dtype),
                    preferred_element_type=jnp.float32) + b
        h = jnp.maximum(h, 0.0)
    outs = []
    for (w1, b1), (w2, b2) in heads:
        t = jnp.dot(h.astype(compute_dtype), w1.astype(compute_dtype),
                    preferred_element_type=jnp.float32) + b1
        t = jnp.maximum(t, 0.0)
        t = jnp.dot(t.astype(compute_dtype), w2.astype(compute_dtype),
                    preferred_element_type=jnp.float32) + b2
        outs.append(t)
    return jnp.concatenate(outs, axis=1)


if __name__ == "__main__":
    key = jax.random.PRNGKey(0)
    n_feature, n_hidden, n_output = 32, 32, 4

    kx, kx2, kp = jax.random.split(key, 3)
    trunk, heads = init_params(kp, n_feature, n_hidden, n_output)

    # f32 path (exact PyTorch semantics): B=2048 -> two 1024-row "parallel" tiles,
    # no input padding/copy at all.
    x = jax.random.normal(kx, (2048, n_feature), dtype=jnp.float32)
    w0, pw, pb, _ = pack_params(trunk, heads, compute_dtype=jnp.float32)
    out = jax.block_until_ready(multihead_forward(x, w0, pw, pb, n_output))
    ref = reference_forward(x, trunk, heads, compute_dtype=jnp.float32)
    assert out.shape == (2048, n_output)
    assert jnp.allclose(out, ref, atol=1e-4, rtol=1e-4), \
        float(jnp.max(jnp.abs(out - ref)))

    # bf16-operand path (f32 accumulation): x streamed in bf16 (half the input DMA
    # bytes -- biggest relative win on v5e); ragged B=100 exercises the batch pad.
    xb = jax.random.normal(kx2, (100, n_feature), dtype=jnp.float32)
    w0b, pwb, pbb, _ = pack_params(trunk, heads, compute_dtype=jnp.bfloat16)
    out16 = jax.block_until_ready(
        multihead_forward(xb.astype(jnp.bfloat16), w0b, pwb, pbb, n_output))
    ref16 = reference_forward(xb, trunk, heads, compute_dtype=jnp.bfloat16)
    assert out16.shape == (100, n_output)
    assert jnp.allclose(out16, ref16, atol=5e-2, rtol=5e-2), \
        float(jnp.max(jnp.abs(out16 - ref16)))

    print("KERNEL_OK")
</pallas_src>

<mosaic_0001>
module attributes {stable_mosaic.version = 11 : i64} {
  func.func @multihead_kernel(%arg0: i32, %arg1: memref<1024x32xf32, #tpu.memory_space<vmem>>, %arg2: memref<32x128xf32, #tpu.memory_space<vmem>>, %arg3: memref<5x128x128xf32, #tpu.memory_space<vmem>>, %arg4: memref<6x1x128xf32, #tpu.memory_space<vmem>>, %arg5: memref<1024x128xf32, #tpu.memory_space<vmem>>) attributes {dimension_semantics = [#tpu.dimension_semantics<parallel>], iteration_bounds = array<i64: 2>, scalar_prefetch = 0 : i64, scratch_operands = 0 : i64, tpu.core_type = #tpu.core_type<tc>, window_params = [{transform_indices = @transform_0, window_bounds = array<i64: 1024, 32>}, {pipeline_mode = #tpu.pipeline_mode<synchronous>, transform_indices = @transform_1, window_bounds = array<i64: 32, 128>}, {pipeline_mode = #tpu.pipeline_mode<synchronous>, transform_indices = @transform_2, window_bounds = array<i64: 5, 128, 128>}, {pipeline_mode = #tpu.pipeline_mode<synchronous>, transform_indices = @transform_3, window_bounds = array<i64: 6, 1, 128>}, {transform_indices = @transform_4, window_bounds = array<i64: 1024, 128>}]} {
    %c0 = arith.constant 0 : index
    %c0_0 = arith.constant 0 : index
    %0 = vector.load %arg1[%c0, %c0_0] : memref<1024x32xf32, #tpu.memory_space<vmem>>, vector<1024x32xf32>
    %c0_1 = arith.constant 0 : index
    %c0_2 = arith.constant 0 : index
    %1 = vector.load %arg2[%c0_1, %c0_2] : memref<32x128xf32, #tpu.memory_space<vmem>>, vector<32x128xf32>
    %cst = arith.constant dense<0.000000e+00> : vector<1024x128xf32>
    %2 = tpu.matmul %0, %1, %cst {dimension_numbers = #tpu.dot_dimension_numbers<[1], [0], [0], [1], [0, 0, 1, 1], [], []>} : vector<1024x32xf32>, vector<32x128xf32>, vector<1024x128xf32> -> vector<1024x128xf32>
    %c0_3 = arith.constant 0 : index
    %c0_4 = arith.constant 0 : index
    %c0_5 = arith.constant 0 : index
    %3 = vector.load %arg4[%c0_3, %c0_4, %c0_5] : memref<6x1x128xf32, #tpu.memory_space<vmem>>, vector<1x1x128xf32>
    %4 = vector.shape_cast %3 : vector<1x1x128xf32> to vector<1x128xf32>
    %5 = vector.broadcast %4 : vector<1x128xf32> to vector<1024x128xf32>
    %6 = arith.addf %2, %5 : vector<1024x128xf32>
    %cst_6 = arith.constant 0.000000e+00 : f32
    %7 = vector.broadcast %cst_6 : f32 to vector<1024x128xf32>
    %8 = arith.maximumf %6, %7 : vector<1024x128xf32>
    %c0_7 = arith.constant 0 : index
    %c0_8 = arith.constant 0 : index
    %c0_9 = arith.constant 0 : index
    %9 = vector.load %arg3[%c0_7, %c0_8, %c0_9] : memref<5x128x128xf32, #tpu.memory_space<vmem>>, vector<1x128x128xf32>
    %10 = vector.shape_cast %9 : vector<1x128x128xf32> to vector<128x128xf32>
    %cst_10 = arith.constant dense<0.000000e+00> : vector<1024x128xf32>
    %11 = tpu.matmul %8, %10, %cst_10 {dimension_numbers = #tpu.dot_dimension_numbers<[1], [0], [0], [1], [0, 0, 1, 1], [], []>} : vector<1024x128xf32>, vector<128x128xf32>, vector<1024x128xf32> -> vector<1024x128xf32>
    %c1 = arith.constant 1 : index
    %c0_11 = arith.constant 0 : index
    %c0_12 = arith.constant 0 : index
    %12 = vector.load %arg4[%c1, %c0_11, %c0_12] : memref<6x1x128xf32, #tpu.memory_space<vmem>>, vector<1x1x128xf32>
    %13 = vector.shape_cast %12 : vector<1x1x128xf32> to vector<1x128xf32>
    %14 = vector.broadcast %13 : vector<1x128xf32> to vector<1024x128xf32>
    %15 = arith.addf %11, %14 : vector<1024x128xf32>
    %cst_13 = arith.constant 0.000000e+00 : f32
    %16 = vector.broadcast %cst_13 : f32 to vector<1024x128xf32>
    %17 = arith.maximumf %15, %16 : vector<1024x128xf32>
    %c1_14 = arith.constant 1 : index
    %c0_15 = arith.constant 0 : index
    %c0_16 = arith.constant 0 : index
    %18 = vector.load %arg3[%c1_14, %c0_15, %c0_16] : memref<5x128x128xf32, #tpu.memory_space<vmem>>, vector<1x128x128xf32>
    %19 = vector.shape_cast %18 : vector<1x128x128xf32> to vector<128x128xf32>
    %cst_17 = arith.constant dense<0.000000e+00> : vector<1024x128xf32>
    %20 = tpu.matmul %17, %19, %cst_17 {dimension_numbers = #tpu.dot_dimension_numbers<[1], [0], [0], [1], [0, 0, 1, 1], [], []>} : vector<1024x128xf32>, vector<128x128xf32>, vector<1024x128xf32> -> vector<1024x128xf32>
    %c2 = arith.constant 2 : index
    %c0_18 = arith.constant 0 : index
    %c0_19 = arith.constant 0 : index
    %21 = vector.load %arg4[%c2, %c0_18, %c0_19] : memref<6x1x128xf32, #tpu.memory_space<vmem>>, vector<1x1x128xf32>
    %22 = vector.shape_cast %21 : vector<1x1x128xf32> to vector<1x128xf32>
    %23 = vector.broadcast %22 : vector<1x128xf32> to vector<1024x128xf32>
    %24 = arith.addf %20, %23 : vector<1024x128xf32>
    %cst_20 = arith.constant 0.000000e+00 : f32
    %25 = vector.broadcast %cst_20 : f32 to vector<1024x128xf32>
    %26 = arith.maximumf %24, %25 : vector<1024x128xf32>
    %c2_21 = arith.constant 2 : index
    %c0_22 = arith.constant 0 : index
    %c0_23 = arith.constant 0 : index
    %27 = vector.load %arg3[%c2_21, %c0_22, %c0_23] : memref<5x128x128xf32, #tpu.memory_space<vmem>>, vector<1x128x128xf32>
    %28 = vector.shape_cast %27 : vector<1x128x128xf32> to vector<128x128xf32>
    %cst_24 = arith.constant dense<0.000000e+00> : vector<1024x128xf32>
    %29 = tpu.matmul %26, %28, %cst_24 {dimension_numbers = #tpu.dot_dimension_numbers<[1], [0], [0], [1], [0, 0, 1, 1], [], []>} : vector<1024x128xf32>, vector<128x128xf32>, vector<1024x128xf32> -> vector<1024x128xf32>
    %c3 = arith.constant 3 : index
    %c0_25 = arith.constant 0 : index
    %c0_26 = arith.constant 0 : index
    %30 = vector.load %arg4[%c3, %c0_25, %c0_26] : memref<6x1x128xf32, #tpu.memory_space<vmem>>, vector<1x1x128xf32>
    %31 = vector.shape_cast %30 : vector<1x1x128xf32> to vector<1x128xf32>
    %32 = vector.broadcast %31 : vector<1x128xf32> to vector<1024x128xf32>
    %33 = arith.addf %29, %32 : vector<1024x128xf32>
    %cst_27 = arith.constant 0.000000e+00 : f32
    %34 = vector.broadcast %cst_27 : f32 to vector<1024x128xf32>
    %35 = arith.maximumf %33, %34 : vector<1024x128xf32>
    %c3_28 = arith.constant 3 : index
    %c0_29 = arith.constant 0 : index
    %c0_30 = arith.constant 0 : index
    %36 = vector.load %arg3[%c3_28, %c0_29, %c0_30] : memref<5x128x128xf32, #tpu.memory_space<vmem>>, vector<1x128x128xf32>
    %37 = vector.shape_cast %36 : vector<1x128x128xf32> to vector<128x128xf32>
    %cst_31 = arith.constant dense<0.000000e+00> : vector<1024x128xf32>
    %38 = tpu.matmul %35, %37, %cst_31 {dimension_numbers = #tpu.dot_dimension_numbers<[1], [0], [0], [1], [0, 0, 1, 1], [], []>} : vector<1024x128xf32>, vector<128x128xf32>, vector<1024x128xf32> -> vector<1024x128xf32>
    %c4 = arith.constant 4 : index
    %c0_32 = arith.constant 0 : index
    %c0_33 = arith.constant 0 : index
    %39 = vector.load %arg4[%c4, %c0_32, %c0_33] : memref<6x1x128xf32, #tpu.memory_space<vmem>>, vector<1x1x128xf32>
    %40 = vector.shape_cast %39 : vector<1x1x128xf32> to vector<1x128xf32>
    %41 = vector.broadcast %40 : vector<1x128xf32> to vector<1024x128xf32>
    %42 = arith.addf %38, %41 : vector<1024x128xf32>
    %cst_34 = arith.constant 0.000000e+00 : f32
    %43 = vector.broadcast %cst_34 : f32 to vector<1024x128xf32>
    %44 = arith.maximumf %42, %43 : vector<1024x128xf32>
    %c4_35 = arith.constant 4 : index
    %c0_36 = arith.constant 0 : index
    %c0_37 = arith.constant 0 : index
    %45 = vector.load %arg3[%c4_35, %c0_36, %c0_37] : memref<5x128x128xf32, #tpu.memory_space<vmem>>, vector<1x128x128xf32>
    %46 = vector.shape_cast %45 : vector<1x128x128xf32> to vector<128x128xf32>
    %cst_38 = arith.constant dense<0.000000e+00> : vector<1024x128xf32>
    %47 = tpu.matmul %44, %46, %cst_38 {dimension_numbers = #tpu.dot_dimension_numbers<[1], [0], [0], [1], [0, 0, 1, 1], [], []>} : vector<1024x128xf32>, vector<128x128xf32>, vector<1024x128xf32> -> vector<1024x128xf32>
    %c5 = arith.constant 5 : index
    %c0_39 = arith.constant 0 : index
    %c0_40 = arith.constant 0 : index
    %48 = vector.load %arg4[%c5, %c0_39, %c0_40] : memref<6x1x128xf32, #tpu.memory_space<vmem>>, vector<1x1x128xf32>
    %49 = vector.shape_cast %48 : vector<1x1x128xf32> to vector<1x128xf32>
    %50 = vector.broadcast %49 : vector<1x128xf32> to vector<1024x128xf32>
    %51 = arith.addf %47, %50 : vector<1024x128xf32>
    %c0_41 = arith.constant 0 : index
    %c0_42 = arith.constant 0 : index
    %52 = vector.load %arg5[%c0_41, %c0_42] : memref<1024x128xf32, #tpu.memory_space<vmem>>, vector<1024x128xf32>
    tpu.vector_store %arg5[%c0_41, %c0_42], %51 {strides = array<i32>} : memref<1024x128xf32, #tpu.memory_space<vmem>>, vector<1024x128xf32>,
    return
  }
  func.func @transform_0(%arg0: i32) -> (i32, i32) {
    %c0_i32 = arith.constant 0 : i32
    %c0_i32_0 = arith.constant 0 : i32
    return %arg0, %c0_i32 : i32, i32
  }
  func.func @transform_1(%arg0: i32) -> (i32, i32) {
    %c0_i32 = arith.constant 0 : i32
    %c0_i32_0 = arith.constant 0 : i32
    %c0_i32_1 = arith.constant 0 : i32
    return %c0_i32, %c0_i32_0 : i32, i32
  }
  func.func @transform_2(%arg0: i32) -> (i32, i32, i32) {
    %c0_i32 = arith.constant 0 : i32
    %c0_i32_0 = arith.constant 0 : i32
    %c0_i32_1 = arith.constant 0 : i32
    %c0_i32_2 = arith.constant 0 : i32
    return %c0_i32, %c0_i32_0, %c0_i32_1 : i32, i32, i32
  }
  func.func @transform_3(%arg0: i32) -> (i32, i32, i32) {
    %c0_i32 = arith.constant 0 : i32
    %c0_i32_0 = arith.constant 0 : i32
    %c0_i32_1 = arith.constant 0 : i32
    %c0_i32_2 = arith.constant 0 : i32
    return %c0_i32, %c0_i32_0, %c0_i32_1 : i32, i32, i32
  }
  func.func @transform_4(%arg0: i32) -> (i32, i32) {
    %c0_i32 = arith.constant 0 : i32
    %c0_i32_0 = arith.constant 0 : i32
    return %arg0, %c0_i32 : i32, i32
  }
}

</mosaic_0001>

<llo_original>
// kernel: tpu_custom_call.1
$region0: #{tpu_custom_call.1}
  #allocation0 [shape = 'u32[]', space=smem, size = 0x4, offset = 0x4, fixed_abs, tag = 'smem constant byte address 0x4 - core index']
  #allocation1 [shape = 'u32[72,128]{1,0:T(1,128)}', space=vmem, size = 0x9000, scoped, tag = 'internal scratch']
  %s0 = inlined_call_operand.vmem [shape: f32[2048,32], index: 0, kind: input, shape index: {}]
  %s1 = inlined_call_operand.vmem [shape: f32[32,128], index: 1, kind: input, shape index: {}]
  %s2 = inlined_call_operand.vmem [shape: f32[5,128,128], index: 2, kind: input, shape index: {}]
  %s3 = inlined_call_operand.vmem [shape: f32[6,1,128], index: 3, kind: input, shape index: {}]
  %s4 = inlined_call_operand.hbm [shape: f32[2048,128], index: 4, kind: output, shape index: {}]
  %s5 = sld [smem:[#allocation0]]
  $region49: #{tpu_custom_call.1} parent=0
    _
  %s7 = ssub.s32 1, %s5
  %s8 = scalar_select 0, %s7, %s5
  $region1: #{tpu_custom_call.1} parent=0
    #allocation2 [shape = 'u8[1048576]{0}', space=vmem, size = 0x100000, scoped, tag = 'output window, operand 0']
    #allocation3 [shape = 's32[2]{0}', space=sflag, size = 0x8, scoped, tag = 'scoped memory for tpu_custom_call.1']
    %9 = vsyncpa [#allocation3], 0
    %s10 = scalar_lea.sflag [#allocation3], 1
    %11 = vsyncpa %s10, 0
    loop: start=0, step=1, limit=4
    $region2: #{tpu_custom_call.1} parent=1 // loop_pre_header
      _
    $region3: #{tpu_custom_call.1} parent=1 // loop_header
      %s13 = sphi 0, %s17
      %p14 = scmp.ge.s32.totalorder %s13, 4
      %s23 = sphi 0, %s25
      %s26 = sphi 0, %s23
      %s27 = sphi 0, %s26
      %s43 = sphi 0, %s27
      %s47 = sphi 0, %s47
      %s49 = sphi 0, %s47
      %s50 = sphi 0, %s49
      %s64 = sphi 0, %s50
      %s68 = sphi 0, %s68
      %s70 = sphi 0, %s68
      %s71 = sphi 0, %s70
      %s85 = sphi 0, %s71
      %s89 = sphi 0, %s89
      %s91 = sphi 0, %s89
      %s92 = sphi 0, %s91
      %s106 = sphi 0, %s92
      %s112 = sphi 0, %s114
      %s115 = sphi 0, %s112
      %s116 = sphi 0, %s115
      %s132 = sphi 0, %s116
    $region4: #{tpu_custom_call.1} parent=1 // loop_header_branch
      %16 = sbr.rel (%p14) target = $region8
    $region5: #{tpu_custom_call.1} parent=1 // loop_body
      %s18 = ssub.s32 %s13, 1
      %s19 = ssub.s32 %s13, 2
      %s20 = sadd.s32 %s13, 1
      %s21 = ssub.s32 %s13, %s20
      %p22 = scmp.eq.s32.totalorder %s21, 0
      %s24 = sadd.s32 %s23, 1
      %s25 = scalar_select %p22, %s23, %s24
      %p28 = pneg %p22
      %p29 = scmp.eq.s32.totalorder %s13, 1
      %p30 = por %p28, %p29
      %p31 = scmp.ne.s32.totalorder %s23, %s26
      %p32 = scmp.eq.s32.totalorder %s13, 0
      %p33 = por %p31, %p32
      %p34 = scmp.ne.s32.totalorder %s23, %s26
      %p35 = scmp.eq.s32.totalorder %s18, 1
      %p36 = por %p34, %p35
      %p37 = scmp.ne.s32.totalorder %s26, %s27
      %p38 = scmp.eq.s32.totalorder %s18, 0
      %p39 = por %p37, %p38
      %p40 = scmp.ne.s32.totalorder %s26, %s27
      %p41 = scmp.eq.s32.totalorder %s19, 1
      %p42 = por %p40, %p41
      %p44 = scmp.ne.s32.totalorder %s27, %s43
      %p45 = scmp.eq.s32.totalorder %s19, 0
      %p46 = por %p44, %p45
      %s48 = sadd.s32 %s47, 1
      %p51 = scmp.eq.s32.totalorder %s13, 1
      %p52 = scmp.ne.s32.totalorder %s47, %s49
      %p53 = scmp.eq.s32.totalorder %s13, 0
      %p54 = por %p52, %p53
      %p55 = scmp.ne.s32.totalorder %s47, %s49
      %p56 = scmp.eq.s32.totalorder %s18, 1
      %p57 = por %p55, %p56
      %p58 = scmp.ne.s32.totalorder %s49, %s50
      %p59 = scmp.eq.s32.totalorder %s18, 0
      %p60 = por %p58, %p59
      %p61 = scmp.ne.s32.totalorder %s49, %s50
      %p62 = scmp.eq.s32.totalorder %s19, 1
      %p63 = por %p61, %p62
      %p65 = scmp.ne.s32.totalorder %s50, %s64
      %p66 = scmp.eq.s32.totalorder %s19, 0
      %p67 = por %p65, %p66
      %s69 = sadd.s32 %s68, 1
      %p72 = scmp.eq.s32.totalorder %s13, 1
      %p73 = scmp.ne.s32.totalorder %s68, %s70
      %p74 = scmp.eq.s32.totalorder %s13, 0
      %p75 = por %p73, %p74
      %p76 = scmp.ne.s32.totalorder %s68, %s70
      %p77 = scmp.eq.s32.totalorder %s18, 1
      %p78 = por %p76, %p77
      %p79 = scmp.ne.s32.totalorder %s70, %s71
      %p80 = scmp.eq.s32.totalorder %s18, 0
      %p81 = por %p79, %p80
      %p82 = scmp.ne.s32.totalorder %s70, %s71
      %p83 = scmp.eq.s32.totalorder %s19, 1
      %p84 = por %p82, %p83
      %p86 = scmp.ne.s32.totalorder %s71, %s85
      %p87 = scmp.eq.s32.totalorder %s19, 0
      %p88 = por %p86, %p87
      %s90 = sadd.s32 %s89, 1
      %p93 = scmp.eq.s32.totalorder %s13, 1
      %p94 = scmp.ne.s32.totalorder %s89, %s91
      %p95 = scmp.eq.s32.totalorder %s13, 0
      %p96 = por %p94, %p95
      %p97 = scmp.ne.s32.totalorder %s89, %s91
      %p98 = scmp.eq.s32.totalorder %s18, 1
      %p99 = por %p97, %p98
      %p100 = scmp.ne.s32.totalorder %s91, %s92
      %p101 = scmp.eq.s32.totalorder %s18, 0
      %p102 = por %p100, %p101
      %p103 = scmp.ne.s32.totalorder %s91, %s92
      %p104 = scmp.eq.s32.totalorder %s19, 1
      %p105 = por %p103, %p104
      %p107 = scmp.ne.s32.totalorder %s92, %s106
      %p108 = scmp.eq.s32.totalorder %s19, 0
      %p109 = por %p107, %p108
      %s110 = ssub.s32 %s13, %s20
      %p111 = scmp.eq.s32.totalorder %s110, 0
      %s113 = sadd.s32 %s112, 1
      %s114 = scalar_select %p111, %s112, %s113
      %p117 = pneg %p111
      %p118 = scmp.eq.s32.totalorder %s13, 1
      %p119 = por %p117, %p118
      %p120 = scmp.ne.s32.totalorder %s112, %s115
      %p121 = scmp.eq.s32.totalorder %s13, 0
      %p122 = por %p120, %p121
      %p123 = scmp.ne.s32.totalorder %s112, %s115
      %p124 = scmp.eq.s32.totalorder %s18, 1
      %p125 = por %p123, %p124
      %p126 = scmp.ne.s32.totalorder %s115, %s116
      %p127 = scmp.eq.s32.totalorder %s18, 0
      %p128 = por %p126, %p127
      %p129 = scmp.ne.s32.totalorder %s115, %s116
      %p130 = scmp.eq.s32.totalorder %s19, 1
      %p131 = por %p129, %p130
      %p133 = scmp.ne.s32.totalorder %s116, %s132
      %p134 = scmp.eq.s32.totalorder %s19, 0
      %p135 = por %p133, %p134
      %p136 = scmp.le.s32.totalorder 1, %s13
      %p137 = scmp.lt.s32.totalorder %s13, 3
      %p138 = pnand %p136, %p137
      %p139 = pneg %p138
      // Predicated region
      $region9: #{tpu_custom_call.1} parent=5 // pred_check
        _
      $region10: #{tpu_custom_call.1} parent=5 // pred_check_branch
        %141 = sbr.rel (%p138) target = $region12
      $region11: #{tpu_custom_call.1} parent=5 // pred_region
        %s142 = ssub.s32 %s13, 1
        // Predicated region
        $region13: #{tpu_custom_call.1} parent=11 // pred_check
          %p143 = pneg %p60
        $region14: #{tpu_custom_call.1} parent=11 // pred_check_branch
          %145 = sbr.rel (%p143) target = $region16
        $region15: #{tpu_custom_call.1} parent=11 // pred_region
          _
        $region16: #{tpu_custom_call.1} parent=11 // pred_fallthru
          _
        // Predicated region
        $region17: #{tpu_custom_call.1} parent=11 // pred_check
          %p146 = pneg %p81
        $region18: #{tpu_custom_call.1} parent=11 // pred_check_branch
          %148 = sbr.rel (%p146) target = $region20
        $region19: #{tpu_custom_call.1} parent=11 // pred_region
          _
        $region20: #{tpu_custom_call.1} parent=11 // pred_fallthru
          _
        // Predicated region
        $region21: #{tpu_custom_call.1} parent=11 // pred_check
          %p149 = pneg %p102
        $region22: #{tpu_custom_call.1} parent=11 // pred_check_branch
          %151 = sbr.rel (%p149) target = $region24
        $region23: #{tpu_custom_call.1} parent=11 // pred_region
          _
        $region24: #{tpu_custom_call.1} parent=11 // pred_fallthru
          _
      $region12: #{tpu_custom_call.1} parent=5 // pred_fallthru
        _
      %p152 = scmp.lt.s32.totalorder %s13, 2
      // Predicated region
      $region25: #{tpu_custom_call.1} parent=5 // pred_check
        %p153 = pneg %p152
      $region26: #{tpu_custom_call.1} parent=5 // pred_check_branch
        %155 = sbr.rel (%p153) target = $region28
      $region27: #{tpu_custom_call.1} parent=5 // pred_region
        // Predicated region
        $region29: #{tpu_custom_call.1} parent=27 // pred_check
          %p156 = pneg %p33
        $region30: #{tpu_custom_call.1} parent=27 // pred_check_branch
          %158 = sbr.rel (%p156) target = $region32
        $region31: #{tpu_custom_call.1} parent=27 // pred_region
          %s159 = smul.u32 128, %s13
          %p160 = scmp.lt.s32.totalorder %s159, 255
          %s161 = scalar_select %p160, %s159, 255
          %s162 = smul.addr %s161, 8
          %s163 = scalar_lea.vmem %s0, %s162
          %s164 = smul.u32 128, %s13
        $region32: #{tpu_custom_call.1} parent=27 // pred_fallthru
          _
      $region28: #{tpu_custom_call.1} parent=5 // pred_fallthru
        _
      %p165 = scmp.le.s32.totalorder 1, %s13
      %p166 = scmp.lt.s32.totalorder %s13, 3
      %p167 = pnand %p165, %p166
      %p168 = pneg %p167
      // Predicated region
      $region33: #{tpu_custom_call.1} parent=5 // pred_check
        _
      $region34: #{tpu_custom_call.1} parent=5 // pred_check_branch
        %170 = sbr.rel (%p167) target = $region36
      $region35: #{tpu_custom_call.1} parent=5 // pred_region
        %s171 = ssub.s32 %s13, 1
        %s172 = smul.u32 128, %s18
        %p173 = scmp.lt.s32.totalorder %s172, 255
        %s174 = scalar_select %p173, %s172, 255
        %s175 = smul.addr %s174, 8
        %s176 = scalar_lea.vmem %s0, %s175
        %p177 = pneg %p39
        %p178 = pneg %p36
        %p179 = pneg %p60
        %p180 = pneg %p57
        %p181 = pneg %p81
        %p182 = pneg %p78
        %p183 = pneg %p102
        %p184 = pneg %p99
        %p185 = pneg %p128
        %p186 = pneg %p125
        %s187 = sand.u32 %s115, 1
        %s188 = scalar_lea.sflag [#allocation3], %s187
        %s189 = sand.u32 %s115, 1
        %s190 = smul.addr %s189, 1024
        %s191 = scalar_lea.vmem [#allocation2], %s190
        %s192 = smul.u32 128, %s18
        %p193 = scmp.lt.s32.totalorder %s192, 255
        %s194 = scalar_select %p193, %s192, 255
        %s195 = smul.addr %s194, 8
        %s196 = scalar_lea.vmem %s0, %s195
        %s197 = smul.u32 128, %s18
        %s198 = smul.u32 128, %s18
        %v199 = vld [vmem:[%s196] sm:$0xff]
        %v200 = vld [vmem:[%s196 + $0x8] sm:$0xff]
        %v201 = vld [vmem:[%s196 + $0x10] sm:$0xff]
        %v202 = vld [vmem:[%s196 + $0x18] sm:$0xff]
        %v203 = vld [vmem:[%s196 + $0x20] sm:$0xff]
        %v204 = vld [vmem:[%s196 + $0x28] sm:$0xff]
        %v205 = vld [vmem:[%s196 + $0x30] sm:$0xff]
        %v206 = vld [vmem:[%s196 + $0x38] sm:$0xff]
        %v207 = vld [vmem:[%s196 + $0x40] sm:$0xff]
        %v208 = vld [vmem:[%s196 + $0x48] sm:$0xff]
        %v209 = vld [vmem:[%s196 + $0x50] sm:$0xff]
        %v210 = vld [vmem:[%s196 + $0x58] sm:$0xff]
        %v211 = vld [vmem:[%s196 + $0x60] sm:$0xff]
        %v212 = vld [vmem:[%s196 + $0x68] sm:$0xff]
        %v213 = vld [vmem:[%s196 + $0x70] sm:$0xff]
        %v214 = vld [vmem:[%s196 + $0x78] sm:$0xff]
        %v215 = vld [vmem:[%s196 + $0x80] sm:$0xff]
        %v216 = vld [vmem:[%s196 + $0x88] sm:$0xff]
        %v217 = vld [vmem:[%s196 + $0x90] sm:$0xff]
        %v218 = vld [vmem:[%s196 + $0x98] sm:$0xff]
        %v219 = vld [vmem:[%s196 + $0xa0] sm:$0xff]
        %v220 = vld [vmem:[%s196 + $0xa8] sm:$0xff]
        %v221 = vld [vmem:[%s196 + $0xb0] sm:$0xff]
        %v222 = vld [vmem:[%s196 + $0xb8] sm:$0xff]
        %v223 = vld [vmem:[%s196 + $0xc0] sm:$0xff]
        %v224 = vld [vmem:[%s196 + $0xc8] sm:$0xff]
        %v225 = vld [vmem:[%s196 + $0xd0] sm:$0xff]
        %v226 = vld [vmem:[%s196 + $0xd8] sm:$0xff]
        %v227 = vld [vmem:[%s196 + $0xe0] sm:$0xff]
        %v228 = vld [vmem:[%s196 + $0xe8] sm:$0xff]
        %v229 = vld [vmem:[%s196 + $0xf0] sm:$0xff]
        %v230 = vld [vmem:[%s196 + $0xf8] sm:$0xff]
        %v231 = vld [vmem:[%s196 + $0x100] sm:$0xff]
        %v232 = vld [vmem:[%s196 + $0x108] sm:$0xff]
        %v233 = vld [vmem:[%s196 + $0x110] sm:$0xff]
        %v234 = vld [vmem:[%s196 + $0x118] sm:$0xff]
        %v235 = vld [vmem:[%s196 + $0x120] sm:$0xff]
        %v236 = vld [vmem:[%s196 + $0x128] sm:$0xff]
        %v237 = vld [vmem:[%s196 + $0x130] sm:$0xff]
        %v238 = vld [vmem:[%s196 + $0x138] sm:$0xff]
        %v239 = vld [vmem:[%s196 + $0x140] sm:$0xff]
        %v240 = vld [vmem:[%s196 + $0x148] sm:$0xff]
        %v241 = vld [vmem:[%s196 + $0x150] sm:$0xff]
        %v242 = vld [vmem:[%s196 + $0x158] sm:$0xff]
        %v243 = vld [vmem:[%s196 + $0x160] sm:$0xff]
        %v244 = vld [vmem:[%s196 + $0x168] sm:$0xff]
        %v245 = vld [vmem:[%s196 + $0x170] sm:$0xff]
        %v246 = vld [vmem:[%s196 + $0x178] sm:$0xff]
        %v247 = vld [vmem:[%s196 + $0x180] sm:$0xff]
        %v248 = vld [vmem:[%s196 + $0x188] sm:$0xff]
        %v249 = vld [vmem:[%s196 + $0x190] sm:$0xff]
        %v250 = vld [vmem:[%s196 + $0x198] sm:$0xff]
        %v251 = vld [vmem:[%s196 + $0x1a0] sm:$0xff]
        %v252 = vld [vmem:[%s196 + $0x1a8] sm:$0xff]
        %v253 = vld [vmem:[%s196 + $0x1b0] sm:$0xff]
        %v254 = vld [vmem:[%s196 + $0x1b8] sm:$0xff]
        %v255 = vld [vmem:[%s196 + $0x1c0] sm:$0xff]
        %v256 = vld [vmem:[%s196 + $0x1c8] sm:$0xff]
        %v257 = vld [vmem:[%s196 + $0x1d0] sm:$0xff]
        %v258 = vld [vmem:[%s196 + $0x1d8] sm:$0xff]
        %v259 = vld [vmem:[%s196 + $0x1e0] sm:$0xff]
        %v260 = vld [vmem:[%s196 + $0x1e8] sm:$0xff]
        %v261 = vld [vmem:[%s196 + $0x1f0] sm:$0xff]
        %v262 = vld [vmem:[%s196 + $0x1f8] sm:$0xff]
        %v263 = vld [vmem:[%s196 + $0x200] sm:$0xff]
        %v264 = vld [vmem:[%s196 + $0x208] sm:$0xff]
        %v265 = vld [vmem:[%s196 + $0x210] sm:$0xff]
        %v266 = vld [vmem:[%s196 + $0x218] sm:$0xff]
        %v267 = vld [vmem:[%s196 + $0x220] sm:$0xff]
        %v268 = vld [vmem:[%s196 + $0x228] sm:$0xff]
        %v269 = vld [vmem:[%s196 + $0x230] sm:$0xff]
        %v270 = vld [vmem:[%s196 + $0x238] sm:$0xff]
        %v271 = vld [vmem:[%s196 + $0x240] sm:$0xff]
        %v272 = vld [vmem:[%s196 + $0x248] sm:$0xff]
        %v273 = vld [vmem:[%s196 + $0x250] sm:$0xff]
        %v274 = vld [vmem:[%s196 + $0x258] sm:$0xff]
        %v275 = vld [vmem:[%s196 + $0x260] sm:$0xff]
        %v276 = vld [vmem:[%s196 + $0x268] sm:$0xff]
        %v277 = vld [vmem:[%s196 + $0x270] sm:$0xff]
        %v278 = vld [vmem:[%s196 + $0x278] sm:$0xff]
        %v279 = vld [vmem:[%s196 + $0x280] sm:$0xff]
        %v280 = vld [vmem:[%s196 + $0x288] sm:$0xff]
        %v281 = vld [vmem:[%s196 + $0x290] sm:$0xff]
        %v282 = vld [vmem:[%s196 + $0x298] sm:$0xff]
        %v283 = vld [vmem:[%s196 + $0x2a0] sm:$0xff]
        %v284 = vld [vmem:[%s196 + $0x2a8] sm:$0xff]
        %v285 = vld [vmem:[%s196 + $0x2b0] sm:$0xff]
        %v286 = vld [vmem:[%s196 + $0x2b8] sm:$0xff]
        %v287 = vld [vmem:[%s196 + $0x2c0] sm:$0xff]
        %v288 = vld [vmem:[%s196 + $0x2c8] sm:$0xff]
        %v289 = vld [vmem:[%s196 + $0x2d0] sm:$0xff]
        %v290 = vld [vmem:[%s196 + $0x2d8] sm:$0xff]
        %v291 = vld [vmem:[%s196 + $0x2e0] sm:$0xff]
        %v292 = vld [vmem:[%s196 + $0x2e8] sm:$0xff]
        %v293 = vld [vmem:[%s196 + $0x2f0] sm:$0xff]
        %v294 = vld [vmem:[%s196 + $0x2f8] sm:$0xff]
        %v295 = vld [vmem:[%s196 + $0x300] sm:$0xff]
        %v296 = vld [vmem:[%s196 + $0x308] sm:$0xff]
        %v297 = vld [vmem:[%s196 + $0x310] sm:$0xff]
        %v298 = vld [vmem:[%s196 + $0x318] sm:$0xff]
        %v299 = vld [vmem:[%s196 + $0x320] sm:$0xff]
        %v300 = vld [vmem:[%s196 + $0x328] sm:$0xff]
        %v301 = vld [vmem:[%s196 + $0x330] sm:$0xff]
        %v302 = vld [vmem:[%s196 + $0x338] sm:$0xff]
        %v303 = vld [vmem:[%s196 + $0x340] sm:$0xff]
        %v304 = vld [vmem:[%s196 + $0x348] sm:$0xff]
        %v305 = vld [vmem:[%s196 + $0x350] sm:$0xff]
        %v306 = vld [vmem:[%s196 + $0x358] sm:$0xff]
        %v307 = vld [vmem:[%s196 + $0x360] sm:$0xff]
        %v308 = vld [vmem:[%s196 + $0x368] sm:$0xff]
        %v309 = vld [vmem:[%s196 + $0x370] sm:$0xff]
        %v310 = vld [vmem:[%s196 + $0x378] sm:$0xff]
        %v311 = vld [vmem:[%s196 + $0x380] sm:$0xff]
        %v312 = vld [vmem:[%s196 + $0x388] sm:$0xff]
        %v313 = vld [vmem:[%s196 + $0x390] sm:$0xff]
        %v314 = vld [vmem:[%s196 + $0x398] sm:$0xff]
        %v315 = vld [vmem:[%s196 + $0x3a0] sm:$0xff]
        %v316 = vld [vmem:[%s196 + $0x3a8] sm:$0xff]
        %v317 = vld [vmem:[%s196 + $0x3b0] sm:$0xff]
        %v318 = vld [vmem:[%s196 + $0x3b8] sm:$0xff]
        %v319 = vld [vmem:[%s196 + $0x3c0] sm:$0xff]
        %v320 = vld [vmem:[%s196 + $0x3c8] sm:$0xff]
        %v321 = vld [vmem:[%s196 + $0x3d0] sm:$0xff]
        %v322 = vld [vmem:[%s196 + $0x3d8] sm:$0xff]
        %v323 = vld [vmem:[%s196 + $0x3e0] sm:$0xff]
        %v324 = vld [vmem:[%s196 + $0x3e8] sm:$0xff]
        %v325 = vld [vmem:[%s196 + $0x3f0] sm:$0xff]
        %v326 = vld [vmem:[%s196 + $0x3f8] sm:$0xff]
        %v327 = vld [vmem:[%s1] sm:$0xff]
        %v328 = vld [vmem:[%s1 + $0x8] sm:$0xff]
        %v329 = vld [vmem:[%s1 + $0x10] sm:$0xff]
        %v330 = vld [vmem:[%s1 + $0x18] sm:$0xff]
        %v331 = vld [vmem:[%s3] sm:$0x1]
        %v333 = vperm.slane %v331, 0
        %vm335 = vcmask 261120
        %v337 = vsel %vm335, %v199, 0
        %v340 = vsel %vm335, %v200, 0
        %v343 = vsel %vm335, %v201, 0
        %v346 = vsel %vm335, %v202, 0
        %v349 = vsel %vm335, %v203, 0
        %v352 = vsel %vm335, %v204, 0
        %v355 = vsel %vm335, %v205, 0
        %v358 = vsel %vm335, %v206, 0
        %v361 = vsel %vm335, %v207, 0
        %v364 = vsel %vm335, %v208, 0
        %v367 = vsel %vm335, %v209, 0
        %v370 = vsel %vm335, %v210, 0
        %v373 = vsel %vm335, %v211, 0
        %v376 = vsel %vm335, %v212, 0
        %v379 = vsel %vm335, %v213, 0
        %v382 = vsel %vm335, %v214, 0
        %v385 = vsel %vm335, %v215, 0
        %v388 = vsel %vm335, %v216, 0
        %v391 = vsel %vm335, %v217, 0
        %v394 = vsel %vm335, %v218, 0
        %v397 = vsel %vm335, %v219, 0
        %v400 = vsel %vm335, %v220, 0
        %v403 = vsel %vm335, %v221, 0
        %v406 = vsel %vm335, %v222, 0
        %v409 = vsel %vm335, %v223, 0
        %v412 = vsel %vm335, %v224, 0
        %v415 = vsel %vm335, %v225, 0
        %v418 = vsel %vm335, %v226, 0
        %v421 = vsel %vm335, %v227, 0
        %v424 = vsel %vm335, %v228, 0
        %v427 = vsel %vm335, %v229, 0
        %v430 = vsel %vm335, %v230, 0
        %v433 = vsel %vm335, %v231, 0
        %v436 = vsel %vm335, %v232, 0
        %v439 = vsel %vm335, %v233, 0
        %v442 = vsel %vm335, %v234, 0
        %v445 = vsel %vm335, %v235, 0
        %v448 = vsel %vm335, %v236, 0
        %v451 = vsel %vm335, %v237, 0
        %v454 = vsel %vm335, %v238, 0
        %v457 = vsel %vm335, %v239, 0
        %v460 = vsel %vm335, %v240, 0
        %v463 = vsel %vm335, %v241, 0
        %v466 = vsel %vm335, %v242, 0
        %v469 = vsel %vm335, %v243, 0
        %v472 = vsel %vm335, %v244, 0
        %v475 = vsel %vm335, %v245, 0
        %v478 = vsel %vm335, %v246, 0
        %v481 = vsel %vm335, %v247, 0
        %v484 = vsel %vm335, %v248, 0
        %v487 = vsel %vm335, %v249, 0
        %v490 = vsel %vm335, %v250, 0
        %v493 = vsel %vm335, %v251, 0
        %v496 = vsel %vm335, %v252, 0
        %v499 = vsel %vm335, %v253, 0
        %v502 = vsel %vm335, %v254, 0
        %v505 = vsel %vm335, %v255, 0
        %v508 = vsel %vm335, %v256, 0
        %v511 = vsel %vm335, %v257, 0
        %v514 = vsel %vm335, %v258, 0
        %v517 = vsel %vm335, %v259, 0
        %v520 = vsel %vm335, %v260, 0
        %v523 = vsel %vm335, %v261, 0
        %v526 = vsel %vm335, %v262, 0
        %v529 = vsel %vm335, %v263, 0
        %v532 = vsel %vm335, %v264, 0
        %v535 = vsel %vm335, %v265, 0
        %v538 = vsel %vm335, %v266, 0
        %v541 = vsel %vm335, %v267, 0
        %v544 = vsel %vm335, %v268, 0
        %v547 = vsel %vm335, %v269, 0
        %v550 = vsel %vm335, %v270, 0
        %v553 = vsel %vm335, %v271, 0
        %v556 = vsel %vm335, %v272, 0
        %v559 = vsel %vm335, %v273, 0
        %v562 = vsel %vm335, %v274, 0
        %v565 = vsel %vm335, %v275, 0
        %v568 = vsel %vm335, %v276, 0
        %v571 = vsel %vm335, %v277, 0
        %v574 = vsel %vm335, %v278, 0
        %v577 = vsel %vm335, %v279, 0
        %v580 = vsel %vm335, %v280, 0
        %v583 = vsel %vm335, %v281, 0
        %v586 = vsel %vm335, %v282, 0
        %v589 = vsel %vm335, %v283, 0
        %v592 = vsel %vm335, %v284, 0
        %v595 = vsel %vm335, %v285, 0
        %v598 = vsel %vm335, %v286, 0
        %v601 = vsel %vm335, %v287, 0
        %v604 = vsel %vm335, %v288, 0
        %v607 = vsel %vm335, %v289, 0
        %v610 = vsel %vm335, %v290, 0
        %v613 = vsel %vm335, %v291, 0
        %v616 = vsel %vm335, %v292, 0
        %v619 = vsel %vm335, %v293, 0
        %v622 = vsel %vm335, %v294, 0
        %v625 = vsel %vm335, %v295, 0
        %v628 = vsel %vm335, %v296, 0
        %v631 = vsel %vm335, %v297, 0
        %v634 = vsel %vm335, %v298, 0
        %v637 = vsel %vm335, %v299, 0
        %v640 = vsel %vm335, %v300, 0
        %v643 = vsel %vm335, %v301, 0
        %v646 = vsel %vm335, %v302, 0
        %v649 = vsel %vm335, %v303, 0
        %v652 = vsel %vm335, %v304, 0
        %v655 = vsel %vm335, %v305, 0
        %v658 = vsel %vm335, %v306, 0
        %v661 = vsel %vm335, %v307, 0
        %v664 = vsel %vm335, %v308, 0
        %v667 = vsel %vm335, %v309, 0
        %v670 = vsel %vm335, %v310, 0
        %v673 = vsel %vm335, %v311, 0
        %v676 = vsel %vm335, %v312, 0
        %v679 = vsel %vm335, %v313, 0
        %v682 = vsel %vm335, %v314, 0
        %v685 = vsel %vm335, %v315, 0
        %v688 = vsel %vm335, %v316, 0
        %v691 = vsel %vm335, %v317, 0
        %v694 = vsel %vm335, %v318, 0
        %v697 = vsel %vm335, %v319, 0
        %v700 = vsel %vm335, %v320, 0
        %v703 = vsel %vm335, %v321, 0
        %v706 = vsel %vm335, %v322, 0
        %v709 = vsel %vm335, %v323, 0
        %v712 = vsel %vm335, %v324, 0
        %v715 = vsel %vm335, %v325, 0
        %v718 = vsel %vm335, %v326, 0
        %720 = vmatpush.msra.mxu0 0.0
        %721 = vmatpush.msra.mxu0 0.0
        %722 = vmatpush.msra.mxu0 0.0
        %723 = vmatpush.msra.mxu0 0.0
        %724 = vmatpush.msra.mxu0 0.0
        %725 = vmatpush.msra.mxu0 0.0
        %726 = vmatpush.msra.mxu0 0.0
        %727 = vmatpush.msra.mxu0 0.0
        %728 = vmatpush.msra.mxu0 0.0
        %729 = vmatpush.msra.mxu0 0.0
        %730 = vmatpush.msra.mxu0 0.0
        %731 = vmatpush.msra.mxu0 0.0
        %732 = vmatpush.msra.mxu0 %v330
        %733 = vmatpush.msra.mxu0 %v329
        %734 = vmatpush.msra.mxu0 %v328
        %735 = vmatpush.msra.mxu0 %v327
        %736 = vmatmul.f32.gmra.mxu0 %v337
        %v737 = vpop.f32.mrf.mxu0
        %v738 = vadd.f32 %v333, %v737
        %739 = vmatmul.f32.gmra.mxu0 %v340
        %v740 = vpop.f32.mrf.mxu0
        %v741 = vadd.f32 %v333, %v740
        %742 = vmatmul.f32.gmra.mxu0 %v343
        %v743 = vpop.f32.mrf.mxu0
        %v744 = vadd.f32 %v333, %v743
        %745 = vmatmul.f32.gmra.mxu0 %v346
        %v746 = vpop.f32.mrf.mxu0
        %v747 = vadd.f32 %v333, %v746
        %748 = vmatmul.f32.gmra.mxu0 %v349
        %v749 = vpop.f32.mrf.mxu0
        %v750 = vadd.f32 %v333, %v749
        %751 = vmatmul.f32.gmra.mxu0 %v352
        %v752 = vpop.f32.mrf.mxu0
        %v753 = vadd.f32 %v333, %v752
        %754 = vmatmul.f32.gmra.mxu0 %v355
        %v755 = vpop.f32.mrf.mxu0
        %v756 = vadd.f32 %v333, %v755
        %757 = vmatmul.f32.gmra.mxu0 %v358
        %v758 = vpop.f32.mrf.mxu0
        %v759 = vadd.f32 %v333, %v758
        %760 = vmatmul.f32.gmra.mxu0 %v361
        %v761 = vpop.f32.mrf.mxu0
        %v762 = vadd.f32 %v333, %v761
        %763 = vmatmul.f32.gmra.mxu0 %v364
        %v764 = vpop.f32.mrf.mxu0
        %v765 = vadd.f32 %v333, %v764
        %766 = vmatmul.f32.gmra.mxu0 %v367
        %v767 = vpop.f32.mrf.mxu0
        %v768 = vadd.f32 %v333, %v767
        %769 = vmatmul.f32.gmra.mxu0 %v370
        %v770 = vpop.f32.mrf.mxu0
        %v771 = vadd.f32 %v333, %v770
        %772 = vmatmul.f32.gmra.mxu0 %v373
        %v773 = vpop.f32.mrf.mxu0
        %v774 = vadd.f32 %v333, %v773
        %775 = vmatmul.f32.gmra.mxu0 %v376
        %v776 = vpop.f32.mrf.mxu0
        %v777 = vadd.f32 %v333, %v776
        %778 = vmatmul.f32.gmra.mxu0 %v379
        %v779 = vpop.f32.mrf.mxu0
        %v780 = vadd.f32 %v333, %v779
        %781 = vmatmul.f32.gmra.mxu0 %v382
        %v782 = vpop.f32.mrf.mxu0
        %v783 = vadd.f32 %v333, %v782
        %784 = vmatmul.f32.gmra.mxu0 %v385
        %v785 = vpop.f32.mrf.mxu0
        %v786 = vadd.f32 %v333, %v785
        %787 = vmatmul.f32.gmra.mxu0 %v388
        %v788 = vpop.f32.mrf.mxu0
        %v789 = vadd.f32 %v333, %v788
        %790 = vmatmul.f32.gmra.mxu0 %v391
        %v791 = vpop.f32.mrf.mxu0
        %v792 = vadd.f32 %v333, %v791
        %793 = vmatmul.f32.gmra.mxu0 %v394
        %v794 = vpop.f32.mrf.mxu0
        %v795 = vadd.f32 %v333, %v794
        %796 = vmatmul.f32.gmra.mxu0 %v397
        %v797 = vpop.f32.mrf.mxu0
        %v798 = vadd.f32 %v333, %v797
        %799 = vmatmul.f32.gmra.mxu0 %v400
        %v800 = vpop.f32.mrf.mxu0
        %v801 = vadd.f32 %v333, %v800
        %802 = vmatmul.f32.gmra.mxu0 %v403
        %v803 = vpop.f32.mrf.mxu0
        %v804 = vadd.f32 %v333, %v803
        %805 = vmatmul.f32.gmra.mxu0 %v406
        %v806 = vpop.f32.mrf.mxu0
        %v807 = vadd.f32 %v333, %v806
        %808 = vmatmul.f32.gmra.mxu0 %v409
        %v809 = vpop.f32.mrf.mxu0
        %v810 = vadd.f32 %v333, %v809
        %811 = vmatmul.f32.gmra.mxu0 %v412
        %v812 = vpop.f32.mrf.mxu0
        %v813 = vadd.f32 %v333, %v812
        %814 = vmatmul.f32.gmra.mxu0 %v415
        %v815 = vpop.f32.mrf.mxu0
        %v816 = vadd.f32 %v333, %v815
        %817 = vmatmul.f32.gmra.mxu0 %v418
        %v818 = vpop.f32.mrf.mxu0
        %v819 = vadd.f32 %v333, %v818
        %820 = vmatmul.f32.gmra.mxu0 %v421
        %v821 = vpop.f32.mrf.mxu0
        %v822 = vadd.f32 %v333, %v821
        %823 = vmatmul.f32.gmra.mxu0 %v424
        %v824 = vpop.f32.mrf.mxu0
        %v825 = vadd.f32 %v333, %v824
        %826 = vmatmul.f32.gmra.mxu0 %v427
        %v827 = vpop.f32.mrf.mxu0
        %v828 = vadd.f32 %v333, %v827
        %829 = vmatmul.f32.gmra.mxu0 %v430
        %v830 = vpop.f32.mrf.mxu0
        %v831 = vadd.f32 %v333, %v830
        %832 = vmatmul.f32.gmra.mxu0 %v433
        %v833 = vpop.f32.mrf.mxu0
        %v834 = vadd.f32 %v333, %v833
        %835 = vmatmul.f32.gmra.mxu0 %v436
        %v836 = vpop.f32.mrf.mxu0
        %v837 = vadd.f32 %v333, %v836
        %838 = vmatmul.f32.gmra.mxu0 %v439
        %v839 = vpop.f32.mrf.mxu0
        %v840 = vadd.f32 %v333, %v839
        %841 = vmatmul.f32.gmra.mxu0 %v442
        %v842 = vpop.f32.mrf.mxu0
        %v843 = vadd.f32 %v333, %v842
        %844 = vmatmul.f32.gmra.mxu0 %v445
        %v845 = vpop.f32.mrf.mxu0
        %v846 = vadd.f32 %v333, %v845
        %847 = vmatmul.f32.gmra.mxu0 %v448
        %v848 = vpop.f32.mrf.mxu0
        %v849 = vadd.f32 %v333, %v848
        %850 = vmatmul.f32.gmra.mxu0 %v451
        %v851 = vpop.f32.mrf.mxu0
        %v852 = vadd.f32 %v333, %v851
        %853 = vmatmul.f32.gmra.mxu0 %v454
        %v854 = vpop.f32.mrf.mxu0
        %v855 = vadd.f32 %v333, %v854
        %856 = vmatmul.f32.gmra.mxu0 %v457
        %v857 = vpop.f32.mrf.mxu0
        %v858 = vadd.f32 %v333, %v857
        %859 = vmatmul.f32.gmra.mxu0 %v460
        %v860 = vpop.f32.mrf.mxu0
        %v861 = vadd.f32 %v333, %v860
        %862 = vmatmul.f32.gmra.mxu0 %v463
        %v863 = vpop.f32.mrf.mxu0
        %v864 = vadd.f32 %v333, %v863
        %865 = vmatmul.f32.gmra.mxu0 %v466
        %v866 = vpop.f32.mrf.mxu0
        %v867 = vadd.f32 %v333, %v866
        %868 = vmatmul.f32.gmra.mxu0 %v469
        %v869 = vpop.f32.mrf.mxu0
        %v870 = vadd.f32 %v333, %v869
        %871 = vmatmul.f32.gmra.mxu0 %v472
        %v872 = vpop.f32.mrf.mxu0
        %v873 = vadd.f32 %v333, %v872
        %874 = vmatmul.f32.gmra.mxu0 %v475
        %v875 = vpop.f32.mrf.mxu0
        %v876 = vadd.f32 %v333, %v875
        %877 = vmatmul.f32.gmra.mxu0 %v478
        %v878 = vpop.f32.mrf.mxu0
        %v879 = vadd.f32 %v333, %v878
        %880 = vmatmul.f32.gmra.mxu0 %v481
        %v881 = vpop.f32.mrf.mxu0
        %v882 = vadd.f32 %v333, %v881
        %883 = vmatmul.f32.gmra.mxu0 %v484
        %v884 = vpop.f32.mrf.mxu0
        %v885 = vadd.f32 %v333, %v884
        %886 = vmatmul.f32.gmra.mxu0 %v487
        %v887 = vpop.f32.mrf.mxu0
        %v888 = vadd.f32 %v333, %v887
        %889 = vmatmul.f32.gmra.mxu0 %v490
        %v890 = vpop.f32.mrf.mxu0
        %v891 = vadd.f32 %v333, %v890
        %892 = vmatmul.f32.gmra.mxu0 %v493
        %v893 = vpop.f32.mrf.mxu0
        %v894 = vadd.f32 %v333, %v893
        %895 = vmatmul.f32.gmra.mxu0 %v496
        %v896 = vpop.f32.mrf.mxu0
        %v897 = vadd.f32 %v333, %v896
        %898 = vmatmul.f32.gmra.mxu0 %v499
        %v899 = vpop.f32.mrf.mxu0
        %v900 = vadd.f32 %v333, %v899
        %901 = vmatmul.f32.gmra.mxu0 %v502
        %v902 = vpop.f32.mrf.mxu0
        %v903 = vadd.f32 %v333, %v902
        %904 = vmatmul.f32.gmra.mxu0 %v505
        %v905 = vpop.f32.mrf.mxu0
        %v906 = vadd.f32 %v333, %v905
        %907 = vmatmul.f32.gmra.mxu0 %v508
        %v908 = vpop.f32.mrf.mxu0
        %v909 = vadd.f32 %v333, %v908
        %910 = vmatmul.f32.gmra.mxu0 %v511
        %v911 = vpop.f32.mrf.mxu0
        %v912 = vadd.f32 %v333, %v911
        %913 = vmatmul.f32.gmra.mxu0 %v514
        %v914 = vpop.f32.mrf.mxu0
        %v915 = vadd.f32 %v333, %v914
        %916 = vmatmul.f32.gmra.mxu0 %v517
        %v917 = vpop.f32.mrf.mxu0
        %v918 = vadd.f32 %v333, %v917
        %919 = vmatmul.f32.gmra.mxu0 %v520
        %v920 = vpop.f32.mrf.mxu0
        %v921 = vadd.f32 %v333, %v920
        %922 = vmatmul.f32.gmra.mxu0 %v523
        %v923 = vpop.f32.mrf.mxu0
        %v924 = vadd.f32 %v333, %v923
        %925 = vmatmul.f32.gmra.mxu0 %v526
        %v926 = vpop.f32.mrf.mxu0
        %v927 = vadd.f32 %v333, %v926
        %928 = vmatmul.f32.gmra.mxu0 %v529
        %v929 = vpop.f32.mrf.mxu0
        %v930 = vadd.f32 %v333, %v929
        %931 = vmatmul.f32.gmra.mxu0 %v532
        %v932 = vpop.f32.mrf.mxu0
        %v933 = vadd.f32 %v333, %v932
        %934 = vmatmul.f32.gmra.mxu0 %v535
        %v935 = vpop.f32.mrf.mxu0
        %v936 = vadd.f32 %v333, %v935
        %937 = vmatmul.f32.gmra.mxu0 %v538
        %v938 = vpop.f32.mrf.mxu0
        %v939 = vadd.f32 %v333, %v938
        %940 = vmatmul.f32.gmra.mxu0 %v541
        %v941 = vpop.f32.mrf.mxu0
        %v942 = vadd.f32 %v333, %v941
        %943 = vmatmul.f32.gmra.mxu0 %v544
        %v944 = vpop.f32.mrf.mxu0
        %v945 = vadd.f32 %v333, %v944
        %946 = vmatmul.f32.gmra.mxu0 %v547
        %v947 = vpop.f32.mrf.mxu0
        %v948 = vadd.f32 %v333, %v947
        %949 = vmatmul.f32.gmra.mxu0 %v550
        %v950 = vpop.f32.mrf.mxu0
        %v951 = vadd.f32 %v333, %v950
        %952 = vmatmul.f32.gmra.mxu0 %v553
        %v953 = vpop.f32.mrf.mxu0
        %v954 = vadd.f32 %v333, %v953
        %955 = vmatmul.f32.gmra.mxu0 %v556
        %v956 = vpop.f32.mrf.mxu0
        %v957 = vadd.f32 %v333, %v956
        %958 = vmatmul.f32.gmra.mxu0 %v559
        %v959 = vpop.f32.mrf.mxu0
        %v960 = vadd.f32 %v333, %v959
        %961 = vmatmul.f32.gmra.mxu0 %v562
        %v962 = vpop.f32.mrf.mxu0
        %v963 = vadd.f32 %v333, %v962
        %964 = vmatmul.f32.gmra.mxu0 %v565
        %v965 = vpop.f32.mrf.mxu0
        %v966 = vadd.f32 %v333, %v965
        %967 = vmatmul.f32.gmra.mxu0 %v568
        %v968 = vpop.f32.mrf.mxu0
        %v969 = vadd.f32 %v333, %v968
        %970 = vmatmul.f32.gmra.mxu0 %v571
        %v971 = vpop.f32.mrf.mxu0
        %v972 = vadd.f32 %v333, %v971
        %973 = vmatmul.f32.gmra.mxu0 %v574
        %v974 = vpop.f32.mrf.mxu0
        %v975 = vadd.f32 %v333, %v974
        %976 = vmatmul.f32.gmra.mxu0 %v577
        %v977 = vpop.f32.mrf.mxu0
        %v978 = vadd.f32 %v333, %v977
        %979 = vmatmul.f32.gmra.mxu0 %v580
        %v980 = vpop.f32.mrf.mxu0
        %v981 = vadd.f32 %v333, %v980
        %982 = vmatmul.f32.gmra.mxu0 %v583
        %v983 = vpop.f32.mrf.mxu0
        %v984 = vadd.f32 %v333, %v983
        %985 = vmatmul.f32.gmra.mxu0 %v586
        %v986 = vpop.f32.mrf.mxu0
        %v987 = vadd.f32 %v333, %v986
        %988 = vmatmul.f32.gmra.mxu0 %v589
        %v989 = vpop.f32.mrf.mxu0
        %v990 = vadd.f32 %v333, %v989
        %991 = vmatmul.f32.gmra.mxu0 %v592
        %v992 = vpop.f32.mrf.mxu0
        %v993 = vadd.f32 %v333, %v992
        %994 = vmatmul.f32.gmra.mxu0 %v595
        %v995 = vpop.f32.mrf.mxu0
        %v996 = vadd.f32 %v333, %v995
        %997 = vmatmul.f32.gmra.mxu0 %v598
        %v998 = vpop.f32.mrf.mxu0
        %v999 = vadd.f32 %v333, %v998
        %1000 = vmatmul.f32.gmra.mxu0 %v601
        %v1001 = vpop.f32.mrf.mxu0
        %v1002 = vadd.f32 %v333, %v1001
        %1003 = vmatmul.f32.gmra.mxu0 %v604
        %v1004 = vpop.f32.mrf.mxu0
        %v1005 = vadd.f32 %v333, %v1004
        %1006 = vmatmul.f32.gmra.mxu0 %v607
        %v1007 = vpop.f32.mrf.mxu0
        %v1008 = vadd.f32 %v333, %v1007
        %1009 = vmatmul.f32.gmra.mxu0 %v610
        %v1010 = vpop.f32.mrf.mxu0
        %v1011 = vadd.f32 %v333, %v1010
        %1012 = vmatmul.f32.gmra.mxu0 %v613
        %v1013 = vpop.f32.mrf.mxu0
        %v1014 = vadd.f32 %v333, %v1013
        %1015 = vmatmul.f32.gmra.mxu0 %v616
        %v1016 = vpop.f32.mrf.mxu0
        %v1017 = vadd.f32 %v333, %v1016
        %1018 = vmatmul.f32.gmra.mxu0 %v619
        %v1019 = vpop.f32.mrf.mxu0
        %v1020 = vadd.f32 %v333, %v1019
        %1021 = vmatmul.f32.gmra.mxu0 %v622
        %v1022 = vpop.f32.mrf.mxu0
        %v1023 = vadd.f32 %v333, %v1022
        %1024 = vmatmul.f32.gmra.mxu0 %v625
        %v1025 = vpop.f32.mrf.mxu0
        %v1026 = vadd.f32 %v333, %v1025
        %1027 = vmatmul.f32.gmra.mxu0 %v628
        %v1028 = vpop.f32.mrf.mxu0
        %v1029 = vadd.f32 %v333, %v1028
        %1030 = vmatmul.f32.gmra.mxu0 %v631
        %v1031 = vpop.f32.mrf.mxu0
        %v1032 = vadd.f32 %v333, %v1031
        %1033 = vmatmul.f32.gmra.mxu0 %v634
        %v1034 = vpop.f32.mrf.mxu0
        %v1035 = vadd.f32 %v333, %v1034
        %1036 = vmatmul.f32.gmra.mxu0 %v637
        %v1037 = vpop.f32.mrf.mxu0
        %v1038 = vadd.f32 %v333, %v1037
        %1039 = vmatmul.f32.gmra.mxu0 %v640
        %v1040 = vpop.f32.mrf.mxu0
        %v1041 = vadd.f32 %v333, %v1040
        %1042 = vmatmul.f32.gmra.mxu0 %v643
        %v1043 = vpop.f32.mrf.mxu0
        %v1044 = vadd.f32 %v333, %v1043
        %1045 = vmatmul.f32.gmra.mxu0 %v646
        %v1046 = vpop.f32.mrf.mxu0
        %v1047 = vadd.f32 %v333, %v1046
        %1048 = vmatmul.f32.gmra.mxu0 %v649
        %v1049 = vpop.f32.mrf.mxu0
        %v1050 = vadd.f32 %v333, %v1049
        %1051 = vmatmul.f32.gmra.mxu0 %v652
        %v1052 = vpop.f32.mrf.mxu0
        %v1053 = vadd.f32 %v333, %v1052
        %1054 = vmatmul.f32.gmra.mxu0 %v655
        %v1055 = vpop.f32.mrf.mxu0
        %v1056 = vadd.f32 %v333, %v1055
        %1057 = vmatmul.f32.gmra.mxu0 %v658
        %v1058 = vpop.f32.mrf.mxu0
        %v1059 = vadd.f32 %v333, %v1058
        %1060 = vmatmul.f32.gmra.mxu0 %v661
        %v1061 = vpop.f32.mrf.mxu0
        %v1062 = vadd.f32 %v333, %v1061
        %1063 = vmatmul.f32.gmra.mxu0 %v664
        %v1064 = vpop.f32.mrf.mxu0
        %v1065 = vadd.f32 %v333, %v1064
        %1066 = vmatmul.f32.gmra.mxu0 %v667
        %v1067 = vpop.f32.mrf.mxu0
        %v1068 = vadd.f32 %v333, %v1067
        %1069 = vmatmul.f32.gmra.mxu0 %v670
        %v1070 = vpop.f32.mrf.mxu0
        %v1071 = vadd.f32 %v333, %v1070
        %1072 = vmatmul.f32.gmra.mxu0 %v673
        %v1073 = vpop.f32.mrf.mxu0
        %v1074 = vadd.f32 %v333, %v1073
        %1075 = vmatmul.f32.gmra.mxu0 %v676
        %v1076 = vpop.f32.mrf.mxu0
        %v1077 = vadd.f32 %v333, %v1076
        %1078 = vmatmul.f32.gmra.mxu0 %v679
        %v1079 = vpop.f32.mrf.mxu0
        %v1080 = vadd.f32 %v333, %v1079
        %1081 = vmatmul.f32.gmra.mxu0 %v682
        %v1082 = vpop.f32.mrf.mxu0
        %v1083 = vadd.f32 %v333, %v1082
        %1084 = vmatmul.f32.gmra.mxu0 %v685
        %v1085 = vpop.f32.mrf.mxu0
        %v1086 = vadd.f32 %v333, %v1085
        %1087 = vmatmul.f32.gmra.mxu0 %v688
        %v1088 = vpop.f32.mrf.mxu0
        %v1089 = vadd.f32 %v333, %v1088
        %1090 = vmatmul.f32.gmra.mxu0 %v691
        %v1091 = vpop.f32.mrf.mxu0
        %v1092 = vadd.f32 %v333, %v1091
        %1093 = vmatmul.f32.gmra.mxu0 %v694
        %v1094 = vpop.f32.mrf.mxu0
        %v1095 = vadd.f32 %v333, %v1094
        %1096 = vmatmul.f32.gmra.mxu0 %v697
        %v1097 = vpop.f32.mrf.mxu0
        %v1098 = vadd.f32 %v333, %v1097
        %1099 = vmatmul.f32.gmra.mxu0 %v700
        %v1100 = vpop.f32.mrf.mxu0
        %v1101 = vadd.f32 %v333, %v1100
        %1102 = vmatmul.f32.gmra.mxu0 %v703
        %v1103 = vpop.f32.mrf.mxu0
        %v1104 = vadd.f32 %v333, %v1103
        %1105 = vmatmul.f32.gmra.mxu0 %v706
        %v1106 = vpop.f32.mrf.mxu0
        %v1107 = vadd.f32 %v333, %v1106
        %1108 = vmatmul.f32.gmra.mxu0 %v709
        %v1109 = vpop.f32.mrf.mxu0
        %v1110 = vadd.f32 %v333, %v1109
        %1111 = vmatmul.f32.gmra.mxu0 %v712
        %v1112 = vpop.f32.mrf.mxu0
        %v1113 = vadd.f32 %v333, %v1112
        %1114 = vmatmul.f32.gmra.mxu0 %v715
        %v1115 = vpop.f32.mrf.mxu0
        %v1116 = vadd.f32 %v333, %v1115
        %1117 = vmatmul.f32.gmra.mxu0 %v718
        %v1118 = vpop.f32.mrf.mxu0
        %v1119 = vadd.f32 %v333, %v1118
        %1120 = vdwg.mxu0
        %v1121 = vmax.f32 %v738, 0.0
        %v1122 = vmax.f32 %v741, 0.0
        %v1123 = vmax.f32 %v744, 0.0
        %v1124 = vmax.f32 %v747, 0.0
        %v1125 = vmax.f32 %v750, 0.0
        %v1126 = vmax.f32 %v753, 0.0
        %v1127 = vmax.f32 %v756, 0.0
        %v1128 = vmax.f32 %v759, 0.0
        %v1129 = vmax.f32 %v762, 0.0
        %v1130 = vmax.f32 %v765, 0.0
        %v1131 = vmax.f32 %v768, 0.0
        %v1132 = vmax.f32 %v771, 0.0
        %v1133 = vmax.f32 %v774, 0.0
        %v1134 = vmax.f32 %v777, 0.0
        %v1135 = vmax.f32 %v780, 0.0
        %v1136 = vmax.f32 %v783, 0.0
        %v1137 = vmax.f32 %v786, 0.0
        %v1138 = vmax.f32 %v789, 0.0
        %v1139 = vmax.f32 %v792, 0.0
        %v1140 = vmax.f32 %v795, 0.0
        %v1141 = vmax.f32 %v798, 0.0
        %v1142 = vmax.f32 %v801, 0.0
        %v1143 = vmax.f32 %v804, 0.0
        %v1144 = vmax.f32 %v807, 0.0
        %v1145 = vmax.f32 %v810, 0.0
        %v1146 = vmax.f32 %v813, 0.0
        %v1147 = vmax.f32 %v816, 0.0
        %v1148 = vmax.f32 %v819, 0.0
        %v1149 = vmax.f32 %v822, 0.0
        %v1150 = vmax.f32 %v825, 0.0
        %v1151 = vmax.f32 %v828, 0.0
        %v1152 = vmax.f32 %v831, 0.0
        %v1153 = vmax.f32 %v834, 0.0
        %v1154 = vmax.f32 %v837, 0.0
        %v1155 = vmax.f32 %v840, 0.0
        %v1156 = vmax.f32 %v843, 0.0
        %v1157 = vmax.f32 %v846, 0.0
        %v1158 = vmax.f32 %v849, 0.0
        %v1159 = vmax.f32 %v852, 0.0
        %v1160 = vmax.f32 %v855, 0.0
        %v1161 = vmax.f32 %v858, 0.0
        %v1162 = vmax.f32 %v861, 0.0
        %v1163 = vmax.f32 %v864, 0.0
        %v1164 = vmax.f32 %v867, 0.0
        %v1165 = vmax.f32 %v870, 0.0
        %v1166 = vmax.f32 %v873, 0.0
        %v1167 = vmax.f32 %v876, 0.0
        %v1168 = vmax.f32 %v879, 0.0
        %v1169 = vmax.f32 %v882, 0.0
        %v1170 = vmax.f32 %v885, 0.0
        %v1171 = vmax.f32 %v888, 0.0
        %v1172 = vmax.f32 %v891, 0.0
        %v1173 = vmax.f32 %v894, 0.0
        %v1174 = vmax.f32 %v897, 0.0
        %v1175 = vmax.f32 %v900, 0.0
        %v1176 = vmax.f32 %v903, 0.0
        %v1177 = vmax.f32 %v906, 0.0
        %v1178 = vmax.f32 %v909, 0.0
        %v1179 = vmax.f32 %v912, 0.0
        %v1180 = vmax.f32 %v915, 0.0
        %v1181 = vmax.f32 %v918, 0.0
        %v1182 = vmax.f32 %v921, 0.0
        %v1183 = vmax.f32 %v924, 0.0
        %v1184 = vmax.f32 %v927, 0.0
        %v1185 = vmax.f32 %v930, 0.0
        %v1186 = vmax.f32 %v933, 0.0
        %v1187 = vmax.f32 %v936, 0.0
        %v1188 = vmax.f32 %v939, 0.0
        %v1189 = vmax.f32 %v942, 0.0
        %v1190 = vmax.f32 %v945, 0.0
        %v1191 = vmax.f32 %v948, 0.0
        %v1192 = vmax.f32 %v951, 0.0
        %v1193 = vmax.f32 %v954, 0.0
        %v1194 = vmax.f32 %v957, 0.0
        %v1195 = vmax.f32 %v960, 0.0
        %v1196 = vmax.f32 %v963, 0.0
        %v1197 = vmax.f32 %v966, 0.0
        %v1198 = vmax.f32 %v969, 0.0
        %v1199 = vmax.f32 %v972, 0.0
        %v1200 = vmax.f32 %v975, 0.0
        %v1201 = vmax.f32 %v978, 0.0
        %v1202 = vmax.f32 %v981, 0.0
        %v1203 = vmax.f32 %v984, 0.0
        %v1204 = vmax.f32 %v987, 0.0
        %v1205 = vmax.f32 %v990, 0.0
        %v1206 = vmax.f32 %v993, 0.0
        %v1207 = vmax.f32 %v996, 0.0
        %v1208 = vmax.f32 %v999, 0.0
        %v1209 = vmax.f32 %v1002, 0.0
        %v1210 = vmax.f32 %v1005, 0.0
        %v1211 = vmax.f32 %v1008, 0.0
        %v1212 = vmax.f32 %v1011, 0.0
        %v1213 = vmax.f32 %v1014, 0.0
        %v1214 = vmax.f32 %v1017, 0.0
        %v1215 = vmax.f32 %v1020, 0.0
        %v1216 = vmax.f32 %v1023, 0.0
        %v1217 = vmax.f32 %v1026, 0.0
        %v1218 = vmax.f32 %v1029, 0.0
        %v1219 = vmax.f32 %v1032, 0.0
        %v1220 = vmax.f32 %v1035, 0.0
        %v1221 = vmax.f32 %v1038, 0.0
        %v1222 = vmax.f32 %v1041, 0.0
        %v1223 = vmax.f32 %v1044, 0.0
        %v1224 = vmax.f32 %v1047, 0.0
        %v1225 = vmax.f32 %v1050, 0.0
        %v1226 = vmax.f32 %v1053, 0.0
        %v1227 = vmax.f32 %v1056, 0.0
        %v1228 = vmax.f32 %v1059, 0.0
        %v1229 = vmax.f32 %v1062, 0.0
        %v1230 = vmax.f32 %v1065, 0.0
        %v1231 = vmax.f32 %v1068, 0.0
        %v1232 = vmax.f32 %v1071, 0.0
        %v1233 = vmax.f32 %v1074, 0.0
        %v1234 = vmax.f32 %v1077, 0.0
        %v1235 = vmax.f32 %v1080, 0.0
        %v1236 = vmax.f32 %v1083, 0.0
        %v1237 = vmax.f32 %v1086, 0.0
        %v1238 = vmax.f32 %v1089, 0.0
        %v1239 = vmax.f32 %v1092, 0.0
        %v1240 = vmax.f32 %v1095, 0.0
        %v1241 = vmax.f32 %v1098, 0.0
        %v1242 = vmax.f32 %v1101, 0.0
        %v1243 = vmax.f32 %v1104, 0.0
        %v1244 = vmax.f32 %v1107, 0.0
        %v1245 = vmax.f32 %v1110, 0.0
        %v1246 = vmax.f32 %v1113, 0.0
        %v1247 = vmax.f32 %v1116, 0.0
        %v1248 = vmax.f32 %v1119, 0.0
        %v1249 = vld [vmem:[%s2] sm:$0xff]
        %v1250 = vld [vmem:[%s2 + $0x8] sm:$0xff]
        %v1251 = vld [vmem:[%s2 + $0x10] sm:$0xff]
        %v1252 = vld [vmem:[%s2 + $0x18] sm:$0xff]
        %v1253 = vld [vmem:[%s2 + $0x20] sm:$0xff]
        %v1254 = vld [vmem:[%s2 + $0x28] sm:$0xff]
        %v1255 = vld [vmem:[%s2 + $0x30] sm:$0xff]
        %v1256 = vld [vmem:[%s2 + $0x38] sm:$0xff]
        %v1257 = vld [vmem:[%s2 + $0x40] sm:$0xff]
        %v1258 = vld [vmem:[%s2 + $0x48] sm:$0xff]
        %v1259 = vld [vmem:[%s2 + $0x50] sm:$0xff]
        %v1260 = vld [vmem:[%s2 + $0x58] sm:$0xff]
        %v1261 = vld [vmem:[%s2 + $0x60] sm:$0xff]
        %v1262 = vld [vmem:[%s2 + $0x68] sm:$0xff]
        %v1263 = vld [vmem:[%s2 + $0x70] sm:$0xff]
        %v1264 = vld [vmem:[%s2 + $0x78] sm:$0xff]
        %s1265 = scalar_lea.vmem %s3, 1
        %v1266 = vld [vmem:[%s1265] sm:$0x1]
        %v1268 = vperm.slane %v1266, 0
        %1270 = vmatpush.msra.mxu0 %v1264
        %1271 = vmatpush.msra.mxu0 %v1263
        %1272 = vmatpush.msra.mxu0 %v1262
        %1273 = vmatpush.msra.mxu0 %v1261
        %1274 = vmatpush.msra.mxu0 %v1260
        %1275 = vmatpush.msra.mxu0 %v1259
        %1276 = vmatpush.msra.mxu0 %v1258
        %1277 = vmatpush.msra.mxu0 %v1257
        %1278 = vmatpush.msra.mxu0 %v1256
        %1279 = vmatpush.msra.mxu0 %v1255
        %1280 = vmatpush.msra.mxu0 %v1254
        %1281 = vmatpush.msra.mxu0 %v1253
        %1282 = vmatpush.msra.mxu0 %v1252
        %1283 = vmatpush.msra.mxu0 %v1251
        %1284 = vmatpush.msra.mxu0 %v1250
        %1285 = vmatpush.msra.mxu0 %v1249
        %1286 = vmatmul.f32.gmra.mxu0 %v1121
        %v1287 = vpop.f32.mrf.mxu0
        %v1288 = vadd.f32 %v1268, %v1287
        %1289 = vmatmul.f32.gmra.mxu0 %v1122
        %v1290 = vpop.f32.mrf.mxu0
        %v1291 = vadd.f32 %v1268, %v1290
        %1292 = vmatmul.f32.gmra.mxu0 %v1123
        %v1293 = vpop.f32.mrf.mxu0
        %v1294 = vadd.f32 %v1268, %v1293
        %1295 = vmatmul.f32.gmra.mxu0 %v1124
        %v1296 = vpop.f32.mrf.mxu0
        %v1297 = vadd.f32 %v1268, %v1296
        %1298 = vmatmul.f32.gmra.mxu0 %v1125
        %v1299 = vpop.f32.mrf.mxu0
        %v1300 = vadd.f32 %v1268, %v1299
        %1301 = vmatmul.f32.gmra.mxu0 %v1126
        %v1302 = vpop.f32.mrf.mxu0
        %v1303 = vadd.f32 %v1268, %v1302
        %1304 = vmatmul.f32.gmra.mxu0 %v1127
        %v1305 = vpop.f32.mrf.mxu0
        %v1306 = vadd.f32 %v1268, %v1305
        %1307 = vmatmul.f32.gmra.mxu0 %v1128
        %v1308 = vpop.f32.mrf.mxu0
        %v1309 = vadd.f32 %v1268, %v1308
        %1310 = vmatmul.f32.gmra.mxu0 %v1129
        %v1311 = vpop.f32.mrf.mxu0
        %v1312 = vadd.f32 %v1268, %v1311
        %1313 = vmatmul.f32.gmra.mxu0 %v1130
        %v1314 = vpop.f32.mrf.mxu0
        %v1315 = vadd.f32 %v1268, %v1314
        %1316 = vmatmul.f32.gmra.mxu0 %v1131
        %v1317 = vpop.f32.mrf.mxu0
        %v1318 = vadd.f32 %v1268, %v1317
        %1319 = vmatmul.f32.gmra.mxu0 %v1132
        %v1320 = vpop.f32.mrf.mxu0
        %v1321 = vadd.f32 %v1268, %v1320
        %1322 = vmatmul.f32.gmra.mxu0 %v1133
        %v1323 = vpop.f32.mrf.mxu0
        %v1324 = vadd.f32 %v1268, %v1323
        %1325 = vmatmul.f32.gmra.mxu0 %v1134
        %v1326 = vpop.f32.mrf.mxu0
        %v1327 = vadd.f32 %v1268, %v1326
        %1328 = vmatmul.f32.gmra.mxu0 %v1135
        %v1329 = vpop.f32.mrf.mxu0
        %v1330 = vadd.f32 %v1268, %v1329
        %1331 = vmatmul.f32.gmra.mxu0 %v1136
        %v1332 = vpop.f32.mrf.mxu0
        %v1333 = vadd.f32 %v1268, %v1332
        %1334 = vmatmul.f32.gmra.mxu0 %v1137
        %v1335 = vpop.f32.mrf.mxu0
        %v1336 = vadd.f32 %v1268, %v1335
        %1337 = vmatmul.f32.gmra.mxu0 %v1138
        %v1338 = vpop.f32.mrf.mxu0
        %v1339 = vadd.f32 %v1268, %v1338
        %1340 = vmatmul.f32.gmra.mxu0 %v1139
        %v1341 = vpop.f32.mrf.mxu0
        %v1342 = vadd.f32 %v1268, %v1341
        %1343 = vmatmul.f32.gmra.mxu0 %v1140
        %v1344 = vpop.f32.mrf.mxu0
        %v1345 = vadd.f32 %v1268, %v1344
        %1346 = vmatmul.f32.gmra.mxu0 %v1141
        %v1347 = vpop.f32.mrf.mxu0
        %v1348 = vadd.f32 %v1268, %v1347
        %1349 = vmatmul.f32.gmra.mxu0 %v1142
        %v1350 = vpop.f32.mrf.mxu0
        %v1351 = vadd.f32 %v1268, %v1350
        %1352 = vmatmul.f32.gmra.mxu0 %v1143
        %v1353 = vpop.f32.mrf.mxu0
        %v1354 = vadd.f32 %v1268, %v1353
        %1355 = vmatmul.f32.gmra.mxu0 %v1144
        %v1356 = vpop.f32.mrf.mxu0
        %v1357 = vadd.f32 %v1268, %v1356
        %1358 = vmatmul.f32.gmra.mxu0 %v1145
        %v1359 = vpop.f32.mrf.mxu0
        %v1360 = vadd.f32 %v1268, %v1359
        %1361 = vmatmul.f32.gmra.mxu0 %v1146
        %v1362 = vpop.f32.mrf.mxu0
        %v1363 = vadd.f32 %v1268, %v1362
        %1364 = vmatmul.f32.gmra.mxu0 %v1147
        %v1365 = vpop.f32.mrf.mxu0
        %v1366 = vadd.f32 %v1268, %v1365
        %1367 = vmatmul.f32.gmra.mxu0 %v1148
        %v1368 = vpop.f32.mrf.mxu0
        %v1369 = vadd.f32 %v1268, %v1368
        %1370 = vmatmul.f32.gmra.mxu0 %v1149
        %v1371 = vpop.f32.mrf.mxu0
        %v1372 = vadd.f32 %v1268, %v1371
        %1373 = vmatmul.f32.gmra.mxu0 %v1150
        %v1374 = vpop.f32.mrf.mxu0
        %v1375 = vadd.f32 %v1268, %v1374
        %1376 = vmatmul.f32.gmra.mxu0 %v1151
        %v1377 = vpop.f32.mrf.mxu0
        %v1378 = vadd.f32 %v1268, %v1377
        %1379 = vmatmul.f32.gmra.mxu0 %v1152
        %v1380 = vpop.f32.mrf.mxu0
        %v1381 = vadd.f32 %v1268, %v1380
        %1382 = vmatmul.f32.gmra.mxu0 %v1153
        %v1383 = vpop.f32.mrf.mxu0
        %v1384 = vadd.f32 %v1268, %v1383
        %1385 = vmatmul.f32.gmra.mxu0 %v1154
        %v1386 = vpop.f32.mrf.mxu0
        %v1387 = vadd.f32 %v1268, %v1386
        %1388 = vmatmul.f32.gmra.mxu0 %v1155
        %v1389 = vpop.f32.mrf.mxu0
        %v1390 = vadd.f32 %v1268, %v1389
        %1391 = vmatmul.f32.gmra.mxu0 %v1156
        %v1392 = vpop.f32.mrf.mxu0
        %v1393 = vadd.f32 %v1268, %v1392
        %1394 = vmatmul.f32.gmra.mxu0 %v1157
        %v1395 = vpop.f32.mrf.mxu0
        %v1396 = vadd.f32 %v1268, %v1395
        %1397 = vmatmul.f32.gmra.mxu0 %v1158
        %v1398 = vpop.f32.mrf.mxu0
        %v1399 = vadd.f32 %v1268, %v1398
        %1400 = vmatmul.f32.gmra.mxu0 %v1159
        %v1401 = vpop.f32.mrf.mxu0
        %v1402 = vadd.f32 %v1268, %v1401
        %1403 = vmatmul.f32.gmra.mxu0 %v1160
        %v1404 = vpop.f32.mrf.mxu0
        %v1405 = vadd.f32 %v1268, %v1404
        %1406 = vmatmul.f32.gmra.mxu0 %v1161
        %v1407 = vpop.f32.mrf.mxu0
        %v1408 = vadd.f32 %v1268, %v1407
        %1409 = vmatmul.f32.gmra.mxu0 %v1162
        %v1410 = vpop.f32.mrf.mxu0
        %v1411 = vadd.f32 %v1268, %v1410
        %1412 = vmatmul.f32.gmra.mxu0 %v1163
        %v1413 = vpop.f32.mrf.mxu0
        %v1414 = vadd.f32 %v1268, %v1413
        %1415 = vmatmul.f32.gmra.mxu0 %v1164
        %v1416 = vpop.f32.mrf.mxu0
        %v1417 = vadd.f32 %v1268, %v1416
        %1418 = vmatmul.f32.gmra.mxu0 %v1165
        %v1419 = vpop.f32.mrf.mxu0
        %v1420 = vadd.f32 %v1268, %v1419
        %1421 = vmatmul.f32.gmra.mxu0 %v1166
        %v1422 = vpop.f32.mrf.mxu0
        %v1423 = vadd.f32 %v1268, %v1422
        %1424 = vmatmul.f32.gmra.mxu0 %v1167
        %v1425 = vpop.f32.mrf.mxu0
        %v1426 = vadd.f32 %v1268, %v1425
        %1427 = vmatmul.f32.gmra.mxu0 %v1168
        %v1428 = vpop.f32.mrf.mxu0
        %v1429 = vadd.f32 %v1268, %v1428
        %1430 = vmatmul.f32.gmra.mxu0 %v1169
        %v1431 = vpop.f32.mrf.mxu0
        %v1432 = vadd.f32 %v1268, %v1431
        %1433 = vmatmul.f32.gmra.mxu0 %v1170
        %v1434 = vpop.f32.mrf.mxu0
        %v1435 = vadd.f32 %v1268, %v1434
        %1436 = vmatmul.f32.gmra.mxu0 %v1171
        %v1437 = vpop.f32.mrf.mxu0
        %v1438 = vadd.f32 %v1268, %v1437
        %1439 = vmatmul.f32.gmra.mxu0 %v1172
        %v1440 = vpop.f32.mrf.mxu0
        %v1441 = vadd.f32 %v1268, %v1440
        %1442 = vmatmul.f32.gmra.mxu0 %v1173
        %v1443 = vpop.f32.mrf.mxu0
        %v1444 = vadd.f32 %v1268, %v1443
        %1445 = vmatmul.f32.gmra.mxu0 %v1174
        %v1446 = vpop.f32.mrf.mxu0
        %v1447 = vadd.f32 %v1268, %v1446
        %1448 = vmatmul.f32.gmra.mxu0 %v1175
        %v1449 = vpop.f32.mrf.mxu0
        %v1450 = vadd.f32 %v1268, %v1449
        %1451 = vmatmul.f32.gmra.mxu0 %v1176
        %v1452 = vpop.f32.mrf.mxu0
        %v1453 = vadd.f32 %v1268, %v1452
        %1454 = vmatmul.f32.gmra.mxu0 %v1177
        %v1455 = vpop.f32.mrf.mxu0
        %v1456 = vadd.f32 %v1268, %v1455
        %1457 = vmatmul.f32.gmra.mxu0 %v1178
        %v1458 = vpop.f32.mrf.mxu0
        %v1459 = vadd.f32 %v1268, %v1458
        %1460 = vmatmul.f32.gmra.mxu0 %v1179
        %v1461 = vpop.f32.mrf.mxu0
        %v1462 = vadd.f32 %v1268, %v1461
        %1463 = vmatmul.f32.gmra.mxu0 %v1180
        %v1464 = vpop.f32.mrf.mxu0
        %v1465 = vadd.f32 %v1268, %v1464
        %1466 = vmatmul.f32.gmra.mxu0 %v1181
        %v1467 = vpop.f32.mrf.mxu0
        %v1468 = vadd.f32 %v1268, %v1467
        %1469 = vmatmul.f32.gmra.mxu0 %v1182
        %v1470 = vpop.f32.mrf.mxu0
        %v1471 = vadd.f32 %v1268, %v1470
        %1472 = vmatmul.f32.gmra.mxu0 %v1183
        %v1473 = vpop.f32.mrf.mxu0
        %v1474 = vadd.f32 %v1268, %v1473
        %1475 = vmatmul.f32.gmra.mxu0 %v1184
        %v1476 = vpop.f32.mrf.mxu0
        %v1477 = vadd.f32 %v1268, %v1476
        %1478 = vmatmul.f32.gmra.mxu0 %v1185
        %v1479 = vpop.f32.mrf.mxu0
        %v1480 = vadd.f32 %v1268, %v1479
        %1481 = vmatmul.f32.gmra.mxu0 %v1186
        %v1482 = vpop.f32.mrf.mxu0
        %v1483 = vadd.f32 %v1268, %v1482
        %1484 = vmatmul.f32.gmra.mxu0 %v1187
        %v1485 = vpop.f32.mrf.mxu0
        %v1486 = vadd.f32 %v1268, %v1485
        %1487 = vmatmul.f32.gmra.mxu0 %v1188
        %v1488 = vpop.f32.mrf.mxu0
        %v1489 = vadd.f32 %v1268, %v1488
        %1490 = vmatmul.f32.gmra.mxu0 %v1189
        %v1491 = vpop.f32.mrf.mxu0
        %v1492 = vadd.f32 %v1268, %v1491
        %1493 = vmatmul.f32.gmra.mxu0 %v1190
        %v1494 = vpop.f32.mrf.mxu0
        %v1495 = vadd.f32 %v1268, %v1494
        %1496 = vmatmul.f32.gmra.mxu0 %v1191
        %v1497 = vpop.f32.mrf.mxu0
        %v1498 = vadd.f32 %v1268, %v1497
        %1499 = vmatmul.f32.gmra.mxu0 %v1192
        %v1500 = vpop.f32.mrf.mxu0
        %v1501 = vadd.f32 %v1268, %v1500
        %1502 = vmatmul.f32.gmra.mxu0 %v1193
        %v1503 = vpop.f32.mrf.mxu0
        %v1504 = vadd.f32 %v1268, %v1503
        %1505 = vmatmul.f32.gmra.mxu0 %v1194
        %v1506 = vpop.f32.mrf.mxu0
        %v1507 = vadd.f32 %v1268, %v1506
        %1508 = vmatmul.f32.gmra.mxu0 %v1195
        %v1509 = vpop.f32.mrf.mxu0
        %v1510 = vadd.f32 %v1268, %v1509
        %1511 = vmatmul.f32.gmra.mxu0 %v1196
        %v1512 = vpop.f32.mrf.mxu0
        %v1513 = vadd.f32 %v1268, %v1512
        %1514 = vmatmul.f32.gmra.mxu0 %v1197
        %v1515 = vpop.f32.mrf.mxu0
        %v1516 = vadd.f32 %v1268, %v1515
        %1517 = vmatmul.f32.gmra.mxu0 %v1198
        %v1518 = vpop.f32.mrf.mxu0
        %v1519 = vadd.f32 %v1268, %v1518
        %1520 = vmatmul.f32.gmra.mxu0 %v1199
        %v1521 = vpop.f32.mrf.mxu0
        %v1522 = vadd.f32 %v1268, %v1521
        %1523 = vmatmul.f32.gmra.mxu0 %v1200
        %v1524 = vpop.f32.mrf.mxu0
        %v1525 = vadd.f32 %v1268, %v1524
        %1526 = vmatmul.f32.gmra.mxu0 %v1201
        %v1527 = vpop.f32.mrf.mxu0
        %v1528 = vadd.f32 %v1268, %v1527
        %1529 = vmatmul.f32.gmra.mxu0 %v1202
        %v1530 = vpop.f32.mrf.mxu0
        %v1531 = vadd.f32 %v1268, %v1530
        %1532 = vmatmul.f32.gmra.mxu0 %v1203
        %v1533 = vpop.f32.mrf.mxu0
        %v1534 = vadd.f32 %v1268, %v1533
        %1535 = vmatmul.f32.gmra.mxu0 %v1204
        %v1536 = vpop.f32.mrf.mxu0
        %v1537 = vadd.f32 %v1268, %v1536
        %1538 = vmatmul.f32.gmra.mxu0 %v1205
        %v1539 = vpop.f32.mrf.mxu0
        %v1540 = vadd.f32 %v1268, %v1539
        %1541 = vmatmul.f32.gmra.mxu0 %v1206
        %v1542 = vpop.f32.mrf.mxu0
        %v1543 = vadd.f32 %v1268, %v1542
        %1544 = vmatmul.f32.gmra.mxu0 %v1207
        %v1545 = vpop.f32.mrf.mxu0
        %v1546 = vadd.f32 %v1268, %v1545
        %1547 = vmatmul.f32.gmra.mxu0 %v1208
        %v1548 = vpop.f32.mrf.mxu0
        %v1549 = vadd.f32 %v1268, %v1548
        %1550 = vmatmul.f32.gmra.mxu0 %v1209
        %v1551 = vpop.f32.mrf.mxu0
        %v1552 = vadd.f32 %v1268, %v1551
        %1553 = vmatmul.f32.gmra.mxu0 %v1210
        %v1554 = vpop.f32.mrf.mxu0
        %v1555 = vadd.f32 %v1268, %v1554
        %1556 = vmatmul.f32.gmra.mxu0 %v1211
        %v1557 = vpop.f32.mrf.mxu0
        %v1558 = vadd.f32 %v1268, %v1557
        %1559 = vmatmul.f32.gmra.mxu0 %v1212
        %v1560 = vpop.f32.mrf.mxu0
        %v1561 = vadd.f32 %v1268, %v1560
        %1562 = vmatmul.f32.gmra.mxu0 %v1213
        %v1563 = vpop.f32.mrf.mxu0
        %v1564 = vadd.f32 %v1268, %v1563
        %1565 = vmatmul.f32.gmra.mxu0 %v1214
        %v1566 = vpop.f32.mrf.mxu0
        %v1567 = vadd.f32 %v1268, %v1566
        %1568 = vmatmul.f32.gmra.mxu0 %v1215
        %v1569 = vpop.f32.mrf.mxu0
        %v1570 = vadd.f32 %v1268, %v1569
        %1571 = vmatmul.f32.gmra.mxu0 %v1216
        %v1572 = vpop.f32.mrf.mxu0
        %v1573 = vadd.f32 %v1268, %v1572
        %1574 = vmatmul.f32.gmra.mxu0 %v1217
        %v1575 = vpop.f32.mrf.mxu0
        %v1576 = vadd.f32 %v1268, %v1575
        %1577 = vmatmul.f32.gmra.mxu0 %v1218
        %v1578 = vpop.f32.mrf.mxu0
        %v1579 = vadd.f32 %v1268, %v1578
        %1580 = vmatmul.f32.gmra.mxu0 %v1219
        %v1581 = vpop.f32.mrf.mxu0
        %v1582 = vadd.f32 %v1268, %v1581
        %1583 = vmatmul.f32.gmra.mxu0 %v1220
        %v1584 = vpop.f32.mrf.mxu0
        %v1585 = vadd.f32 %v1268, %v1584
        %1586 = vmatmul.f32.gmra.mxu0 %v1221
        %v1587 = vpop.f32.mrf.mxu0
        %v1588 = vadd.f32 %v1268, %v1587
        %1589 = vmatmul.f32.gmra.mxu0 %v1222
        %v1590 = vpop.f32.mrf.mxu0
        %v1591 = vadd.f32 %v1268, %v1590
        %1592 = vmatmul.f32.gmra.mxu0 %v1223
        %v1593 = vpop.f32.mrf.mxu0
        %v1594 = vadd.f32 %v1268, %v1593
        %1595 = vmatmul.f32.gmra.mxu0 %v1224
        %v1596 = vpop.f32.mrf.mxu0
        %v1597 = vadd.f32 %v1268, %v1596
        %1598 = vmatmul.f32.gmra.mxu0 %v1225
        %v1599 = vpop.f32.mrf.mxu0
        %v1600 = vadd.f32 %v1268, %v1599
        %1601 = vmatmul.f32.gmra.mxu0 %v1226
        %v1602 = vpop.f32.mrf.mxu0
        %v1603 = vadd.f32 %v1268, %v1602
        %1604 = vmatmul.f32.gmra.mxu0 %v1227
        %v1605 = vpop.f32.mrf.mxu0
        %v1606 = vadd.f32 %v1268, %v1605
        %1607 = vmatmul.f32.gmra.mxu0 %v1228
        %v1608 = vpop.f32.mrf.mxu0
        %v1609 = vadd.f32 %v1268, %v1608
        %1610 = vmatmul.f32.gmra.mxu0 %v1229
        %v1611 = vpop.f32.mrf.mxu0
        %v1612 = vadd.f32 %v1268, %v1611
        %1613 = vmatmul.f32.gmra.mxu0 %v1230
        %v1614 = vpop.f32.mrf.mxu0
        %v1615 = vadd.f32 %v1268, %v1614
        %1616 = vmatmul.f32.gmra.mxu0 %v1231
        %v1617 = vpop.f32.mrf.mxu0
        %v1618 = vadd.f32 %v1268, %v1617
        %1619 = vmatmul.f32.gmra.mxu0 %v1232
        %v1620 = vpop.f32.mrf.mxu0
        %v1621 = vadd.f32 %v1268, %v1620
        %1622 = vmatmul.f32.gmra.mxu0 %v1233
        %v1623 = vpop.f32.mrf.mxu0
        %v1624 = vadd.f32 %v1268, %v1623
        %1625 = vmatmul.f32.gmra.mxu0 %v1234
        %v1626 = vpop.f32.mrf.mxu0
        %v1627 = vadd.f32 %v1268, %v1626
        %1628 = vmatmul.f32.gmra.mxu0 %v1235
        %v1629 = vpop.f32.mrf.mxu0
        %v1630 = vadd.f32 %v1268, %v1629
        %1631 = vmatmul.f32.gmra.mxu0 %v1236
        %v1632 = vpop.f32.mrf.mxu0
        %v1633 = vadd.f32 %v1268, %v1632
        %1634 = vmatmul.f32.gmra.mxu0 %v1237
        %v1635 = vpop.f32.mrf.mxu0
        %v1636 = vadd.f32 %v1268, %v1635
        %1637 = vmatmul.f32.gmra.mxu0 %v1238
        %v1638 = vpop.f32.mrf.mxu0
        %v1639 = vadd.f32 %v1268, %v1638
        %1640 = vmatmul.f32.gmra.mxu0 %v1239
        %v1641 = vpop.f32.mrf.mxu0
        %v1642 = vadd.f32 %v1268, %v1641
        %1643 = vmatmul.f32.gmra.mxu0 %v1240
        %v1644 = vpop.f32.mrf.mxu0
        %v1645 = vadd.f32 %v1268, %v1644
        %1646 = vmatmul.f32.gmra.mxu0 %v1241
        %v1647 = vpop.f32.mrf.mxu0
        %v1648 = vadd.f32 %v1268, %v1647
        %1649 = vmatmul.f32.gmra.mxu0 %v1242
        %v1650 = vpop.f32.mrf.mxu0
        %v1651 = vadd.f32 %v1268, %v1650
        %1652 = vmatmul.f32.gmra.mxu0 %v1243
        %v1653 = vpop.f32.mrf.mxu0
        %v1654 = vadd.f32 %v1268, %v1653
        %1655 = vmatmul.f32.gmra.mxu0 %v1244
        %v1656 = vpop.f32.mrf.mxu0
        %v1657 = vadd.f32 %v1268, %v1656
        %1658 = vmatmul.f32.gmra.mxu0 %v1245
        %v1659 = vpop.f32.mrf.mxu0
        %v1660 = vadd.f32 %v1268, %v1659
        %1661 = vmatmul.f32.gmra.mxu0 %v1246
        %v1662 = vpop.f32.mrf.mxu0
        %v1663 = vadd.f32 %v1268, %v1662
        %1664 = vmatmul.f32.gmra.mxu0 %v1247
        %v1665 = vpop.f32.mrf.mxu0
        %v1666 = vadd.f32 %v1268, %v1665
        %1667 = vmatmul.f32.gmra.mxu0 %v1248
        %v1668 = vpop.f32.mrf.mxu0
        %v1669 = vadd.f32 %v1268, %v1668
        %1670 = vdwg.mxu0
        %v1671 = vmax.f32 %v1288, 0.0
        %v1672 = vmax.f32 %v1291, 0.0
        %v1673 = vmax.f32 %v1294, 0.0
        %v1674 = vmax.f32 %v1297, 0.0
        %v1675 = vmax.f32 %v1300, 0.0
        %v1676 = vmax.f32 %v1303, 0.0
        %v1677 = vmax.f32 %v1306, 0.0
        %v1678 = vmax.f32 %v1309, 0.0
        %v1679 = vmax.f32 %v1312, 0.0
        %v1680 = vmax.f32 %v1315, 0.0
        %v1681 = vmax.f32 %v1318, 0.0
        %v1682 = vmax.f32 %v1321, 0.0
        %v1683 = vmax.f32 %v1324, 0.0
        %v1684 = vmax.f32 %v1327, 0.0
        %v1685 = vmax.f32 %v1330, 0.0
        %v1686 = vmax.f32 %v1333, 0.0
        %v1687 = vmax.f32 %v1336, 0.0
        %v1688 = vmax.f32 %v1339, 0.0
        %v1689 = vmax.f32 %v1342, 0.0
        %v1690 = vmax.f32 %v1345, 0.0
        %v1691 = vmax.f32 %v1348, 0.0
        %v1692 = vmax.f32 %v1351, 0.0
        %v1693 = vmax.f32 %v1354, 0.0
        %v1694 = vmax.f32 %v1357, 0.0
        %v1695 = vmax.f32 %v1360, 0.0
        %v1696 = vmax.f32 %v1363, 0.0
        %v1697 = vmax.f32 %v1366, 0.0
        %v1698 = vmax.f32 %v1369, 0.0
        %v1699 = vmax.f32 %v1372, 0.0
        %v1700 = vmax.f32 %v1375, 0.0
        %v1701 = vmax.f32 %v1378, 0.0
        %v1702 = vmax.f32 %v1381, 0.0
        %v1703 = vmax.f32 %v1384, 0.0
        %v1704 = vmax.f32 %v1387, 0.0
        %v1705 = vmax.f32 %v1390, 0.0
        %v1706 = vmax.f32 %v1393, 0.0
        %v1707 = vmax.f32 %v1396, 0.0
        %v1708 = vmax.f32 %v1399, 0.0
        %v1709 = vmax.f32 %v1402, 0.0
        %v1710 = vmax.f32 %v1405, 0.0
        %v1711 = vmax.f32 %v1408, 0.0
        %v1712 = vmax.f32 %v1411, 0.0
        %v1713 = vmax.f32 %v1414, 0.0
        %v1714 = vmax.f32 %v1417, 0.0
        %v1715 = vmax.f32 %v1420, 0.0
        %v1716 = vmax.f32 %v1423, 0.0
        %v1717 = vmax.f32 %v1426, 0.0
        %v1718 = vmax.f32 %v1429, 0.0
        %v1719 = vmax.f32 %v1432, 0.0
        %v1720 = vmax.f32 %v1435, 0.0
        %v1721 = vmax.f32 %v1438, 0.0
        %v1722 = vmax.f32 %v1441, 0.0
        %v1723 = vmax.f32 %v1444, 0.0
        %v1724 = vmax.f32 %v1447, 0.0
        %v1725 = vmax.f32 %v1450, 0.0
        %v1726 = vmax.f32 %v1453, 0.0
        %v1727 = vmax.f32 %v1456, 0.0
        %v1728 = vmax.f32 %v1459, 0.0
        %v1729 = vmax.f32 %v1462, 0.0
        %v1730 = vmax.f32 %v1465, 0.0
        %v1731 = vmax.f32 %v1468, 0.0
        %v1732 = vmax.f32 %v1471, 0.0
        %v1733 = vmax.f32 %v1474, 0.0
        %v1734 = vmax.f32 %v1477, 0.0
        %v1735 = vmax.f32 %v1480, 0.0
        %v1736 = vmax.f32 %v1483, 0.0
        %v1737 = vmax.f32 %v1486, 0.0
        %v1738 = vmax.f32 %v1489, 0.0
        %v1739 = vmax.f32 %v1492, 0.0
        %v1740 = vmax.f32 %v1495, 0.0
        %v1741 = vmax.f32 %v1498, 0.0
        %v1742 = vmax.f32 %v1501, 0.0
        %v1743 = vmax.f32 %v1504, 0.0
        %v1744 = vmax.f32 %v1507, 0.0
        %v1745 = vmax.f32 %v1510, 0.0
        %v1746 = vmax.f32 %v1513, 0.0
        %v1747 = vmax.f32 %v1516, 0.0
        %v1748 = vmax.f32 %v1519, 0.0
        %v1749 = vmax.f32 %v1522, 0.0
        %v1750 = vmax.f32 %v1525, 0.0
        %v1751 = vmax.f32 %v1528, 0.0
        %v1752 = vmax.f32 %v1531, 0.0
        %v1753 = vmax.f32 %v1534, 0.0
        %v1754 = vmax.f32 %v1537, 0.0
        %v1755 = vmax.f32 %v1540, 0.0
        %v1756 = vmax.f32 %v1543, 0.0
        %v1757 = vmax.f32 %v1546, 0.0
        %v1758 = vmax.f32 %v1549, 0.0
        %v1759 = vmax.f32 %v1552, 0.0
        %v1760 = vmax.f32 %v1555, 0.0
        %v1761 = vmax.f32 %v1558, 0.0
        %v1762 = vmax.f32 %v1561, 0.0
        %v1763 = vmax.f32 %v1564, 0.0
        %v1764 = vmax.f32 %v1567, 0.0
        %v1765 = vmax.f32 %v1570, 0.0
        %v1766 = vmax.f32 %v1573, 0.0
        %v1767 = vmax.f32 %v1576, 0.0
        %v1768 = vmax.f32 %v1579, 0.0
        %v1769 = vmax.f32 %v1582, 0.0
        %v1770 = vmax.f32 %v1585, 0.0
        %v1771 = vmax.f32 %v1588, 0.0
        %v1772 = vmax.f32 %v1591, 0.0
        %v1773 = vmax.f32 %v1594, 0.0
        %v1774 = vmax.f32 %v1597, 0.0
        %v1775 = vmax.f32 %v1600, 0.0
        %v1776 = vmax.f32 %v1603, 0.0
        %v1777 = vmax.f32 %v1606, 0.0
        %v1778 = vmax.f32 %v1609, 0.0
        %v1779 = vmax.f32 %v1612, 0.0
        %v1780 = vmax.f32 %v1615, 0.0
        %v1781 = vmax.f32 %v1618, 0.0
        %v1782 = vmax.f32 %v1621, 0.0
        %v1783 = vmax.f32 %v1624, 0.0
        %v1784 = vmax.f32 %v1627, 0.0
        %v1785 = vmax.f32 %v1630, 0.0
        %v1786 = vmax.f32 %v1633, 0.0
        %v1787 = vmax.f32 %v1636, 0.0
        %v1788 = vmax.f32 %v1639, 0.0
        %v1789 = vmax.f32 %v1642, 0.0
        %v1790 = vmax.f32 %v1645, 0.0
        %v1791 = vmax.f32 %v1648, 0.0
        %v1792 = vmax.f32 %v1651, 0.0
        %v1793 = vmax.f32 %v1654, 0.0
        %v1794 = vmax.f32 %v1657, 0.0
        %v1795 = vmax.f32 %v1660, 0.0
        %v1796 = vmax.f32 %v1663, 0.0
        %v1797 = vmax.f32 %v1666, 0.0
        %v1798 = vmax.f32 %v1669, 0.0
        %s1799 = scalar_lea.vmem %s2, 128
        %v1800 = vld [vmem:[%s1799] sm:$0xff]
        %v1801 = vld [vmem:[%s1799 + $0x8] sm:$0xff]
        %v1802 = vld [vmem:[%s1799 + $0x10] sm:$0xff]
        %v1803 = vld [vmem:[%s1799 + $0x18] sm:$0xff]
        %v1804 = vld [vmem:[%s1799 + $0x20] sm:$0xff]
        %v1805 = vld [vmem:[%s1799 + $0x28] sm:$0xff]
        %v1806 = vld [vmem:[%s1799 + $0x30] sm:$0xff]
        %v1807 = vld [vmem:[%s1799 + $0x38] sm:$0xff]
        %v1808 = vld [vmem:[%s1799 + $0x40] sm:$0xff]
        %v1809 = vld [vmem:[%s1799 + $0x48] sm:$0xff]
        %v1810 = vld [vmem:[%s1799 + $0x50] sm:$0xff]
        %v1811 = vld [vmem:[%s1799 + $0x58] sm:$0xff]
        %v1812 = vld [vmem:[%s1799 + $0x60] sm:$0xff]
        %v1813 = vld [vmem:[%s1799 + $0x68] sm:$0xff]
        %v1814 = vld [vmem:[%s1799 + $0x70] sm:$0xff]
        %v1815 = vld [vmem:[%s1799 + $0x78] sm:$0xff]
        %s1816 = scalar_lea.vmem %s3, 2
        %v1817 = vld [vmem:[%s1816] sm:$0x1]
        %v1819 = vperm.slane %v1817, 0
        %1821 = vmatpush.msra.mxu0 %v1815
        %1822 = vmatpush.msra.mxu0 %v1814
        %1823 = vmatpush.msra.mxu0 %v1813
        %1824 = vmatpush.msra.mxu0 %v1812
        %1825 = vmatpush.msra.mxu0 %v1811
        %1826 = vmatpush.msra.mxu0 %v1810
        %1827 = vmatpush.msra.mxu0 %v1809
        %1828 = vmatpush.msra.mxu0 %v1808
        %1829 = vmatpush.msra.mxu0 %v1807
        %1830 = vmatpush.msra.mxu0 %v1806
        %1831 = vmatpush.msra.mxu0 %v1805
        %1832 = vmatpush.msra.mxu0 %v1804
        %1833 = vmatpush.msra.mxu0 %v1803
        %1834 = vmatpush.msra.mxu0 %v1802
        %1835 = vmatpush.msra.mxu0 %v1801
        %1836 = vmatpush.msra.mxu0 %v1800
        %1837 = vmatmul.f32.gmra.mxu0 %v1671
        %v1838 = vpop.f32.mrf.mxu0
        %v1839 = vadd.f32 %v1819, %v1838
        %1840 = vmatmul.f32.gmra.mxu0 %v1672
        %v1841 = vpop.f32.mrf.mxu0
        %v1842 = vadd.f32 %v1819, %v1841
        %1843 = vmatmul.f32.gmra.mxu0 %v1673
        %v1844 = vpop.f32.mrf.mxu0
        %v1845 = vadd.f32 %v1819, %v1844
        %1846 = vmatmul.f32.gmra.mxu0 %v1674
        %v1847 = vpop.f32.mrf.mxu0
        %v1848 = vadd.f32 %v1819, %v1847
        %1849 = vmatmul.f32.gmra.mxu0 %v1675
        %v1850 = vpop.f32.mrf.mxu0
        %v1851 = vadd.f32 %v1819, %v1850
        %1852 = vmatmul.f32.gmra.mxu0 %v1676
        %v1853 = vpop.f32.mrf.mxu0
        %v1854 = vadd.f32 %v1819, %v1853
        %1855 = vmatmul.f32.gmra.mxu0 %v1677
        %v1856 = vpop.f32.mrf.mxu0
        %v1857 = vadd.f32 %v1819, %v1856
        %1858 = vmatmul.f32.gmra.mxu0 %v1678
        %v1859 = vpop.f32.mrf.mxu0
        %v1860 = vadd.f32 %v1819, %v1859
        %1861 = vmatmul.f32.gmra.mxu0 %v1679
        %v1862 = vpop.f32.mrf.mxu0
        %v1863 = vadd.f32 %v1819, %v1862
        %1864 = vmatmul.f32.gmra.mxu0 %v1680
        %v1865 = vpop.f32.mrf.mxu0
        %v1866 = vadd.f32 %v1819, %v1865
        %1867 = vmatmul.f32.gmra.mxu0 %v1681
        %v1868 = vpop.f32.mrf.mxu0
        %v1869 = vadd.f32 %v1819, %v1868
        %1870 = vmatmul.f32.gmra.mxu0 %v1682
        %v1871 = vpop.f32.mrf.mxu0
        %v1872 = vadd.f32 %v1819, %v1871
        %1873 = vmatmul.f32.gmra.mxu0 %v1683
        %v1874 = vpop.f32.mrf.mxu0
        %v1875 = vadd.f32 %v1819, %v1874
        %1876 = vmatmul.f32.gmra.mxu0 %v1684
        %v1877 = vpop.f32.mrf.mxu0
        %v1878 = vadd.f32 %v1819, %v1877
        %1879 = vmatmul.f32.gmra.mxu0 %v1685
        %v1880 = vpop.f32.mrf.mxu0
        %v1881 = vadd.f32 %v1819, %v1880
        %1882 = vmatmul.f32.gmra.mxu0 %v1686
        %v1883 = vpop.f32.mrf.mxu0
        %v1884 = vadd.f32 %v1819, %v1883
        %1885 = vmatmul.f32.gmra.mxu0 %v1687
        %v1886 = vpop.f32.mrf.mxu0
        %v1887 = vadd.f32 %v1819, %v1886
        %1888 = vmatmul.f32.gmra.mxu0 %v1688
        %v1889 = vpop.f32.mrf.mxu0
        %v1890 = vadd.f32 %v1819, %v1889
        %1891 = vmatmul.f32.gmra.mxu0 %v1689
        %v1892 = vpop.f32.mrf.mxu0
        %v1893 = vadd.f32 %v1819, %v1892
        %1894 = vmatmul.f32.gmra.mxu0 %v1690
        %v1895 = vpop.f32.mrf.mxu0
        %v1896 = vadd.f32 %v1819, %v1895
        %1897 = vmatmul.f32.gmra.mxu0 %v1691
        %v1898 = vpop.f32.mrf.mxu0
        %v1899 = vadd.f32 %v1819, %v1898
        %1900 = vmatmul.f32.gmra.mxu0 %v1692
        %v1901 = vpop.f32.mrf.mxu0
        %v1902 = vadd.f32 %v1819, %v1901
        %1903 = vmatmul.f32.gmra.mxu0 %v1693
        %v1904 = vpop.f32.mrf.mxu0
        %v1905 = vadd.f32 %v1819, %v1904
        %1906 = vmatmul.f32.gmra.mxu0 %v1694
        %v1907 = vpop.f32.mrf.mxu0
        %v1908 = vadd.f32 %v1819, %v1907
        %1909 = vmatmul.f32.gmra.mxu0 %v1695
        %v1910 = vpop.f32.mrf.mxu0
        %v1911 = vadd.f32 %v1819, %v1910
        %1912 = vmatmul.f32.gmra.mxu0 %v1696
        %v1913 = vpop.f32.mrf.mxu0
        %v1914 = vadd.f32 %v1819, %v1913
        %1915 = vmatmul.f32.gmra.mxu0 %v1697
        %v1916 = vpop.f32.mrf.mxu0
        %v1917 = vadd.f32 %v1819, %v1916
        %1918 = vmatmul.f32.gmra.mxu0 %v1698
        %v1919 = vpop.f32.mrf.mxu0
        %v1920 = vadd.f32 %v1819, %v1919
        %1921 = vmatmul.f32.gmra.mxu0 %v1699
        %v1922 = vpop.f32.mrf.mxu0
        %v1923 = vadd.f32 %v1819, %v1922
        %1924 = vmatmul.f32.gmra.mxu0 %v1700
        %v1925 = vpop.f32.mrf.mxu0
        %v1926 = vadd.f32 %v1819, %v1925
        %1927 = vmatmul.f32.gmra.mxu0 %v1701
        %v1928 = vpop.f32.mrf.mxu0
        %v1929 = vadd.f32 %v1819, %v1928
        %1930 = vmatmul.f32.gmra.mxu0 %v1702
        %v1931 = vpop.f32.mrf.mxu0
        %v1932 = vadd.f32 %v1819, %v1931
        %1933 = vmatmul.f32.gmra.mxu0 %v1703
        %v1934 = vpop.f32.mrf.mxu0
        %v1935 = vadd.f32 %v1819, %v1934
        %1936 = vmatmul.f32.gmra.mxu0 %v1704
        %v1937 = vpop.f32.mrf.mxu0
        %v1938 = vadd.f32 %v1819, %v1937
        %1939 = vmatmul.f32.gmra.mxu0 %v1705
        %v1940 = vpop.f32.mrf.mxu0
        %v1941 = vadd.f32 %v1819, %v1940
        %1942 = vmatmul.f32.gmra.mxu0 %v1706
        %v1943 = vpop.f32.mrf.mxu0
        %v1944 = vadd.f32 %v1819, %v1943
        %1945 = vmatmul.f32.gmra.mxu0 %v1707
        %v1946 = vpop.f32.mrf.mxu0
        %v1947 = vadd.f32 %v1819, %v1946
        %1948 = vmatmul.f32.gmra.mxu0 %v1708
        %v1949 = vpop.f32.mrf.mxu0
        %v1950 = vadd.f32 %v1819, %v1949
        %1951 = vmatmul.f32.gmra.mxu0 %v1709
        %v1952 = vpop.f32.mrf.mxu0
        %v1953 = vadd.f32 %v1819, %v1952
        %1954 = vmatmul.f32.gmra.mxu0 %v1710
        %v1955 = vpop.f32.mrf.mxu0
        %v1956 = vadd.f32 %v1819, %v1955
        %1957 = vmatmul.f32.gmra.mxu0 %v1711
        %v1958 = vpop.f32.mrf.mxu0
        %v1959 = vadd.f32 %v1819, %v1958
        %1960 = vmatmul.f32.gmra.mxu0 %v1712
        %v1961 = vpop.f32.mrf.mxu0
        %v1962 = vadd.f32 %v1819, %v1961
        %1963 = vmatmul.f32.gmra.mxu0 %v1713
        %v1964 = vpop.f32.mrf.mxu0
        %v1965 = vadd.f32 %v1819, %v1964
        %1966 = vmatmul.f32.gmra.mxu0 %v1714
        %v1967 = vpop.f32.mrf.mxu0
        %v1968 = vadd.f32 %v1819, %v1967
        %1969 = vmatmul.f32.gmra.mxu0 %v1715
        %v1970 = vpop.f32.mrf.mxu0
        %v1971 = vadd.f32 %v1819, %v1970
        %1972 = vmatmul.f32.gmra.mxu0 %v1716
        %v1973 = vpop.f32.mrf.mxu0
        %v1974 = vadd.f32 %v1819, %v1973
        %1975 = vmatmul.f32.gmra.mxu0 %v1717
        %v1976 = vpop.f32.mrf.mxu0
        %v1977 = vadd.f32 %v1819, %v1976
        %1978 = vmatmul.f32.gmra.mxu0 %v1718
        %v1979 = vpop.f32.mrf.mxu0
        %v1980 = vadd.f32 %v1819, %v1979
        %1981 = vmatmul.f32.gmra.mxu0 %v1719
        %v1982 = vpop.f32.mrf.mxu0
        %v1983 = vadd.f32 %v1819, %v1982
        %1984 = vmatmul.f32.gmra.mxu0 %v1720
        %v1985 = vpop.f32.mrf.mxu0
        %v1986 = vadd.f32 %v1819, %v1985
        %1987 = vmatmul.f32.gmra.mxu0 %v1721
        %v1988 = vpop.f32.mrf.mxu0
        %v1989 = vadd.f32 %v1819, %v1988
        %1990 = vmatmul.f32.gmra.mxu0 %v1722
        %v1991 = vpop.f32.mrf.mxu0
        %v1992 = vadd.f32 %v1819, %v1991
        %1993 = vmatmul.f32.gmra.mxu0 %v1723
        %v1994 = vpop.f32.mrf.mxu0
        %v1995 = vadd.f32 %v1819, %v1994
        %1996 = vmatmul.f32.gmra.mxu0 %v1724
        %v1997 = vpop.f32.mrf.mxu0
        %v1998 = vadd.f32 %v1819, %v1997
        %1999 = vmatmul.f32.gmra.mxu0 %v1725
        %v2000 = vpop.f32.mrf.mxu0
        %v2001 = vadd.f32 %v1819, %v2000
        %2002 = vmatmul.f32.gmra.mxu0 %v1726
        %v2003 = vpop.f32.mrf.mxu0
        %v2004 = vadd.f32 %v1819, %v2003
        %2005 = vmatmul.f32.gmra.mxu0 %v1727
        %v2006 = vpop.f32.mrf.mxu0
        %v2007 = vadd.f32 %v1819, %v2006
        %2008 = vmatmul.f32.gmra.mxu0 %v1728
        %v2009 = vpop.f32.mrf.mxu0
        %v2010 = vadd.f32 %v1819, %v2009
        %2011 = vmatmul.f32.gmra.mxu0 %v1729
        %v2012 = vpop.f32.mrf.mxu0
        %v2013 = vadd.f32 %v1819, %v2012
        %2014 = vmatmul.f32.gmra.mxu0 %v1730
        %v2015 = vpop.f32.mrf.mxu0
        %v2016 = vadd.f32 %v1819, %v2015
        %2017 = vmatmul.f32.gmra.mxu0 %v1731
        %v2018 = vpop.f32.mrf.mxu0
        %v2019 = vadd.f32 %v1819, %v2018
        %2020 = vmatmul.f32.gmra.mxu0 %v1732
        %v2021 = vpop.f32.mrf.mxu0
        %v2022 = vadd.f32 %v1819, %v2021
        %2023 = vmatmul.f32.gmra.mxu0 %v1733
        %v2024 = vpop.f32.mrf.mxu0
        %v2025 = vadd.f32 %v1819, %v2024
        %2026 = vmatmul.f32.gmra.mxu0 %v1734
        %v2027 = vpop.f32.mrf.mxu0
        %v2028 = vadd.f32 %v1819, %v2027
        %2029 = vmatmul.f32.gmra.mxu0 %v1735
        %v2030 = vpop.f32.mrf.mxu0
        %v2031 = vadd.f32 %v1819, %v2030
        %2032 = vmatmul.f32.gmra.mxu0 %v1736
        %v2033 = vpop.f32.mrf.mxu0
        %v2034 = vadd.f32 %v1819, %v2033
        %2035 = vmatmul.f32.gmra.mxu0 %v1737
        %v2036 = vpop.f32.mrf.mxu0
        %v2037 = vadd.f32 %v1819, %v2036
        %2038 = vmatmul.f32.gmra.mxu0 %v1738
        %v2039 = vpop.f32.mrf.mxu0
        %v2040 = vadd.f32 %v1819, %v2039
        %2041 = vmatmul.f32.gmra.mxu0 %v1739
        %v2042 = vpop.f32.mrf.mxu0
        %v2043 = vadd.f32 %v1819, %v2042
        %2044 = vmatmul.f32.gmra.mxu0 %v1740
        %v2045 = vpop.f32.mrf.mxu0
        %v2046 = vadd.f32 %v1819, %v2045
        %2047 = vmatmul.f32.gmra.mxu0 %v1741
        %v2048 = vpop.f32.mrf.mxu0
        %v2049 = vadd.f32 %v1819, %v2048
        %2050 = vmatmul.f32.gmra.mxu0 %v1742
        %v2051 = vpop.f32.mrf.mxu0
        %v2052 = vadd.f32 %v1819, %v2051
        %2053 = vmatmul.f32.gmra.mxu0 %v1743
        %v2054 = vpop.f32.mrf.mxu0
        %v2055 = vadd.f32 %v1819, %v2054
        %2056 = vmatmul.f32.gmra.mxu0 %v1744
        %v2057 = vpop.f32.mrf.mxu0
        %v2058 = vadd.f32 %v1819, %v2057
        %2059 = vmatmul.f32.gmra.mxu0 %v1745
        %v2060 = vpop.f32.mrf.mxu0
        %v2061 = vadd.f32 %v1819, %v2060
        %2062 = vmatmul.f32.gmra.mxu0 %v1746
        %v2063 = vpop.f32.mrf.mxu0
        %v2064 = vadd.f32 %v1819, %v2063
        %2065 = vmatmul.f32.gmra.mxu0 %v1747
        %v2066 = vpop.f32.mrf.mxu0
        %v2067 = vadd.f32 %v1819, %v2066
        %2068 = vmatmul.f32.gmra.mxu0 %v1748
        %v2069 = vpop.f32.mrf.mxu0
        %v2070 = vadd.f32 %v1819, %v2069
        %2071 = vmatmul.f32.gmra.mxu0 %v1749
        %v2072 = vpop.f32.mrf.mxu0
        %v2073 = vadd.f32 %v1819, %v2072
        %2074 = vmatmul.f32.gmra.mxu0 %v1750
        %v2075 = vpop.f32.mrf.mxu0
        %v2076 = vadd.f32 %v1819, %v2075
        %2077 = vmatmul.f32.gmra.mxu0 %v1751
        %v2078 = vpop.f32.mrf.mxu0
        %v2079 = vadd.f32 %v1819, %v2078
        %2080 = vmatmul.f32.gmra.mxu0 %v1752
        %v2081 = vpop.f32.mrf.mxu0
        %v2082 = vadd.f32 %v1819, %v2081
        %2083 = vmatmul.f32.gmra.mxu0 %v1753
        %v2084 = vpop.f32.mrf.mxu0
        %v2085 = vadd.f32 %v1819, %v2084
        %2086 = vmatmul.f32.gmra.mxu0 %v1754
        %v2087 = vpop.f32.mrf.mxu0
        %v2088 = vadd.f32 %v1819, %v2087
        %2089 = vmatmul.f32.gmra.mxu0 %v1755
        %v2090 = vpop.f32.mrf.mxu0
        %v2091 = vadd.f32 %v1819, %v2090
        %2092 = vmatmul.f32.gmra.mxu0 %v1756
        %v2093 = vpop.f32.mrf.mxu0
        %v2094 = vadd.f32 %v1819, %v2093
        %2095 = vmatmul.f32.gmra.mxu0 %v1757
        %v2096 = vpop.f32.mrf.mxu0
        %v2097 = vadd.f32 %v1819, %v2096
        %2098 = vmatmul.f32.gmra.mxu0 %v1758
        %v2099 = vpop.f32.mrf.mxu0
        %v2100 = vadd.f32 %v1819, %v2099
        %2101 = vmatmul.f32.gmra.mxu0 %v1759
        %v2102 = vpop.f32.mrf.mxu0
        %v2103 = vadd.f32 %v1819, %v2102
        %2104 = vmatmul.f32.gmra.mxu0 %v1760
        %v2105 = vpop.f32.mrf.mxu0
        %v2106 = vadd.f32 %v1819, %v2105
        %2107 = vmatmul.f32.gmra.mxu0 %v1761
        %v2108 = vpop.f32.mrf.mxu0
        %v2109 = vadd.f32 %v1819, %v2108
        %2110 = vmatmul.f32.gmra.mxu0 %v1762
        %v2111 = vpop.f32.mrf.mxu0
        %v2112 = vadd.f32 %v1819, %v2111
        %2113 = vmatmul.f32.gmra.mxu0 %v1763
        %v2114 = vpop.f32.mrf.mxu0
        %v2115 = vadd.f32 %v1819, %v2114
        %2116 = vmatmul.f32.gmra.mxu0 %v1764
        %v2117 = vpop.f32.mrf.mxu0
        %v2118 = vadd.f32 %v1819, %v2117
        %2119 = vmatmul.f32.gmra.mxu0 %v1765
        %v2120 = vpop.f32.mrf.mxu0
        %v2121 = vadd.f32 %v1819, %v2120
        %2122 = vmatmul.f32.gmra.mxu0 %v1766
        %v2123 = vpop.f32.mrf.mxu0
        %v2124 = vadd.f32 %v1819, %v2123
        %2125 = vmatmul.f32.gmra.mxu0 %v1767
        %v2126 = vpop.f32.mrf.mxu0
        %v2127 = vadd.f32 %v1819, %v2126
        %2128 = vmatmul.f32.gmra.mxu0 %v1768
        %v2129 = vpop.f32.mrf.mxu0
        %v2130 = vadd.f32 %v1819, %v2129
        %2131 = vmatmul.f32.gmra.mxu0 %v1769
        %v2132 = vpop.f32.mrf.mxu0
        %v2133 = vadd.f32 %v1819, %v2132
        %2134 = vmatmul.f32.gmra.mxu0 %v1770
        %v2135 = vpop.f32.mrf.mxu0
        %v2136 = vadd.f32 %v1819, %v2135
        %2137 = vmatmul.f32.gmra.mxu0 %v1771
        %v2138 = vpop.f32.mrf.mxu0
        %v2139 = vadd.f32 %v1819, %v2138
        %2140 = vmatmul.f32.gmra.mxu0 %v1772
        %v2141 = vpop.f32.mrf.mxu0
        %v2142 = vadd.f32 %v1819, %v2141
        %2143 = vmatmul.f32.gmra.mxu0 %v1773
        %v2144 = vpop.f32.mrf.mxu0
        %v2145 = vadd.f32 %v1819, %v2144
        %2146 = vmatmul.f32.gmra.mxu0 %v1774
        %v2147 = vpop.f32.mrf.mxu0
        %v2148 = vadd.f32 %v1819, %v2147
        %2149 = vmatmul.f32.gmra.mxu0 %v1775
        %v2150 = vpop.f32.mrf.mxu0
        %v2151 = vadd.f32 %v1819, %v2150
        %2152 = vmatmul.f32.gmra.mxu0 %v1776
        %v2153 = vpop.f32.mrf.mxu0
        %v2154 = vadd.f32 %v1819, %v2153
        %2155 = vmatmul.f32.gmra.mxu0 %v1777
        %v2156 = vpop.f32.mrf.mxu0
        %v2157 = vadd.f32 %v1819, %v2156
        %2158 = vmatmul.f32.gmra.mxu0 %v1778
        %v2159 = vpop.f32.mrf.mxu0
        %v2160 = vadd.f32 %v1819, %v2159
        %2161 = vmatmul.f32.gmra.mxu0 %v1779
        %v2162 = vpop.f32.mrf.mxu0
        %v2163 = vadd.f32 %v1819, %v2162
        %2164 = vmatmul.f32.gmra.mxu0 %v1780
        %v2165 = vpop.f32.mrf.mxu0
        %v2166 = vadd.f32 %v1819, %v2165
        %2167 = vmatmul.f32.gmra.mxu0 %v1781
        %v2168 = vpop.f32.mrf.mxu0
        %v2169 = vadd.f32 %v1819, %v2168
        %2170 = vmatmul.f32.gmra.mxu0 %v1782
        %v2171 = vpop.f32.mrf.mxu0
        %v2172 = vadd.f32 %v1819, %v2171
        %2173 = vmatmul.f32.gmra.mxu0 %v1783
        %v2174 = vpop.f32.mrf.mxu0
        %v2175 = vadd.f32 %v1819, %v2174
        %2176 = vmatmul.f32.gmra.mxu0 %v1784
        %v2177 = vpop.f32.mrf.mxu0
        %v2178 = vadd.f32 %v1819, %v2177
        %2179 = vmatmul.f32.gmra.mxu0 %v1785
        %v2180 = vpop.f32.mrf.mxu0
        %v2181 = vadd.f32 %v1819, %v2180
        %2182 = vmatmul.f32.gmra.mxu0 %v1786
        %v2183 = vpop.f32.mrf.mxu0
        %v2184 = vadd.f32 %v1819, %v2183
        %2185 = vmatmul.f32.gmra.mxu0 %v1787
        %v2186 = vpop.f32.mrf.mxu0
        %v2187 = vadd.f32 %v1819, %v2186
        %2188 = vmatmul.f32.gmra.mxu0 %v1788
        %v2189 = vpop.f32.mrf.mxu0
        %v2190 = vadd.f32 %v1819, %v2189
        %2191 = vmatmul.f32.gmra.mxu0 %v1789
        %v2192 = vpop.f32.mrf.mxu0
        %v2193 = vadd.f32 %v1819, %v2192
        %2194 = vmatmul.f32.gmra.mxu0 %v1790
        %v2195 = vpop.f32.mrf.mxu0
        %v2196 = vadd.f32 %v1819, %v2195
        %2197 = vmatmul.f32.gmra.mxu0 %v1791
        %v2198 = vpop.f32.mrf.mxu0
        %v2199 = vadd.f32 %v1819, %v2198
        %2200 = vmatmul.f32.gmra.mxu0 %v1792
        %v2201 = vpop.f32.mrf.mxu0
        %v2202 = vadd.f32 %v1819, %v2201
        %2203 = vmatmul.f32.gmra.mxu0 %v1793
        %v2204 = vpop.f32.mrf.mxu0
        %v2205 = vadd.f32 %v1819, %v2204
        %2206 = vmatmul.f32.gmra.mxu0 %v1794
        %v2207 = vpop.f32.mrf.mxu0
        %v2208 = vadd.f32 %v1819, %v2207
        %2209 = vmatmul.f32.gmra.mxu0 %v1795
        %v2210 = vpop.f32.mrf.mxu0
        %v2211 = vadd.f32 %v1819, %v2210
        %2212 = vmatmul.f32.gmra.mxu0 %v1796
        %v2213 = vpop.f32.mrf.mxu0
        %v2214 = vadd.f32 %v1819, %v2213
        %2215 = vmatmul.f32.gmra.mxu0 %v1797
        %v2216 = vpop.f32.mrf.mxu0
        %v2217 = vadd.f32 %v1819, %v2216
        %2218 = vmatmul.f32.gmra.mxu0 %v1798
        %v2219 = vpop.f32.mrf.mxu0
        %v2220 = vadd.f32 %v1819, %v2219
        %2221 = vdwg.mxu0
        %v2222 = vmax.f32 %v1839, 0.0
        %v2223 = vmax.f32 %v1842, 0.0
        %v2224 = vmax.f32 %v1845, 0.0
        %v2225 = vmax.f32 %v1848, 0.0
        %v2226 = vmax.f32 %v1851, 0.0
        %v2227 = vmax.f32 %v1854, 0.0
        %v2228 = vmax.f32 %v1857, 0.0
        %v2229 = vmax.f32 %v1860, 0.0
        %v2230 = vmax.f32 %v1863, 0.0
        %v2231 = vmax.f32 %v1866, 0.0
        %v2232 = vmax.f32 %v1869, 0.0
        %v2233 = vmax.f32 %v1872, 0.0
        %v2234 = vmax.f32 %v1875, 0.0
        %v2235 = vmax.f32 %v1878, 0.0
        %v2236 = vmax.f32 %v1881, 0.0
        %v2237 = vmax.f32 %v1884, 0.0
        %v2238 = vmax.f32 %v1887, 0.0
        %v2239 = vmax.f32 %v1890, 0.0
        %v2240 = vmax.f32 %v1893, 0.0
        %v2241 = vmax.f32 %v1896, 0.0
        %v2242 = vmax.f32 %v1899, 0.0
        %v2243 = vmax.f32 %v1902, 0.0
        %v2244 = vmax.f32 %v1905, 0.0
        %v2245 = vmax.f32 %v1908, 0.0
        %v2246 = vmax.f32 %v1911, 0.0
        %v2247 = vmax.f32 %v1914, 0.0
        %v2248 = vmax.f32 %v1917, 0.0
        %v2249 = vmax.f32 %v1920, 0.0
        %v2250 = vmax.f32 %v1923, 0.0
        %v2251 = vmax.f32 %v1926, 0.0
        %v2252 = vmax.f32 %v1929, 0.0
        %v2253 = vmax.f32 %v1932, 0.0
        %v2254 = vmax.f32 %v1935, 0.0
        %v2255 = vmax.f32 %v1938, 0.0
        %v2256 = vmax.f32 %v1941, 0.0
        %v2257 = vmax.f32 %v1944, 0.0
        %v2258 = vmax.f32 %v1947, 0.0
        %v2259 = vmax.f32 %v1950, 0.0
        %v2260 = vmax.f32 %v1953, 0.0
        %v2261 = vmax.f32 %v1956, 0.0
        %v2262 = vmax.f32 %v1959, 0.0
        %v2263 = vmax.f32 %v1962, 0.0
        %v2264 = vmax.f32 %v1965, 0.0
        %v2265 = vmax.f32 %v1968, 0.0
        %v2266 = vmax.f32 %v1971, 0.0
        %v2267 = vmax.f32 %v1974, 0.0
        %v2268 = vmax.f32 %v1977, 0.0
        %v2269 = vmax.f32 %v1980, 0.0
        %v2270 = vmax.f32 %v1983, 0.0
        %v2271 = vmax.f32 %v1986, 0.0
        %v2272 = vmax.f32 %v1989, 0.0
        %v2273 = vmax.f32 %v1992, 0.0
        %v2274 = vmax.f32 %v1995, 0.0
        %v2275 = vmax.f32 %v1998, 0.0
        %v2276 = vmax.f32 %v2001, 0.0
        %v2277 = vmax.f32 %v2004, 0.0
        %v2278 = vmax.f32 %v2007, 0.0
        %v2279 = vmax.f32 %v2010, 0.0
        %v2280 = vmax.f32 %v2013, 0.0
        %v2281 = vmax.f32 %v2016, 0.0
        %v2282 = vmax.f32 %v2019, 0.0
        %v2283 = vmax.f32 %v2022, 0.0
        %v2284 = vmax.f32 %v2025, 0.0
        %v2285 = vmax.f32 %v2028, 0.0
        %v2286 = vmax.f32 %v2031, 0.0
        %v2287 = vmax.f32 %v2034, 0.0
        %v2288 = vmax.f32 %v2037, 0.0
        %v2289 = vmax.f32 %v2040, 0.0
        %v2290 = vmax.f32 %v2043, 0.0
        %v2291 = vmax.f32 %v2046, 0.0
        %v2292 = vmax.f32 %v2049, 0.0
        %v2293 = vmax.f32 %v2052, 0.0
        %v2294 = vmax.f32 %v2055, 0.0
        %v2295 = vmax.f32 %v2058, 0.0
        %v2296 = vmax.f32 %v2061, 0.0
        %v2297 = vmax.f32 %v2064, 0.0
        %v2298 = vmax.f32 %v2067, 0.0
        %v2299 = vmax.f32 %v2070, 0.0
        %v2300 = vmax.f32 %v2073, 0.0
        %v2301 = vmax.f32 %v2076, 0.0
        %v2302 = vmax.f32 %v2079, 0.0
        %v2303 = vmax.f32 %v2082, 0.0
        %v2304 = vmax.f32 %v2085, 0.0
        %v2305 = vmax.f32 %v2088, 0.0
        %v2306 = vmax.f32 %v2091, 0.0
        %v2307 = vmax.f32 %v2094, 0.0
        %v2308 = vmax.f32 %v2097, 0.0
        %v2309 = vmax.f32 %v2100, 0.0
        %v2310 = vmax.f32 %v2103, 0.0
        %v2311 = vmax.f32 %v2106, 0.0
        %v2312 = vmax.f32 %v2109, 0.0
        %v2313 = vmax.f32 %v2112, 0.0
        %v2314 = vmax.f32 %v2115, 0.0
        %v2315 = vmax.f32 %v2118, 0.0
        %v2316 = vmax.f32 %v2121, 0.0
        %v2317 = vmax.f32 %v2124, 0.0
        %v2318 = vmax.f32 %v2127, 0.0
        %v2319 = vmax.f32 %v2130, 0.0
        %v2320 = vmax.f32 %v2133, 0.0
        %v2321 = vmax.f32 %v2136, 0.0
        %v2322 = vmax.f32 %v2139, 0.0
        %v2323 = vmax.f32 %v2142, 0.0
        %v2324 = vmax.f32 %v2145, 0.0
        %v2325 = vmax.f32 %v2148, 0.0
        %v2326 = vmax.f32 %v2151, 0.0
        %v2327 = vmax.f32 %v2154, 0.0
        %v2328 = vmax.f32 %v2157, 0.0
        %v2329 = vmax.f32 %v2160, 0.0
        %v2330 = vmax.f32 %v2163, 0.0
        %v2331 = vmax.f32 %v2166, 0.0
        %v2332 = vmax.f32 %v2169, 0.0
        %v2333 = vmax.f32 %v2172, 0.0
        %v2334 = vmax.f32 %v2175, 0.0
        %v2335 = vmax.f32 %v2178, 0.0
        %v2336 = vmax.f32 %v2181, 0.0
        %v2337 = vmax.f32 %v2184, 0.0
        %v2338 = vmax.f32 %v2187, 0.0
        %v2339 = vmax.f32 %v2190, 0.0
        %v2340 = vmax.f32 %v2193, 0.0
        %v2341 = vmax.f32 %v2196, 0.0
        %v2342 = vmax.f32 %v2199, 0.0
        %v2343 = vmax.f32 %v2202, 0.0
        %v2344 = vmax.f32 %v2205, 0.0
        %v2345 = vmax.f32 %v2208, 0.0
        %v2346 = vmax.f32 %v2211, 0.0
        %v2347 = vmax.f32 %v2214, 0.0
        %v2348 = vmax.f32 %v2217, 0.0
        %v2349 = vmax.f32 %v2220, 0.0
        %s2350 = scalar_lea.vmem %s2, 256
        %v2351 = vld [vmem:[%s2350] sm:$0xff]
        %v2352 = vld [vmem:[%s2350 + $0x8] sm:$0xff]
        %v2353 = vld [vmem:[%s2350 + $0x10] sm:$0xff]
        %v2354 = vld [vmem:[%s2350 + $0x18] sm:$0xff]
        %v2355 = vld [vmem:[%s2350 + $0x20] sm:$0xff]
        %v2356 = vld [vmem:[%s2350 + $0x28] sm:$0xff]
        %v2357 = vld [vmem:[%s2350 + $0x30] sm:$0xff]
        %v2358 = vld [vmem:[%s2350 + $0x38] sm:$0xff]
        %v2359 = vld [vmem:[%s2350 + $0x40] sm:$0xff]
        %v2360 = vld [vmem:[%s2350 + $0x48] sm:$0xff]
        %v2361 = vld [vmem:[%s2350 + $0x50] sm:$0xff]
        %v2362 = vld [vmem:[%s2350 + $0x58] sm:$0xff]
        %v2363 = vld [vmem:[%s2350 + $0x60] sm:$0xff]
        %v2364 = vld [vmem:[%s2350 + $0x68] sm:$0xff]
        %v2365 = vld [vmem:[%s2350 + $0x70] sm:$0xff]
        %v2366 = vld [vmem:[%s2350 + $0x78] sm:$0xff]
        %s2367 = scalar_lea.vmem %s3, 3
        %v2368 = vld [vmem:[%s2367] sm:$0x1]
        %v2370 = vperm.slane %v2368, 0
        %2372 = vmatpush.msra.mxu0 %v2366
        %2373 = vmatpush.msra.mxu0 %v2365
        %2374 = vmatpush.msra.mxu0 %v2364
        %2375 = vmatpush.msra.mxu0 %v2363
        %2376 = vmatpush.msra.mxu0 %v2362
        %2377 = vmatpush.msra.mxu0 %v2361
        %2378 = vmatpush.msra.mxu0 %v2360
        %2379 = vmatpush.msra.mxu0 %v2359
        %2380 = vmatpush.msra.mxu0 %v2358
        %2381 = vmatpush.msra.mxu0 %v2357
        %2382 = vmatpush.msra.mxu0 %v2356
        %2383 = vmatpush.msra.mxu0 %v2355
        %2384 = vmatpush.msra.mxu0 %v2354
        %2385 = vmatpush.msra.mxu0 %v2353
        %2386 = vmatpush.msra.mxu0 %v2352
        %2387 = vmatpush.msra.mxu0 %v2351
        %2388 = vmatmul.f32.gmra.mxu0 %v2222
        %v2389 = vpop.f32.mrf.mxu0
        %v2390 = vadd.f32 %v2370, %v2389
        %2391 = vmatmul.f32.gmra.mxu0 %v2223
        %v2392 = vpop.f32.mrf.mxu0
        %v2393 = vadd.f32 %v2370, %v2392
        %2394 = vmatmul.f32.gmra.mxu0 %v2224
        %v2395 = vpop.f32.mrf.mxu0
        %v2396 = vadd.f32 %v2370, %v2395
        %2397 = vmatmul.f32.gmra.mxu0 %v2225
        %v2398 = vpop.f32.mrf.mxu0
        %v2399 = vadd.f32 %v2370, %v2398
        %2400 = vmatmul.f32.gmra.mxu0 %v2226
        %v2401 = vpop.f32.mrf.mxu0
        %v2402 = vadd.f32 %v2370, %v2401
        %2403 = vmatmul.f32.gmra.mxu0 %v2227
        %v2404 = vpop.f32.mrf.mxu0
        %v2405 = vadd.f32 %v2370, %v2404
        %2406 = vmatmul.f32.gmra.mxu0 %v2228
        %v2407 = vpop.f32.mrf.mxu0
        %v2408 = vadd.f32 %v2370, %v2407
        %2409 = vmatmul.f32.gmra.mxu0 %v2229
        %v2410 = vpop.f32.mrf.mxu0
        %v2411 = vadd.f32 %v2370, %v2410
        %2412 = vmatmul.f32.gmra.mxu0 %v2230
        %v2413 = vpop.f32.mrf.mxu0
        %v2414 = vadd.f32 %v2370, %v2413
        %2415 = vmatmul.f32.gmra.mxu0 %v2231
        %v2416 = vpop.f32.mrf.mxu0
        %v2417 = vadd.f32 %v2370, %v2416
        %2418 = vmatmul.f32.gmra.mxu0 %v2232
        %v2419 = vpop.f32.mrf.mxu0
        %v2420 = vadd.f32 %v2370, %v2419
        %2421 = vmatmul.f32.gmra.mxu0 %v2233
        %v2422 = vpop.f32.mrf.mxu0
        %v2423 = vadd.f32 %v2370, %v2422
        %2424 = vmatmul.f32.gmra.mxu0 %v2234
        %v2425 = vpop.f32.mrf.mxu0
        %v2426 = vadd.f32 %v2370, %v2425
        %2427 = vmatmul.f32.gmra.mxu0 %v2235
        %v2428 = vpop.f32.mrf.mxu0
        %v2429 = vadd.f32 %v2370, %v2428
        %2430 = vmatmul.f32.gmra.mxu0 %v2236
        %v2431 = vpop.f32.mrf.mxu0
        %v2432 = vadd.f32 %v2370, %v2431
        %2433 = vmatmul.f32.gmra.mxu0 %v2237
        %v2434 = vpop.f32.mrf.mxu0
        %v2435 = vadd.f32 %v2370, %v2434
        %2436 = vmatmul.f32.gmra.mxu0 %v2238
        %v2437 = vpop.f32.mrf.mxu0
        %v2438 = vadd.f32 %v2370, %v2437
        %2439 = vmatmul.f32.gmra.mxu0 %v2239
        %v2440 = vpop.f32.mrf.mxu0
        %v2441 = vadd.f32 %v2370, %v2440
        %2442 = vmatmul.f32.gmra.mxu0 %v2240
        %v2443 = vpop.f32.mrf.mxu0
        %v2444 = vadd.f32 %v2370, %v2443
        %2445 = vmatmul.f32.gmra.mxu0 %v2241
        %v2446 = vpop.f32.mrf.mxu0
        %v2447 = vadd.f32 %v2370, %v2446
        %2448 = vmatmul.f32.gmra.mxu0 %v2242
        %v2449 = vpop.f32.mrf.mxu0
        %v2450 = vadd.f32 %v2370, %v2449
        %2451 = vmatmul.f32.gmra.mxu0 %v2243
        %v2452 = vpop.f32.mrf.mxu0
        %v2453 = vadd.f32 %v2370, %v2452
        %2454 = vmatmul.f32.gmra.mxu0 %v2244
        %v2455 = vpop.f32.mrf.mxu0
        %v2456 = vadd.f32 %v2370, %v2455
        %2457 = vmatmul.f32.gmra.mxu0 %v2245
        %v2458 = vpop.f32.mrf.mxu0
        %v2459 = vadd.f32 %v2370, %v2458
        %2460 = vmatmul.f32.gmra.mxu0 %v2246
        %v2461 = vpop.f32.mrf.mxu0
        %v2462 = vadd.f32 %v2370, %v2461
        %2463 = vmatmul.f32.gmra.mxu0 %v2247
        %v2464 = vpop.f32.mrf.mxu0
        %v2465 = vadd.f32 %v2370, %v2464
        %2466 = vmatmul.f32.gmra.mxu0 %v2248
        %v2467 = vpop.f32.mrf.mxu0
        %v2468 = vadd.f32 %v2370, %v2467
        %2469 = vmatmul.f32.gmra.mxu0 %v2249
        %v2470 = vpop.f32.mrf.mxu0
        %v2471 = vadd.f32 %v2370, %v2470
        %2472 = vmatmul.f32.gmra.mxu0 %v2250
        %v2473 = vpop.f32.mrf.mxu0
        %v2474 = vadd.f32 %v2370, %v2473
        %2475 = vmatmul.f32.gmra.mxu0 %v2251
        %v2476 = vpop.f32.mrf.mxu0
        %v2477 = vadd.f32 %v2370, %v2476
        %2478 = vmatmul.f32.gmra.mxu0 %v2252
        %v2479 = vpop.f32.mrf.mxu0
        %v2480 = vadd.f32 %v2370, %v2479
        %2481 = vmatmul.f32.gmra.mxu0 %v2253
        %v2482 = vpop.f32.mrf.mxu0
        %v2483 = vadd.f32 %v2370, %v2482
        %2484 = vmatmul.f32.gmra.mxu0 %v2254
        %v2485 = vpop.f32.mrf.mxu0
        %v2486 = vadd.f32 %v2370, %v2485
        %2487 = vmatmul.f32.gmra.mxu0 %v2255
        %v2488 = vpop.f32.mrf.mxu0
        %v2489 = vadd.f32 %v2370, %v2488
        %2490 = vmatmul.f32.gmra.mxu0 %v2256
        %v2491 = vpop.f32.mrf.mxu0
        %v2492 = vadd.f32 %v2370, %v2491
        %2493 = vmatmul.f32.gmra.mxu0 %v2257
        %v2494 = vpop.f32.mrf.mxu0
        %v2495 = vadd.f32 %v2370, %v2494
        %2496 = vmatmul.f32.gmra.mxu0 %v2258
        %v2497 = vpop.f32.mrf.mxu0
        %v2498 = vadd.f32 %v2370, %v2497
        %2499 = vmatmul.f32.gmra.mxu0 %v2259
        %v2500 = vpop.f32.mrf.mxu0
        %v2501 = vadd.f32 %v2370, %v2500
        %2502 = vmatmul.f32.gmra.mxu0 %v2260
        %v2503 = vpop.f32.mrf.mxu0
        %v2504 = vadd.f32 %v2370, %v2503
        %2505 = vmatmul.f32.gmra.mxu0 %v2261
        %v2506 = vpop.f32.mrf.mxu0
        %v2507 = vadd.f32 %v2370, %v2506
        %2508 = vmatmul.f32.gmra.mxu0 %v2262
        %v2509 = vpop.f32.mrf.mxu0
        %v2510 = vadd.f32 %v2370, %v2509
        %2511 = vmatmul.f32.gmra.mxu0 %v2263
        %v2512 = vpop.f32.mrf.mxu0
        %v2513 = vadd.f32 %v2370, %v2512
        %2514 = vmatmul.f32.gmra.mxu0 %v2264
        %v2515 = vpop.f32.mrf.mxu0
        %v2516 = vadd.f32 %v2370, %v2515
        %2517 = vmatmul.f32.gmra.mxu0 %v2265
        %v2518 = vpop.f32.mrf.mxu0
        %v2519 = vadd.f32 %v2370, %v2518
        %2520 = vmatmul.f32.gmra.mxu0 %v2266
        %v2521 = vpop.f32.mrf.mxu0
        %v2522 = vadd.f32 %v2370, %v2521
        %2523 = vmatmul.f32.gmra.mxu0 %v2267
        %v2524 = vpop.f32.mrf.mxu0
        %v2525 = vadd.f32 %v2370, %v2524
        %2526 = vmatmul.f32.gmra.mxu0 %v2268
        %v2527 = vpop.f32.mrf.mxu0
        %v2528 = vadd.f32 %v2370, %v2527
        %2529 = vmatmul.f32.gmra.mxu0 %v2269
        %v2530 = vpop.f32.mrf.mxu0
        %v2531 = vadd.f32 %v2370, %v2530
        %2532 = vmatmul.f32.gmra.mxu0 %v2270
        %v2533 = vpop.f32.mrf.mxu0
        %v2534 = vadd.f32 %v2370, %v2533
        %2535 = vmatmul.f32.gmra.mxu0 %v2271
        %v2536 = vpop.f32.mrf.mxu0
        %v2537 = vadd.f32 %v2370, %v2536
        %2538 = vmatmul.f32.gmra.mxu0 %v2272
        %v2539 = vpop.f32.mrf.mxu0
        %v2540 = vadd.f32 %v2370, %v2539
        %2541 = vmatmul.f32.gmra.mxu0 %v2273
        %v2542 = vpop.f32.mrf.mxu0
        %v2543 = vadd.f32 %v2370, %v2542
        %2544 = vmatmul.f32.gmra.mxu0 %v2274
        %v2545 = vpop.f32.mrf.mxu0
        %v2546 = vadd.f32 %v2370, %v2545
        %2547 = vmatmul.f32.gmra.mxu0 %v2275
        %v2548 = vpop.f32.mrf.mxu0
        %v2549 = vadd.f32 %v2370, %v2548
        %2550 = vmatmul.f32.gmra.mxu0 %v2276
        %v2551 = vpop.f32.mrf.mxu0
        %v2552 = vadd.f32 %v2370, %v2551
        %2553 = vmatmul.f32.gmra.mxu0 %v2277
        %v2554 = vpop.f32.mrf.mxu0
        %v2555 = vadd.f32 %v2370, %v2554
        %2556 = vmatmul.f32.gmra.mxu0 %v2278
        %v2557 = vpop.f32.mrf.mxu0
        %v2558 = vadd.f32 %v2370, %v2557
        %2559 = vmatmul.f32.gmra.mxu0 %v2279
        %v2560 = vpop.f32.mrf.mxu0
        %v2561 = vadd.f32 %v2370, %v2560
        %2562 = vmatmul.f32.gmra.mxu0 %v2280
        %v2563 = vpop.f32.mrf.mxu0
        %v2564 = vadd.f32 %v2370, %v2563
        %2565 = vmatmul.f32.gmra.mxu0 %v2281
        %v2566 = vpop.f32.mrf.mxu0
        %v2567 = vadd.f32 %v2370, %v2566
        %2568 = vmatmul.f32.gmra.mxu0 %v2282
        %v2569 = vpop.f32.mrf.mxu0
        %v2570 = vadd.f32 %v2370, %v2569
        %2571 = vmatmul.f32.gmra.mxu0 %v2283
        %v2572 = vpop.f32.mrf.mxu0
        %v2573 = vadd.f32 %v2370, %v2572
        %2574 = vmatmul.f32.gmra.mxu0 %v2284
        %v2575 = vpop.f32.mrf.mxu0
        %v2576 = vadd.f32 %v2370, %v2575
        %2577 = vmatmul.f32.gmra.mxu0 %v2285
        %v2578 = vpop.f32.mrf.mxu0
        %v2579 = vadd.f32 %v2370, %v2578
        %2580 = vmatmul.f32.gmra.mxu0 %v2286
        %v2581 = vpop.f32.mrf.mxu0
        %v2582 = vadd.f32 %v2370, %v2581
        %2583 = vmatmul.f32.gmra.mxu0 %v2287
        %v2584 = vpop.f32.mrf.mxu0
        %v2585 = vadd.f32 %v2370, %v2584
        %2586 = vmatmul.f32.gmra.mxu0 %v2288
        %v2587 = vpop.f32.mrf.mxu0
        %v2588 = vadd.f32 %v2370, %v2587
        %2589 = vmatmul.f32.gmra.mxu0 %v2289
        %v2590 = vpop.f32.mrf.mxu0
        %v2591 = vadd.f32 %v2370, %v2590
        %2592 = vmatmul.f32.gmra.mxu0 %v2290
        %v2593 = vpop.f32.mrf.mxu0
        %v2594 = vadd.f32 %v2370, %v2593
        %2595 = vmatmul.f32.gmra.mxu0 %v2291
        %v2596 = vpop.f32.mrf.mxu0
        %v2597 = vadd.f32 %v2370, %v2596
        %2598 = vmatmul.f32.gmra.mxu0 %v2292
        %v2599 = vpop.f32.mrf.mxu0
        %v2600 = vadd.f32 %v2370, %v2599
        %2601 = vmatmul.f32.gmra.mxu0 %v2293
        %v2602 = vpop.f32.mrf.mxu0
        %v2603 = vadd.f32 %v2370, %v2602
        %2604 = vmatmul.f32.gmra.mxu0 %v2294
        %v2605 = vpop.f32.mrf.mxu0
        %v2606 = vadd.f32 %v2370, %v2605
        %2607 = vmatmul.f32.gmra.mxu0 %v2295
        %v2608 = vpop.f32.mrf.mxu0
        %v2609 = vadd.f32 %v2370, %v2608
        %2610 = vmatmul.f32.gmra.mxu0 %v2296
        %v2611 = vpop.f32.mrf.mxu0
        %v2612 = vadd.f32 %v2370, %v2611
        %2613 = vmatmul.f32.gmra.mxu0 %v2297
        %v2614 = vpop.f32.mrf.mxu0
        %v2615 = vadd.f32 %v2370, %v2614
        %2616 = vmatmul.f32.gmra.mxu0 %v2298
        %v2617 = vpop.f32.mrf.mxu0
        %v2618 = vadd.f32 %v2370, %v2617
        %2619 = vmatmul.f32.gmra.mxu0 %v2299
        %v2620 = vpop.f32.mrf.mxu0
        %v2621 = vadd.f32 %v2370, %v2620
        %2622 = vmatmul.f32.gmra.mxu0 %v2300
        %v2623 = vpop.f32.mrf.mxu0
        %v2624 = vadd.f32 %v2370, %v2623
        %2625 = vmatmul.f32.gmra.mxu0 %v2301
        %v2626 = vpop.f32.mrf.mxu0
        %v2627 = vadd.f32 %v2370, %v2626
        %2628 = vmatmul.f32.gmra.mxu0 %v2302
        %v2629 = vpop.f32.mrf.mxu0
        %v2630 = vadd.f32 %v2370, %v2629
        %2631 = vmatmul.f32.gmra.mxu0 %v2303
        %v2632 = vpop.f32.mrf.mxu0
        %v2633 = vadd.f32 %v2370, %v2632
        %2634 = vmatmul.f32.gmra.mxu0 %v2304
        %v2635 = vpop.f32.mrf.mxu0
        %v2636 = vadd.f32 %v2370, %v2635
        %2637 = vmatmul.f32.gmra.mxu0 %v2305
        %v2638 = vpop.f32.mrf.mxu0
        %v2639 = vadd.f32 %v2370, %v2638
        %2640 = vmatmul.f32.gmra.mxu0 %v2306
        %v2641 = vpop.f32.mrf.mxu0
        %v2642 = vadd.f32 %v2370, %v2641
        %2643 = vmatmul.f32.gmra.mxu0 %v2307
        %v2644 = vpop.f32.mrf.mxu0
        %v2645 = vadd.f32 %v2370, %v2644
        %2646 = vmatmul.f32.gmra.mxu0 %v2308
        %v2647 = vpop.f32.mrf.mxu0
        %v2648 = vadd.f32 %v2370, %v2647
        %2649 = vmatmul.f32.gmra.mxu0 %v2309
        %v2650 = vpop.f32.mrf.mxu0
        %v2651 = vadd.f32 %v2370, %v2650
        %2652 = vmatmul.f32.gmra.mxu0 %v2310
        %v2653 = vpop.f32.mrf.mxu0
        %v2654 = vadd.f32 %v2370, %v2653
        %2655 = vmatmul.f32.gmra.mxu0 %v2311
        %v2656 = vpop.f32.mrf.mxu0
        %v2657 = vadd.f32 %v2370, %v2656
        %2658 = vmatmul.f32.gmra.mxu0 %v2312
        %v2659 = vpop.f32.mrf.mxu0
        %v2660 = vadd.f32 %v2370, %v2659
        %2661 = vmatmul.f32.gmra.mxu0 %v2313
        %v2662 = vpop.f32.mrf.mxu0
        %v2663 = vadd.f32 %v2370, %v2662
        %2664 = vmatmul.f32.gmra.mxu0 %v2314
        %v2665 = vpop.f32.mrf.mxu0
        %v2666 = vadd.f32 %v2370, %v2665
        %2667 = vmatmul.f32.gmra.mxu0 %v2315
        %v2668 = vpop.f32.mrf.mxu0
        %v2669 = vadd.f32 %v2370, %v2668
        %2670 = vmatmul.f32.gmra.mxu0 %v2316
        %v2671 = vpop.f32.mrf.mxu0
        %v2672 = vadd.f32 %v2370, %v2671
        %2673 = vmatmul.f32.gmra.mxu0 %v2317
        %v2674 = vpop.f32.mrf.mxu0
        %v2675 = vadd.f32 %v2370, %v2674
        %2676 = vmatmul.f32.gmra.mxu0 %v2318
        %v2677 = vpop.f32.mrf.mxu0
        %v2678 = vadd.f32 %v2370, %v2677
        %2679 = vmatmul.f32.gmra.mxu0 %v2319
        %v2680 = vpop.f32.mrf.mxu0
        %v2681 = vadd.f32 %v2370, %v2680
        %2682 = vmatmul.f32.gmra.mxu0 %v2320
        %v2683 = vpop.f32.mrf.mxu0
        %v2684 = vadd.f32 %v2370, %v2683
        %2685 = vmatmul.f32.gmra.mxu0 %v2321
        %v2686 = vpop.f32.mrf.mxu0
        %v2687 = vadd.f32 %v2370, %v2686
        %2688 = vmatmul.f32.gmra.mxu0 %v2322
        %v2689 = vpop.f32.mrf.mxu0
        %v2690 = vadd.f32 %v2370, %v2689
        %2691 = vmatmul.f32.gmra.mxu0 %v2323
        %v2692 = vpop.f32.mrf.mxu0
        %v2693 = vadd.f32 %v2370, %v2692
        %2694 = vmatmul.f32.gmra.mxu0 %v2324
        %v2695 = vpop.f32.mrf.mxu0
        %v2696 = vadd.f32 %v2370, %v2695
        %2697 = vmatmul.f32.gmra.mxu0 %v2325
        %v2698 = vpop.f32.mrf.mxu0
        %v2699 = vadd.f32 %v2370, %v2698
        %2700 = vmatmul.f32.gmra.mxu0 %v2326
        %v2701 = vpop.f32.mrf.mxu0
        %v2702 = vadd.f32 %v2370, %v2701
        %2703 = vmatmul.f32.gmra.mxu0 %v2327
        %v2704 = vpop.f32.mrf.mxu0
        %v2705 = vadd.f32 %v2370, %v2704
        %2706 = vmatmul.f32.gmra.mxu0 %v2328
        %v2707 = vpop.f32.mrf.mxu0
        %v2708 = vadd.f32 %v2370, %v2707
        %2709 = vmatmul.f32.gmra.mxu0 %v2329
        %v2710 = vpop.f32.mrf.mxu0
        %v2711 = vadd.f32 %v2370, %v2710
        %2712 = vmatmul.f32.gmra.mxu0 %v2330
        %v2713 = vpop.f32.mrf.mxu0
        %v2714 = vadd.f32 %v2370, %v2713
        %2715 = vmatmul.f32.gmra.mxu0 %v2331
        %v2716 = vpop.f32.mrf.mxu0
        %v2717 = vadd.f32 %v2370, %v2716
        %2718 = vmatmul.f32.gmra.mxu0 %v2332
        %v2719 = vpop.f32.mrf.mxu0
        %v2720 = vadd.f32 %v2370, %v2719
        %2721 = vmatmul.f32.gmra.mxu0 %v2333
        %v2722 = vpop.f32.mrf.mxu0
        %v2723 = vadd.f32 %v2370, %v2722
        %2724 = vmatmul.f32.gmra.mxu0 %v2334
        %v2725 = vpop.f32.mrf.mxu0
        %v2726 = vadd.f32 %v2370, %v2725
        %2727 = vmatmul.f32.gmra.mxu0 %v2335
        %v2728 = vpop.f32.mrf.mxu0
        %v2729 = vadd.f32 %v2370, %v2728
        %2730 = vmatmul.f32.gmra.mxu0 %v2336
        %v2731 = vpop.f32.mrf.mxu0
        %v2732 = vadd.f32 %v2370, %v2731
        %2733 = vmatmul.f32.gmra.mxu0 %v2337
        %v2734 = vpop.f32.mrf.mxu0
        %v2735 = vadd.f32 %v2370, %v2734
        %2736 = vmatmul.f32.gmra.mxu0 %v2338
        %v2737 = vpop.f32.mrf.mxu0
        %v2738 = vadd.f32 %v2370, %v2737
        %2739 = vmatmul.f32.gmra.mxu0 %v2339
        %v2740 = vpop.f32.mrf.mxu0
        %v2741 = vadd.f32 %v2370, %v2740
        %2742 = vmatmul.f32.gmra.mxu0 %v2340
        %v2743 = vpop.f32.mrf.mxu0
        %v2744 = vadd.f32 %v2370, %v2743
        %2745 = vmatmul.f32.gmra.mxu0 %v2341
        %v2746 = vpop.f32.mrf.mxu0
        %v2747 = vadd.f32 %v2370, %v2746
        %2748 = vmatmul.f32.gmra.mxu0 %v2342
        %v2749 = vpop.f32.mrf.mxu0
        %v2750 = vadd.f32 %v2370, %v2749
        %2751 = vmatmul.f32.gmra.mxu0 %v2343
        %v2752 = vpop.f32.mrf.mxu0
        %v2753 = vadd.f32 %v2370, %v2752
        %2754 = vmatmul.f32.gmra.mxu0 %v2344
        %v2755 = vpop.f32.mrf.mxu0
        %v2756 = vadd.f32 %v2370, %v2755
        %2757 = vmatmul.f32.gmra.mxu0 %v2345
        %v2758 = vpop.f32.mrf.mxu0
        %v2759 = vadd.f32 %v2370, %v2758
        %2760 = vmatmul.f32.gmra.mxu0 %v2346
        %v2761 = vpop.f32.mrf.mxu0
        %v2762 = vadd.f32 %v2370, %v2761
        %2763 = vmatmul.f32.gmra.mxu0 %v2347
        %v2764 = vpop.f32.mrf.mxu0
        %v2765 = vadd.f32 %v2370, %v2764
        %2766 = vmatmul.f32.gmra.mxu0 %v2348
        %v2767 = vpop.f32.mrf.mxu0
        %v2768 = vadd.f32 %v2370, %v2767
        %2769 = vmatmul.f32.gmra.mxu0 %v2349
        %v2770 = vpop.f32.mrf.mxu0
        %v2771 = vadd.f32 %v2370, %v2770
        %2772 = vdwg.mxu0
        %v2773 = vmax.f32 %v2390, 0.0
        %v2774 = vmax.f32 %v2393, 0.0
        %v2775 = vmax.f32 %v2396, 0.0
        %v2776 = vmax.f32 %v2399, 0.0
        %v2777 = vmax.f32 %v2402, 0.0
        %v2778 = vmax.f32 %v2405, 0.0
        %v2779 = vmax.f32 %v2408, 0.0
        %v2780 = vmax.f32 %v2411, 0.0
        %v2781 = vmax.f32 %v2414, 0.0
        %v2782 = vmax.f32 %v2417, 0.0
        %v2783 = vmax.f32 %v2420, 0.0
        %v2784 = vmax.f32 %v2423, 0.0
        %v2785 = vmax.f32 %v2426, 0.0
        %v2786 = vmax.f32 %v2429, 0.0
        %v2787 = vmax.f32 %v2432, 0.0
        %v2788 = vmax.f32 %v2435, 0.0
        %v2789 = vmax.f32 %v2438, 0.0
        %v2790 = vmax.f32 %v2441, 0.0
        %v2791 = vmax.f32 %v2444, 0.0
        %v2792 = vmax.f32 %v2447, 0.0
        %v2793 = vmax.f32 %v2450, 0.0
        %v2794 = vmax.f32 %v2453, 0.0
        %v2795 = vmax.f32 %v2456, 0.0
        %v2796 = vmax.f32 %v2459, 0.0
        %v2797 = vmax.f32 %v2462, 0.0
        %v2798 = vmax.f32 %v2465, 0.0
        %v2799 = vmax.f32 %v2468, 0.0
        %v2800 = vmax.f32 %v2471, 0.0
        %v2801 = vmax.f32 %v2474, 0.0
        %v2802 = vmax.f32 %v2477, 0.0
        %v2803 = vmax.f32 %v2480, 0.0
        %v2804 = vmax.f32 %v2483, 0.0
        %v2805 = vmax.f32 %v2486, 0.0
        %v2806 = vmax.f32 %v2489, 0.0
        %v2807 = vmax.f32 %v2492, 0.0
        %v2808 = vmax.f32 %v2495, 0.0
        %v2809 = vmax.f32 %v2498, 0.0
        %v2810 = vmax.f32 %v2501, 0.0
        %v2811 = vmax.f32 %v2504, 0.0
        %v2812 = vmax.f32 %v2507, 0.0
        %v2813 = vmax.f32 %v2510, 0.0
        %v2814 = vmax.f32 %v2513, 0.0
        %v2815 = vmax.f32 %v2516, 0.0
        %v2816 = vmax.f32 %v2519, 0.0
        %v2817 = vmax.f32 %v2522, 0.0
        %v2818 = vmax.f32 %v2525, 0.0
        %v2819 = vmax.f32 %v2528, 0.0
        %v2820 = vmax.f32 %v2531, 0.0
        %v2821 = vmax.f32 %v2534, 0.0
        %v2822 = vmax.f32 %v2537, 0.0
        %v2823 = vmax.f32 %v2540, 0.0
        %v2824 = vmax.f32 %v2543, 0.0
        %v2825 = vmax.f32 %v2546, 0.0
        %v2826 = vmax.f32 %v2549, 0.0
        %v2827 = vmax.f32 %v2552, 0.0
        %v2828 = vmax.f32 %v2555, 0.0
        %v2829 = vmax.f32 %v2558, 0.0
        %v2830 = vmax.f32 %v2561, 0.0
        %v2831 = vmax.f32 %v2564, 0.0
        %v2832 = vmax.f32 %v2567, 0.0
        %v2833 = vmax.f32 %v2570, 0.0
        %v2834 = vmax.f32 %v2573, 0.0
        %v2835 = vmax.f32 %v2576, 0.0
        %v2836 = vmax.f32 %v2579, 0.0
        %v2837 = vmax.f32 %v2582, 0.0
        %v2838 = vmax.f32 %v2585, 0.0
        %v2839 = vmax.f32 %v2588, 0.0
        %v2840 = vmax.f32 %v2591, 0.0
        %v2841 = vmax.f32 %v2594, 0.0
        %v2842 = vmax.f32 %v2597, 0.0
        %v2843 = vmax.f32 %v2600, 0.0
        %v2844 = vmax.f32 %v2603, 0.0
        %v2845 = vmax.f32 %v2606, 0.0
        %v2846 = vmax.f32 %v2609, 0.0
        %v2847 = vmax.f32 %v2612, 0.0
        %v2848 = vmax.f32 %v2615, 0.0
        %v2849 = vmax.f32 %v2618, 0.0
        %v2850 = vmax.f32 %v2621, 0.0
        %v2851 = vmax.f32 %v2624, 0.0
        %v2852 = vmax.f32 %v2627, 0.0
        %v2853 = vmax.f32 %v2630, 0.0
        %v2854 = vmax.f32 %v2633, 0.0
        %v2855 = vmax.f32 %v2636, 0.0
        %v2856 = vmax.f32 %v2639, 0.0
        %v2857 = vmax.f32 %v2642, 0.0
        %v2858 = vmax.f32 %v2645, 0.0
        %v2859 = vmax.f32 %v2648, 0.0
        %v2860 = vmax.f32 %v2651, 0.0
        %v2861 = vmax.f32 %v2654, 0.0
        %v2862 = vmax.f32 %v2657, 0.0
        %v2863 = vmax.f32 %v2660, 0.0
        %v2864 = vmax.f32 %v2663, 0.0
        %v2865 = vmax.f32 %v2666, 0.0
        %v2866 = vmax.f32 %v2669, 0.0
        %v2867 = vmax.f32 %v2672, 0.0
        %v2868 = vmax.f32 %v2675, 0.0
        %v2869 = vmax.f32 %v2678, 0.0
        %v2870 = vmax.f32 %v2681, 0.0
        %v2871 = vmax.f32 %v2684, 0.0
        %v2872 = vmax.f32 %v2687, 0.0
        %v2873 = vmax.f32 %v2690, 0.0
        %v2874 = vmax.f32 %v2693, 0.0
        %v2875 = vmax.f32 %v2696, 0.0
        %v2876 = vmax.f32 %v2699, 0.0
        %v2877 = vmax.f32 %v2702, 0.0
        %v2878 = vmax.f32 %v2705, 0.0
        %v2879 = vmax.f32 %v2708, 0.0
        %v2880 = vmax.f32 %v2711, 0.0
        %v2881 = vmax.f32 %v2714, 0.0
        %v2882 = vmax.f32 %v2717, 0.0
        %v2883 = vmax.f32 %v2720, 0.0
        %v2884 = vmax.f32 %v2723, 0.0
        %v2885 = vmax.f32 %v2726, 0.0
        %v2886 = vmax.f32 %v2729, 0.0
        %v2887 = vmax.f32 %v2732, 0.0
        %v2888 = vmax.f32 %v2735, 0.0
        %v2889 = vmax.f32 %v2738, 0.0
        %v2890 = vmax.f32 %v2741, 0.0
        %v2891 = vmax.f32 %v2744, 0.0
        %v2892 = vmax.f32 %v2747, 0.0
        %v2893 = vmax.f32 %v2750, 0.0
        %v2894 = vmax.f32 %v2753, 0.0
        %v2895 = vmax.f32 %v2756, 0.0
        %v2896 = vmax.f32 %v2759, 0.0
        %v2897 = vmax.f32 %v2762, 0.0
        %v2898 = vmax.f32 %v2765, 0.0
        %v2899 = vmax.f32 %v2768, 0.0
        %v2900 = vmax.f32 %v2771, 0.0
        %s2901 = scalar_lea.vmem %s2, 384
        %v2902 = vld [vmem:[%s2901] sm:$0xff]
        %v2903 = vld [vmem:[%s2901 + $0x8] sm:$0xff]
        %v2904 = vld [vmem:[%s2901 + $0x10] sm:$0xff]
        %v2905 = vld [vmem:[%s2901 + $0x18] sm:$0xff]
        %v2906 = vld [vmem:[%s2901 + $0x20] sm:$0xff]
        %v2907 = vld [vmem:[%s2901 + $0x28] sm:$0xff]
        %v2908 = vld [vmem:[%s2901 + $0x30] sm:$0xff]
        %v2909 = vld [vmem:[%s2901 + $0x38] sm:$0xff]
        %v2910 = vld [vmem:[%s2901 + $0x40] sm:$0xff]
        %v2911 = vld [vmem:[%s2901 + $0x48] sm:$0xff]
        %v2912 = vld [vmem:[%s2901 + $0x50] sm:$0xff]
        %v2913 = vld [vmem:[%s2901 + $0x58] sm:$0xff]
        %v2914 = vld [vmem:[%s2901 + $0x60] sm:$0xff]
        %v2915 = vld [vmem:[%s2901 + $0x68] sm:$0xff]
        %v2916 = vld [vmem:[%s2901 + $0x70] sm:$0xff]
        %v2917 = vld [vmem:[%s2901 + $0x78] sm:$0xff]
        %s2918 = scalar_lea.vmem %s3, 4
        %v2919 = vld [vmem:[%s2918] sm:$0x1]
        %v2921 = vperm.slane %v2919, 0
        %2923 = vmatpush.msra.mxu0 %v2917
        %2924 = vmatpush.msra.mxu0 %v2916
        %2925 = vmatpush.msra.mxu0 %v2915
        %2926 = vmatpush.msra.mxu0 %v2914
        %2927 = vmatpush.msra.mxu0 %v2913
        %2928 = vmatpush.msra.mxu0 %v2912
        %2929 = vmatpush.msra.mxu0 %v2911
        %2930 = vmatpush.msra.mxu0 %v2910
        %2931 = vmatpush.msra.mxu0 %v2909
        %2932 = vmatpush.msra.mxu0 %v2908
        %2933 = vmatpush.msra.mxu0 %v2907
        %2934 = vmatpush.msra.mxu0 %v2906
        %2935 = vmatpush.msra.mxu0 %v2905
        %2936 = vmatpush.msra.mxu0 %v2904
        %2937 = vmatpush.msra.mxu0 %v2903
        %2938 = vmatpush.msra.mxu0 %v2902
        %2939 = vmatmul.f32.gmra.mxu0 %v2773
        %v2940 = vpop.f32.mrf.mxu0
        %v2941 = vadd.f32 %v2921, %v2940
        %2942 = vmatmul.f32.gmra.mxu0 %v2774
        %v2943 = vpop.f32.mrf.mxu0
        %v2944 = vadd.f32 %v2921, %v2943
        %2945 = vmatmul.f32.gmra.mxu0 %v2775
        %v2946 = vpop.f32.mrf.mxu0
        %v2947 = vadd.f32 %v2921, %v2946
        %2948 = vmatmul.f32.gmra.mxu0 %v2776
        %v2949 = vpop.f32.mrf.mxu0
        %v2950 = vadd.f32 %v2921, %v2949
        %2951 = vmatmul.f32.gmra.mxu0 %v2777
        %v2952 = vpop.f32.mrf.mxu0
        %v2953 = vadd.f32 %v2921, %v2952
        %2954 = vmatmul.f32.gmra.mxu0 %v2778
        %v2955 = vpop.f32.mrf.mxu0
        %v2956 = vadd.f32 %v2921, %v2955
        %2957 = vmatmul.f32.gmra.mxu0 %v2779
        %v2958 = vpop.f32.mrf.mxu0
        %v2959 = vadd.f32 %v2921, %v2958
        %2960 = vmatmul.f32.gmra.mxu0 %v2780
        %v2961 = vpop.f32.mrf.mxu0
        %v2962 = vadd.f32 %v2921, %v2961
        %2963 = vmatmul.f32.gmra.mxu0 %v2781
        %v2964 = vpop.f32.mrf.mxu0
        %v2965 = vadd.f32 %v2921, %v2964
        %2966 = vmatmul.f32.gmra.mxu0 %v2782
        %v2967 = vpop.f32.mrf.mxu0
        %v2968 = vadd.f32 %v2921, %v2967
        %2969 = vmatmul.f32.gmra.mxu0 %v2783
        %v2970 = vpop.f32.mrf.mxu0
        %v2971 = vadd.f32 %v2921, %v2970
        %2972 = vmatmul.f32.gmra.mxu0 %v2784
        %v2973 = vpop.f32.mrf.mxu0
        %v2974 = vadd.f32 %v2921, %v2973
        %2975 = vmatmul.f32.gmra.mxu0 %v2785
        %v2976 = vpop.f32.mrf.mxu0
        %v2977 = vadd.f32 %v2921, %v2976
        %2978 = vmatmul.f32.gmra.mxu0 %v2786
        %v2979 = vpop.f32.mrf.mxu0
        %v2980 = vadd.f32 %v2921, %v2979
        %2981 = vmatmul.f32.gmra.mxu0 %v2787
        %v2982 = vpop.f32.mrf.mxu0
        %v2983 = vadd.f32 %v2921, %v2982
        %2984 = vmatmul.f32.gmra.mxu0 %v2788
        %v2985 = vpop.f32.mrf.mxu0
        %v2986 = vadd.f32 %v2921, %v2985
        %2987 = vmatmul.f32.gmra.mxu0 %v2789
        %v2988 = vpop.f32.mrf.mxu0
        %v2989 = vadd.f32 %v2921, %v2988
        %2990 = vmatmul.f32.gmra.mxu0 %v2790
        %v2991 = vpop.f32.mrf.mxu0
        %v2992 = vadd.f32 %v2921, %v2991
        %2993 = vmatmul.f32.gmra.mxu0 %v2791
        %v2994 = vpop.f32.mrf.mxu0
        %v2995 = vadd.f32 %v2921, %v2994
        %2996 = vmatmul.f32.gmra.mxu0 %v2792
        %v2997 = vpop.f32.mrf.mxu0
        %v2998 = vadd.f32 %v2921, %v2997
        %2999 = vmatmul.f32.gmra.mxu0 %v2793
        %v3000 = vpop.f32.mrf.mxu0
        %v3001 = vadd.f32 %v2921, %v3000
        %3002 = vmatmul.f32.gmra.mxu0 %v2794
        %v3003 = vpop.f32.mrf.mxu0
        %v3004 = vadd.f32 %v2921, %v3003
        %3005 = vmatmul.f32.gmra.mxu0 %v2795
        %v3006 = vpop.f32.mrf.mxu0
        %v3007 = vadd.f32 %v2921, %v3006
        %3008 = vmatmul.f32.gmra.mxu0 %v2796
        %v3009 = vpop.f32.mrf.mxu0
        %v3010 = vadd.f32 %v2921, %v3009
        %3011 = vmatmul.f32.gmra.mxu0 %v2797
        %v3012 = vpop.f32.mrf.mxu0
        %v3013 = vadd.f32 %v2921, %v3012
        %3014 = vmatmul.f32.gmra.mxu0 %v2798
        %v3015 = vpop.f32.mrf.mxu0
        %v3016 = vadd.f32 %v2921, %v3015
        %3017 = vmatmul.f32.gmra.mxu0 %v2799
        %v3018 = vpop.f32.mrf.mxu0
        %v3019 = vadd.f32 %v2921, %v3018
        %3020 = vmatmul.f32.gmra.mxu0 %v2800
        %v3021 = vpop.f32.mrf.mxu0
        %v3022 = vadd.f32 %v2921, %v3021
        %3023 = vmatmul.f32.gmra.mxu0 %v2801
        %v3024 = vpop.f32.mrf.mxu0
        %v3025 = vadd.f32 %v2921, %v3024
        %3026 = vmatmul.f32.gmra.mxu0 %v2802
        %v3027 = vpop.f32.mrf.mxu0
        %v3028 = vadd.f32 %v2921, %v3027
        %3029 = vmatmul.f32.gmra.mxu0 %v2803
        %v3030 = vpop.f32.mrf.mxu0
        %v3031 = vadd.f32 %v2921, %v3030
        %3032 = vmatmul.f32.gmra.mxu0 %v2804
        %v3033 = vpop.f32.mrf.mxu0
        %v3034 = vadd.f32 %v2921, %v3033
        %3035 = vmatmul.f32.gmra.mxu0 %v2805
        %v3036 = vpop.f32.mrf.mxu0
        %v3037 = vadd.f32 %v2921, %v3036
        %3038 = vmatmul.f32.gmra.mxu0 %v2806
        %v3039 = vpop.f32.mrf.mxu0
        %v3040 = vadd.f32 %v2921, %v3039
        %3041 = vmatmul.f32.gmra.mxu0 %v2807
        %v3042 = vpop.f32.mrf.mxu0
        %v3043 = vadd.f32 %v2921, %v3042
        %3044 = vmatmul.f32.gmra.mxu0 %v2808
        %v3045 = vpop.f32.mrf.mxu0
        %v3046 = vadd.f32 %v2921, %v3045
        %3047 = vmatmul.f32.gmra.mxu0 %v2809
        %v3048 = vpop.f32.mrf.mxu0
        %v3049 = vadd.f32 %v2921, %v3048
        %3050 = vmatmul.f32.gmra.mxu0 %v2810
        %v3051 = vpop.f32.mrf.mxu0
        %v3052 = vadd.f32 %v2921, %v3051
        %3053 = vmatmul.f32.gmra.mxu0 %v2811
        %v3054 = vpop.f32.mrf.mxu0
        %v3055 = vadd.f32 %v2921, %v3054
        %3056 = vmatmul.f32.gmra.mxu0 %v2812
        %v3057 = vpop.f32.mrf.mxu0
        %v3058 = vadd.f32 %v2921, %v3057
        %3059 = vmatmul.f32.gmra.mxu0 %v2813
        %v3060 = vpop.f32.mrf.mxu0
        %v3061 = vadd.f32 %v2921, %v3060
        %3062 = vmatmul.f32.gmra.mxu0 %v2814
        %v3063 = vpop.f32.mrf.mxu0
        %v3064 = vadd.f32 %v2921, %v3063
        %3065 = vmatmul.f32.gmra.mxu0 %v2815
        %v3066 = vpop.f32.mrf.mxu0
        %v3067 = vadd.f32 %v2921, %v3066
        %3068 = vmatmul.f32.gmra.mxu0 %v2816
        %v3069 = vpop.f32.mrf.mxu0
        %v3070 = vadd.f32 %v2921, %v3069
        %3071 = vmatmul.f32.gmra.mxu0 %v2817
        %v3072 = vpop.f32.mrf.mxu0
        %v3073 = vadd.f32 %v2921, %v3072
        %3074 = vmatmul.f32.gmra.mxu0 %v2818
        %v3075 = vpop.f32.mrf.mxu0
        %v3076 = vadd.f32 %v2921, %v3075
        %3077 = vmatmul.f32.gmra.mxu0 %v2819
        %v3078 = vpop.f32.mrf.mxu0
        %v3079 = vadd.f32 %v2921, %v3078
        %3080 = vmatmul.f32.gmra.mxu0 %v2820
        %v3081 = vpop.f32.mrf.mxu0
        %v3082 = vadd.f32 %v2921, %v3081
        %3083 = vmatmul.f32.gmra.mxu0 %v2821
        %v3084 = vpop.f32.mrf.mxu0
        %v3085 = vadd.f32 %v2921, %v3084
        %3086 = vmatmul.f32.gmra.mxu0 %v2822
        %v3087 = vpop.f32.mrf.mxu0
        %v3088 = vadd.f32 %v2921, %v3087
        %3089 = vmatmul.f32.gmra.mxu0 %v2823
        %v3090 = vpop.f32.mrf.mxu0
        %v3091 = vadd.f32 %v2921, %v3090
        %3092 = vmatmul.f32.gmra.mxu0 %v2824
        %v3093 = vpop.f32.mrf.mxu0
        %v3094 = vadd.f32 %v2921, %v3093
        %3095 = vmatmul.f32.gmra.mxu0 %v2825
        %v3096 = vpop.f32.mrf.mxu0
        %v3097 = vadd.f32 %v2921, %v3096
        %3098 = vmatmul.f32.gmra.mxu0 %v2826
        %v3099 = vpop.f32.mrf.mxu0
        %v3100 = vadd.f32 %v2921, %v3099
        %3101 = vmatmul.f32.gmra.mxu0 %v2827
        %v3102 = vpop.f32.mrf.mxu0
        %v3103 = vadd.f32 %v2921, %v3102
        %3104 = vmatmul.f32.gmra.mxu0 %v2828
        %v3105 = vpop.f32.mrf.mxu0
        %v3106 = vadd.f32 %v2921, %v3105
        %3107 = vmatmul.f32.gmra.mxu0 %v2829
        %v3108 = vpop.f32.mrf.mxu0
        %v3109 = vadd.f32 %v2921, %v3108
        %3110 = vmatmul.f32.gmra.mxu0 %v2830
        %v3111 = vpop.f32.mrf.mxu0
        %v3112 = vadd.f32 %v2921, %v3111
        %3113 = vmatmul.f32.gmra.mxu0 %v2831
        %v3114 = vpop.f32.mrf.mxu0
        %v3115 = vadd.f32 %v2921, %v3114
        %3116 = vmatmul.f32.gmra.mxu0 %v2832
        %v3117 = vpop.f32.mrf.mxu0
        %v3118 = vadd.f32 %v2921, %v3117
        %3119 = vmatmul.f32.gmra.mxu0 %v2833
        %v3120 = vpop.f32.mrf.mxu0
        %v3121 = vadd.f32 %v2921, %v3120
        %3122 = vmatmul.f32.gmra.mxu0 %v2834
        %v3123 = vpop.f32.mrf.mxu0
        %v3124 = vadd.f32 %v2921, %v3123
        %3125 = vmatmul.f32.gmra.mxu0 %v2835
        %v3126 = vpop.f32.mrf.mxu0
        %v3127 = vadd.f32 %v2921, %v3126
        %3128 = vmatmul.f32.gmra.mxu0 %v2836
        %v3129 = vpop.f32.mrf.mxu0
        %v3130 = vadd.f32 %v2921, %v3129
        %3131 = vmatmul.f32.gmra.mxu0 %v2837
        %v3132 = vpop.f32.mrf.mxu0
        %v3133 = vadd.f32 %v2921, %v3132
        %3134 = vmatmul.f32.gmra.mxu0 %v2838
        %v3135 = vpop.f32.mrf.mxu0
        %v3136 = vadd.f32 %v2921, %v3135
        %3137 = vmatmul.f32.gmra.mxu0 %v2839
        %v3138 = vpop.f32.mrf.mxu0
        %v3139 = vadd.f32 %v2921, %v3138
        %3140 = vmatmul.f32.gmra.mxu0 %v2840
        %v3141 = vpop.f32.mrf.mxu0
        %v3142 = vadd.f32 %v2921, %v3141
        %3143 = vmatmul.f32.gmra.mxu0 %v2841
        %v3144 = vpop.f32.mrf.mxu0
        %v3145 = vadd.f32 %v2921, %v3144
        %3146 = vmatmul.f32.gmra.mxu0 %v2842
        %v3147 = vpop.f32.mrf.mxu0
        %v3148 = vadd.f32 %v2921, %v3147
        %3149 = vmatmul.f32.gmra.mxu0 %v2843
        %v3150 = vpop.f32.mrf.mxu0
        %v3151 = vadd.f32 %v2921, %v3150
        %3152 = vmatmul.f32.gmra.mxu0 %v2844
        %v3153 = vpop.f32.mrf.mxu0
        %v3154 = vadd.f32 %v2921, %v3153
        %3155 = vmatmul.f32.gmra.mxu0 %v2845
        %v3156 = vpop.f32.mrf.mxu0
        %v3157 = vadd.f32 %v2921, %v3156
        %3158 = vmatmul.f32.gmra.mxu0 %v2846
        %v3159 = vpop.f32.mrf.mxu0
        %v3160 = vadd.f32 %v2921, %v3159
        %3161 = vmatmul.f32.gmra.mxu0 %v2847
        %v3162 = vpop.f32.mrf.mxu0
        %v3163 = vadd.f32 %v2921, %v3162
        %3164 = vmatmul.f32.gmra.mxu0 %v2848
        %v3165 = vpop.f32.mrf.mxu0
        %v3166 = vadd.f32 %v2921, %v3165
        %3167 = vmatmul.f32.gmra.mxu0 %v2849
        %v3168 = vpop.f32.mrf.mxu0
        %v3169 = vadd.f32 %v2921, %v3168
        %3170 = vmatmul.f32.gmra.mxu0 %v2850
        %v3171 = vpop.f32.mrf.mxu0
        %v3172 = vadd.f32 %v2921, %v3171
        %3173 = vmatmul.f32.gmra.mxu0 %v2851
        %v3174 = vpop.f32.mrf.mxu0
        %v3175 = vadd.f32 %v2921, %v3174
        %3176 = vmatmul.f32.gmra.mxu0 %v2852
        %v3177 = vpop.f32.mrf.mxu0
        %v3178 = vadd.f32 %v2921, %v3177
        %3179 = vmatmul.f32.gmra.mxu0 %v2853
        %v3180 = vpop.f32.mrf.mxu0
        %v3181 = vadd.f32 %v2921, %v3180
        %3182 = vmatmul.f32.gmra.mxu0 %v2854
        %v3183 = vpop.f32.mrf.mxu0
        %v3184 = vadd.f32 %v2921, %v3183
        %3185 = vmatmul.f32.gmra.mxu0 %v2855
        %v3186 = vpop.f32.mrf.mxu0
        %v3187 = vadd.f32 %v2921, %v3186
        %3188 = vmatmul.f32.gmra.mxu0 %v2856
        %v3189 = vpop.f32.mrf.mxu0
        %v3190 = vadd.f32 %v2921, %v3189
        %3191 = vmatmul.f32.gmra.mxu0 %v2857
        %v3192 = vpop.f32.mrf.mxu0
        %v3193 = vadd.f32 %v2921, %v3192
        %3194 = vmatmul.f32.gmra.mxu0 %v2858
        %v3195 = vpop.f32.mrf.mxu0
        %v3196 = vadd.f32 %v2921, %v3195
        %3197 = vmatmul.f32.gmra.mxu0 %v2859
        %v3198 = vpop.f32.mrf.mxu0
        %v3199 = vadd.f32 %v2921, %v3198
        %3200 = vmatmul.f32.gmra.mxu0 %v2860
        %v3201 = vpop.f32.mrf.mxu0
        %v3202 = vadd.f32 %v2921, %v3201
        %3203 = vmatmul.f32.gmra.mxu0 %v2861
        %v3204 = vpop.f32.mrf.mxu0
        %v3205 = vadd.f32 %v2921, %v3204
        %3206 = vmatmul.f32.gmra.mxu0 %v2862
        %v3207 = vpop.f32.mrf.mxu0
        %v3208 = vadd.f32 %v2921, %v3207
        %3209 = vmatmul.f32.gmra.mxu0 %v2863
        %v3210 = vpop.f32.mrf.mxu0
        %v3211 = vadd.f32 %v2921, %v3210
        %3212 = vmatmul.f32.gmra.mxu0 %v2864
        %v3213 = vpop.f32.mrf.mxu0
        %v3214 = vadd.f32 %v2921, %v3213
        %3215 = vmatmul.f32.gmra.mxu0 %v2865
        %v3216 = vpop.f32.mrf.mxu0
        %v3217 = vadd.f32 %v2921, %v3216
        %3218 = vmatmul.f32.gmra.mxu0 %v2866
        %v3219 = vpop.f32.mrf.mxu0
        %v3220 = vadd.f32 %v2921, %v3219
        %3221 = vmatmul.f32.gmra.mxu0 %v2867
        %v3222 = vpop.f32.mrf.mxu0
        %v3223 = vadd.f32 %v2921, %v3222
        %3224 = vmatmul.f32.gmra.mxu0 %v2868
        %v3225 = vpop.f32.mrf.mxu0
        %v3226 = vadd.f32 %v2921, %v3225
        %3227 = vmatmul.f32.gmra.mxu0 %v2869
        %v3228 = vpop.f32.mrf.mxu0
        %v3229 = vadd.f32 %v2921, %v3228
        %3230 = vmatmul.f32.gmra.mxu0 %v2870
        %v3231 = vpop.f32.mrf.mxu0
        %v3232 = vadd.f32 %v2921, %v3231
        %3233 = vmatmul.f32.gmra.mxu0 %v2871
        %v3234 = vpop.f32.mrf.mxu0
        %v3235 = vadd.f32 %v2921, %v3234
        %3236 = vmatmul.f32.gmra.mxu0 %v2872
        %v3237 = vpop.f32.mrf.mxu0
        %v3238 = vadd.f32 %v2921, %v3237
        %3239 = vmatmul.f32.gmra.mxu0 %v2873
        %v3240 = vpop.f32.mrf.mxu0
        %v3241 = vadd.f32 %v2921, %v3240
        %3242 = vmatmul.f32.gmra.mxu0 %v2874
        %v3243 = vpop.f32.mrf.mxu0
        %v3244 = vadd.f32 %v2921, %v3243
        %3245 = vmatmul.f32.gmra.mxu0 %v2875
        %v3246 = vpop.f32.mrf.mxu0
        %v3247 = vadd.f32 %v2921, %v3246
        %3248 = vmatmul.f32.gmra.mxu0 %v2876
        %v3249 = vpop.f32.mrf.mxu0
        %v3250 = vadd.f32 %v2921, %v3249
        %3251 = vmatmul.f32.gmra.mxu0 %v2877
        %v3252 = vpop.f32.mrf.mxu0
        %v3253 = vadd.f32 %v2921, %v3252
        %3254 = vmatmul.f32.gmra.mxu0 %v2878
        %v3255 = vpop.f32.mrf.mxu0
        %v3256 = vadd.f32 %v2921, %v3255
        %3257 = vmatmul.f32.gmra.mxu0 %v2879
        %v3258 = vpop.f32.mrf.mxu0
        %v3259 = vadd.f32 %v2921, %v3258
        %3260 = vmatmul.f32.gmra.mxu0 %v2880
        %v3261 = vpop.f32.mrf.mxu0
        %v3262 = vadd.f32 %v2921, %v3261
        %3263 = vmatmul.f32.gmra.mxu0 %v2881
        %v3264 = vpop.f32.mrf.mxu0
        %v3265 = vadd.f32 %v2921, %v3264
        %3266 = vmatmul.f32.gmra.mxu0 %v2882
        %v3267 = vpop.f32.mrf.mxu0
        %v3268 = vadd.f32 %v2921, %v3267
        %3269 = vmatmul.f32.gmra.mxu0 %v2883
        %v3270 = vpop.f32.mrf.mxu0
        %v3271 = vadd.f32 %v2921, %v3270
        %3272 = vmatmul.f32.gmra.mxu0 %v2884
        %v3273 = vpop.f32.mrf.mxu0
        %v3274 = vadd.f32 %v2921, %v3273
        %3275 = vmatmul.f32.gmra.mxu0 %v2885
        %v3276 = vpop.f32.mrf.mxu0
        %v3277 = vadd.f32 %v2921, %v3276
        %3278 = vmatmul.f32.gmra.mxu0 %v2886
        %v3279 = vpop.f32.mrf.mxu0
        %v3280 = vadd.f32 %v2921, %v3279
        %3281 = vmatmul.f32.gmra.mxu0 %v2887
        %v3282 = vpop.f32.mrf.mxu0
        %v3283 = vadd.f32 %v2921, %v3282
        %3284 = vmatmul.f32.gmra.mxu0 %v2888
        %v3285 = vpop.f32.mrf.mxu0
        %v3286 = vadd.f32 %v2921, %v3285
        %3287 = vmatmul.f32.gmra.mxu0 %v2889
        %v3288 = vpop.f32.mrf.mxu0
        %v3289 = vadd.f32 %v2921, %v3288
        %3290 = vmatmul.f32.gmra.mxu0 %v2890
        %v3291 = vpop.f32.mrf.mxu0
        %v3292 = vadd.f32 %v2921, %v3291
        %3293 = vmatmul.f32.gmra.mxu0 %v2891
        %v3294 = vpop.f32.mrf.mxu0
        %v3295 = vadd.f32 %v2921, %v3294
        %3296 = vmatmul.f32.gmra.mxu0 %v2892
        %v3297 = vpop.f32.mrf.mxu0
        %v3298 = vadd.f32 %v2921, %v3297
        %3299 = vmatmul.f32.gmra.mxu0 %v2893
        %v3300 = vpop.f32.mrf.mxu0
        %v3301 = vadd.f32 %v2921, %v3300
        %3302 = vmatmul.f32.gmra.mxu0 %v2894
        %v3303 = vpop.f32.mrf.mxu0
        %v3304 = vadd.f32 %v2921, %v3303
        %3305 = vmatmul.f32.gmra.mxu0 %v2895
        %v3306 = vpop.f32.mrf.mxu0
        %v3307 = vadd.f32 %v2921, %v3306
        %3308 = vmatmul.f32.gmra.mxu0 %v2896
        %v3309 = vpop.f32.mrf.mxu0
        %v3310 = vadd.f32 %v2921, %v3309
        %3311 = vmatmul.f32.gmra.mxu0 %v2897
        %v3312 = vpop.f32.mrf.mxu0
        %v3313 = vadd.f32 %v2921, %v3312
        %3314 = vmatmul.f32.gmra.mxu0 %v2898
        %v3315 = vpop.f32.mrf.mxu0
        %v3316 = vadd.f32 %v2921, %v3315
        %3317 = vmatmul.f32.gmra.mxu0 %v2899
        %v3318 = vpop.f32.mrf.mxu0
        %v3319 = vadd.f32 %v2921, %v3318
        %3320 = vmatmul.f32.gmra.mxu0 %v2900
        %v3321 = vpop.f32.mrf.mxu0
        %v3322 = vadd.f32 %v2921, %v3321
        %3323 = vdwg.mxu0
        %v3324 = vmax.f32 %v2941, 0.0
        %v3325 = vmax.f32 %v2944, 0.0
        %v3326 = vmax.f32 %v2947, 0.0
        %v3327 = vmax.f32 %v2950, 0.0
        %v3328 = vmax.f32 %v2953, 0.0
        %v3329 = vmax.f32 %v2956, 0.0
        %v3330 = vmax.f32 %v2959, 0.0
        %v3331 = vmax.f32 %v2962, 0.0
        %v3332 = vmax.f32 %v2965, 0.0
        %v3333 = vmax.f32 %v2968, 0.0
        %v3334 = vmax.f32 %v2971, 0.0
        %v3335 = vmax.f32 %v2974, 0.0
        %v3336 = vmax.f32 %v2977, 0.0
        %v3337 = vmax.f32 %v2980, 0.0
        %v3338 = vmax.f32 %v2983, 0.0
        %v3339 = vmax.f32 %v2986, 0.0
        %v3340 = vmax.f32 %v2989, 0.0
        %v3341 = vmax.f32 %v2992, 0.0
        %v3342 = vmax.f32 %v2995, 0.0
        %v3343 = vmax.f32 %v2998, 0.0
        %v3344 = vmax.f32 %v3001, 0.0
        %v3345 = vmax.f32 %v3004, 0.0
        %v3346 = vmax.f32 %v3007, 0.0
        %v3347 = vmax.f32 %v3010, 0.0
        %v3348 = vmax.f32 %v3013, 0.0
        %v3349 = vmax.f32 %v3016, 0.0
        %v3350 = vmax.f32 %v3019, 0.0
        %v3351 = vmax.f32 %v3022, 0.0
        %v3352 = vmax.f32 %v3025, 0.0
        %v3353 = vmax.f32 %v3028, 0.0
        %v3354 = vmax.f32 %v3031, 0.0
        %v3355 = vmax.f32 %v3034, 0.0
        %v3356 = vmax.f32 %v3037, 0.0
        %v3357 = vmax.f32 %v3040, 0.0
        %v3358 = vmax.f32 %v3043, 0.0
        %v3359 = vmax.f32 %v3046, 0.0
        %v3360 = vmax.f32 %v3049, 0.0
        %v3361 = vmax.f32 %v3052, 0.0
        %v3362 = vmax.f32 %v3055, 0.0
        %v3363 = vmax.f32 %v3058, 0.0
        %v3364 = vmax.f32 %v3061, 0.0
        %v3365 = vmax.f32 %v3064, 0.0
        %v3366 = vmax.f32 %v3067, 0.0
        %v3367 = vmax.f32 %v3070, 0.0
        %v3368 = vmax.f32 %v3073, 0.0
        %v3369 = vmax.f32 %v3076, 0.0
        %v3370 = vmax.f32 %v3079, 0.0
        %v3371 = vmax.f32 %v3082, 0.0
        %v3372 = vmax.f32 %v3085, 0.0
        %v3373 = vmax.f32 %v3088, 0.0
        %v3374 = vmax.f32 %v3091, 0.0
        %v3375 = vmax.f32 %v3094, 0.0
        %v3376 = vmax.f32 %v3097, 0.0
        %v3377 = vmax.f32 %v3100, 0.0
        %v3378 = vmax.f32 %v3103, 0.0
        %v3379 = vmax.f32 %v3106, 0.0
        %v3380 = vmax.f32 %v3109, 0.0
        %v3381 = vmax.f32 %v3112, 0.0
        %v3382 = vmax.f32 %v3115, 0.0
        %v3383 = vmax.f32 %v3118, 0.0
        %v3384 = vmax.f32 %v3121, 0.0
        %v3385 = vmax.f32 %v3124, 0.0
        %v3386 = vmax.f32 %v3127, 0.0
        %v3387 = vmax.f32 %v3130, 0.0
        %v3388 = vmax.f32 %v3133, 0.0
        %v3389 = vmax.f32 %v3136, 0.0
        %v3390 = vmax.f32 %v3139, 0.0
        %v3391 = vmax.f32 %v3142, 0.0
        %v3392 = vmax.f32 %v3145, 0.0
        %v3393 = vmax.f32 %v3148, 0.0
        %v3394 = vmax.f32 %v3151, 0.0
        %v3395 = vmax.f32 %v3154, 0.0
        %v3396 = vmax.f32 %v3157, 0.0
        %v3397 = vmax.f32 %v3160, 0.0
        %v3398 = vmax.f32 %v3163, 0.0
        %v3399 = vmax.f32 %v3166, 0.0
        %v3400 = vmax.f32 %v3169, 0.0
        %v3401 = vmax.f32 %v3172, 0.0
        %v3402 = vmax.f32 %v3175, 0.0
        %v3403 = vmax.f32 %v3178, 0.0
        %v3404 = vmax.f32 %v3181, 0.0
        %v3405 = vmax.f32 %v3184, 0.0
        %v3406 = vmax.f32 %v3187, 0.0
        %v3407 = vmax.f32 %v3190, 0.0
        %v3408 = vmax.f32 %v3193, 0.0
        %v3409 = vmax.f32 %v3196, 0.0
        %v3410 = vmax.f32 %v3199, 0.0
        %v3411 = vmax.f32 %v3202, 0.0
        %v3412 = vmax.f32 %v3205, 0.0
        %v3413 = vmax.f32 %v3208, 0.0
        %v3414 = vmax.f32 %v3211, 0.0
        %v3415 = vmax.f32 %v3214, 0.0
        %v3416 = vmax.f32 %v3217, 0.0
        %v3417 = vmax.f32 %v3220, 0.0
        %v3418 = vmax.f32 %v3223, 0.0
        %v3419 = vmax.f32 %v3226, 0.0
        %v3420 = vmax.f32 %v3229, 0.0
        %v3421 = vmax.f32 %v3232, 0.0
        %v3422 = vmax.f32 %v3235, 0.0
        %v3423 = vmax.f32 %v3238, 0.0
        %v3424 = vmax.f32 %v3241, 0.0
        %v3425 = vmax.f32 %v3244, 0.0
        %v3426 = vmax.f32 %v3247, 0.0
        %v3427 = vmax.f32 %v3250, 0.0
        %v3428 = vmax.f32 %v3253, 0.0
        %v3429 = vmax.f32 %v3256, 0.0
        %v3430 = vmax.f32 %v3259, 0.0
        %v3431 = vmax.f32 %v3262, 0.0
        %v3432 = vmax.f32 %v3265, 0.0
        %v3433 = vmax.f32 %v3268, 0.0
        %v3434 = vmax.f32 %v3271, 0.0
        %v3435 = vmax.f32 %v3274, 0.0
        %v3436 = vmax.f32 %v3277, 0.0
        %v3437 = vmax.f32 %v3280, 0.0
        %v3438 = vmax.f32 %v3283, 0.0
        %v3439 = vmax.f32 %v3286, 0.0
        %v3440 = vmax.f32 %v3289, 0.0
        %v3441 = vmax.f32 %v3292, 0.0
        %v3442 = vmax.f32 %v3295, 0.0
        %v3443 = vmax.f32 %v3298, 0.0
        %v3444 = vmax.f32 %v3301, 0.0
        %v3445 = vmax.f32 %v3304, 0.0
        %v3446 = vmax.f32 %v3307, 0.0
        %v3447 = vmax.f32 %v3310, 0.0
        %v3448 = vmax.f32 %v3313, 0.0
        %v3449 = vmax.f32 %v3316, 0.0
        %v3450 = vmax.f32 %v3319, 0.0
        %v3451 = vmax.f32 %v3322, 0.0
        %s3452 = scalar_lea.vmem %s2, 512
        %v3453 = vld [vmem:[%s3452] sm:$0xff]
        %v3454 = vld [vmem:[%s3452 + $0x8] sm:$0xff]
        %v3455 = vld [vmem:[%s3452 + $0x10] sm:$0xff]
        %v3456 = vld [vmem:[%s3452 + $0x18] sm:$0xff]
        %v3457 = vld [vmem:[%s3452 + $0x20] sm:$0xff]
        %v3458 = vld [vmem:[%s3452 + $0x28] sm:$0xff]
        %v3459 = vld [vmem:[%s3452 + $0x30] sm:$0xff]
        %v3460 = vld [vmem:[%s3452 + $0x38] sm:$0xff]
        %v3461 = vld [vmem:[%s3452 + $0x40] sm:$0xff]
        %v3462 = vld [vmem:[%s3452 + $0x48] sm:$0xff]
        %v3463 = vld [vmem:[%s3452 + $0x50] sm:$0xff]
        %v3464 = vld [vmem:[%s3452 + $0x58] sm:$0xff]
        %v3465 = vld [vmem:[%s3452 + $0x60] sm:$0xff]
        %v3466 = vld [vmem:[%s3452 + $0x68] sm:$0xff]
        %v3467 = vld [vmem:[%s3452 + $0x70] sm:$0xff]
        %v3468 = vld [vmem:[%s3452 + $0x78] sm:$0xff]
        %s3469 = scalar_lea.vmem %s3, 5
        %v3470 = vld [vmem:[%s3469] sm:$0x1]
        %v3472 = vperm.slane %v3470, 0
        %3474 = vmatpush.msra.mxu0 %v3468
        %3475 = vmatpush.msra.mxu0 %v3467
        %3476 = vmatpush.msra.mxu0 %v3466
        %3477 = vmatpush.msra.mxu0 %v3465
        %3478 = vmatpush.msra.mxu0 %v3464
        %3479 = vmatpush.msra.mxu0 %v3463
        %3480 = vmatpush.msra.mxu0 %v3462
        %3481 = vmatpush.msra.mxu0 %v3461
        %3482 = vmatpush.msra.mxu0 %v3460
        %3483 = vmatpush.msra.mxu0 %v3459
        %3484 = vmatpush.msra.mxu0 %v3458
        %3485 = vmatpush.msra.mxu0 %v3457
        %3486 = vmatpush.msra.mxu0 %v3456
        %3487 = vmatpush.msra.mxu0 %v3455
        %3488 = vmatpush.msra.mxu0 %v3454
        %3489 = vmatpush.msra.mxu0 %v3453
        %3490 = vmatmul.f32.gmra.mxu0 %v3324
        %v3491 = vpop.f32.mrf.mxu0
        %v3492 = vadd.f32 %v3472, %v3491
        %3493 = vmatmul.f32.gmra.mxu0 %v3325
        %v3494 = vpop.f32.mrf.mxu0
        %v3495 = vadd.f32 %v3472, %v3494
        %3496 = vmatmul.f32.gmra.mxu0 %v3326
        %v3497 = vpop.f32.mrf.mxu0
        %v3498 = vadd.f32 %v3472, %v3497
        %3499 = vmatmul.f32.gmra.mxu0 %v3327
        %v3500 = vpop.f32.mrf.mxu0
        %v3501 = vadd.f32 %v3472, %v3500
        %3502 = vmatmul.f32.gmra.mxu0 %v3328
        %v3503 = vpop.f32.mrf.mxu0
        %v3504 = vadd.f32 %v3472, %v3503
        %3505 = vmatmul.f32.gmra.mxu0 %v3329
        %v3506 = vpop.f32.mrf.mxu0
        %v3507 = vadd.f32 %v3472, %v3506
        %3508 = vmatmul.f32.gmra.mxu0 %v3330
        %v3509 = vpop.f32.mrf.mxu0
        %v3510 = vadd.f32 %v3472, %v3509
        %3511 = vmatmul.f32.gmra.mxu0 %v3331
        %v3512 = vpop.f32.mrf.mxu0
        %v3513 = vadd.f32 %v3472, %v3512
        %3514 = vmatmul.f32.gmra.mxu0 %v3332
        %v3515 = vpop.f32.mrf.mxu0
        %v3516 = vadd.f32 %v3472, %v3515
        %3517 = vmatmul.f32.gmra.mxu0 %v3333
        %v3518 = vpop.f32.mrf.mxu0
        %v3519 = vadd.f32 %v3472, %v3518
        %3520 = vmatmul.f32.gmra.mxu0 %v3334
        %v3521 = vpop.f32.mrf.mxu0
        %v3522 = vadd.f32 %v3472, %v3521
        %3523 = vmatmul.f32.gmra.mxu0 %v3335
        %v3524 = vpop.f32.mrf.mxu0
        %v3525 = vadd.f32 %v3472, %v3524
        %3526 = vmatmul.f32.gmra.mxu0 %v3336
        %v3527 = vpop.f32.mrf.mxu0
        %v3528 = vadd.f32 %v3472, %v3527
        %3529 = vmatmul.f32.gmra.mxu0 %v3337
        %v3530 = vpop.f32.mrf.mxu0
        %v3531 = vadd.f32 %v3472, %v3530
        %3532 = vmatmul.f32.gmra.mxu0 %v3338
        %v3533 = vpop.f32.mrf.mxu0
        %v3534 = vadd.f32 %v3472, %v3533
        %3535 = vmatmul.f32.gmra.mxu0 %v3339
        %v3536 = vpop.f32.mrf.mxu0
        %v3537 = vadd.f32 %v3472, %v3536
        %3538 = vmatmul.f32.gmra.mxu0 %v3340
        %v3539 = vpop.f32.mrf.mxu0
        %v3540 = vadd.f32 %v3472, %v3539
        %3541 = vmatmul.f32.gmra.mxu0 %v3341
        %v3542 = vpop.f32.mrf.mxu0
        %v3543 = vadd.f32 %v3472, %v3542
        %3544 = vmatmul.f32.gmra.mxu0 %v3342
        %v3545 = vpop.f32.mrf.mxu0
        %v3546 = vadd.f32 %v3472, %v3545
        %3547 = vmatmul.f32.gmra.mxu0 %v3343
        %v3548 = vpop.f32.mrf.mxu0
        %v3549 = vadd.f32 %v3472, %v3548
        %3550 = vmatmul.f32.gmra.mxu0 %v3344
        %v3551 = vpop.f32.mrf.mxu0
        %v3552 = vadd.f32 %v3472, %v3551
        %3553 = vmatmul.f32.gmra.mxu0 %v3345
        %v3554 = vpop.f32.mrf.mxu0
        %v3555 = vadd.f32 %v3472, %v3554
        %3556 = vmatmul.f32.gmra.mxu0 %v3346
        %v3557 = vpop.f32.mrf.mxu0
        %v3558 = vadd.f32 %v3472, %v3557
        %3559 = vmatmul.f32.gmra.mxu0 %v3347
        %v3560 = vpop.f32.mrf.mxu0
        %v3561 = vadd.f32 %v3472, %v3560
        %3562 = vmatmul.f32.gmra.mxu0 %v3348
        %v3563 = vpop.f32.mrf.mxu0
        %v3564 = vadd.f32 %v3472, %v3563
        %3565 = vmatmul.f32.gmra.mxu0 %v3349
        %v3566 = vpop.f32.mrf.mxu0
        %v3567 = vadd.f32 %v3472, %v3566
        %3568 = vmatmul.f32.gmra.mxu0 %v3350
        %v3569 = vpop.f32.mrf.mxu0
        %v3570 = vadd.f32 %v3472, %v3569
        %3571 = vmatmul.f32.gmra.mxu0 %v3351
        %v3572 = vpop.f32.mrf.mxu0
        %v3573 = vadd.f32 %v3472, %v3572
        %3574 = vmatmul.f32.gmra.mxu0 %v3352
        %v3575 = vpop.f32.mrf.mxu0
        %v3576 = vadd.f32 %v3472, %v3575
        %3577 = vmatmul.f32.gmra.mxu0 %v3353
        %v3578 = vpop.f32.mrf.mxu0
        %v3579 = vadd.f32 %v3472, %v3578
        %3580 = vmatmul.f32.gmra.mxu0 %v3354
        %v3581 = vpop.f32.mrf.mxu0
        %v3582 = vadd.f32 %v3472, %v3581
        %3583 = vmatmul.f32.gmra.mxu0 %v3355
        %v3584 = vpop.f32.mrf.mxu0
        %v3585 = vadd.f32 %v3472, %v3584
        %3586 = vmatmul.f32.gmra.mxu0 %v3356
        %v3587 = vpop.f32.mrf.mxu0
        %v3588 = vadd.f32 %v3472, %v3587
        %3589 = vmatmul.f32.gmra.mxu0 %v3357
        %v3590 = vpop.f32.mrf.mxu0
        %v3591 = vadd.f32 %v3472, %v3590
        %3592 = vmatmul.f32.gmra.mxu0 %v3358
        %v3593 = vpop.f32.mrf.mxu0
        %v3594 = vadd.f32 %v3472, %v3593
        %3595 = vmatmul.f32.gmra.mxu0 %v3359
        %v3596 = vpop.f32.mrf.mxu0
        %v3597 = vadd.f32 %v3472, %v3596
        %3598 = vmatmul.f32.gmra.mxu0 %v3360
        %v3599 = vpop.f32.mrf.mxu0
        %v3600 = vadd.f32 %v3472, %v3599
        %3601 = vmatmul.f32.gmra.mxu0 %v3361
        %v3602 = vpop.f32.mrf.mxu0
        %v3603 = vadd.f32 %v3472, %v3602
        %3604 = vmatmul.f32.gmra.mxu0 %v3362
        %v3605 = vpop.f32.mrf.mxu0
        %v3606 = vadd.f32 %v3472, %v3605
        %3607 = vmatmul.f32.gmra.mxu0 %v3363
        %v3608 = vpop.f32.mrf.mxu0
        %v3609 = vadd.f32 %v3472, %v3608
        %3610 = vmatmul.f32.gmra.mxu0 %v3364
        %v3611 = vpop.f32.mrf.mxu0
        %v3612 = vadd.f32 %v3472, %v3611
        %3613 = vmatmul.f32.gmra.mxu0 %v3365
        %v3614 = vpop.f32.mrf.mxu0
        %v3615 = vadd.f32 %v3472, %v3614
        %3616 = vmatmul.f32.gmra.mxu0 %v3366
        %v3617 = vpop.f32.mrf.mxu0
        %v3618 = vadd.f32 %v3472, %v3617
        %3619 = vmatmul.f32.gmra.mxu0 %v3367
        %v3620 = vpop.f32.mrf.mxu0
        %v3621 = vadd.f32 %v3472, %v3620
        %3622 = vmatmul.f32.gmra.mxu0 %v3368
        %v3623 = vpop.f32.mrf.mxu0
        %v3624 = vadd.f32 %v3472, %v3623
        %3625 = vmatmul.f32.gmra.mxu0 %v3369
        %v3626 = vpop.f32.mrf.mxu0
        %v3627 = vadd.f32 %v3472, %v3626
        %3628 = vmatmul.f32.gmra.mxu0 %v3370
        %v3629 = vpop.f32.mrf.mxu0
        %v3630 = vadd.f32 %v3472, %v3629
        %3631 = vmatmul.f32.gmra.mxu0 %v3371
        %v3632 = vpop.f32.mrf.mxu0
        %v3633 = vadd.f32 %v3472, %v3632
        %3634 = vmatmul.f32.gmra.mxu0 %v3372
        %v3635 = vpop.f32.mrf.mxu0
        %v3636 = vadd.f32 %v3472, %v3635
        %3637 = vmatmul.f32.gmra.mxu0 %v3373
        %v3638 = vpop.f32.mrf.mxu0
        %v3639 = vadd.f32 %v3472, %v3638
        %3640 = vmatmul.f32.gmra.mxu0 %v3374
        %v3641 = vpop.f32.mrf.mxu0
        %v3642 = vadd.f32 %v3472, %v3641
        %3643 = vmatmul.f32.gmra.mxu0 %v3375
        %v3644 = vpop.f32.mrf.mxu0
        %v3645 = vadd.f32 %v3472, %v3644
        %3646 = vmatmul.f32.gmra.mxu0 %v3376
        %v3647 = vpop.f32.mrf.mxu0
        %v3648 = vadd.f32 %v3472, %v3647
        %3649 = vmatmul.f32.gmra.mxu0 %v3377
        %v3650 = vpop.f32.mrf.mxu0
        %v3651 = vadd.f32 %v3472, %v3650
        %3652 = vmatmul.f32.gmra.mxu0 %v3378
        %v3653 = vpop.f32.mrf.mxu0
        %v3654 = vadd.f32 %v3472, %v3653
        %3655 = vmatmul.f32.gmra.mxu0 %v3379
        %v3656 = vpop.f32.mrf.mxu0
        %v3657 = vadd.f32 %v3472, %v3656
        %3658 = vmatmul.f32.gmra.mxu0 %v3380
        %v3659 = vpop.f32.mrf.mxu0
        %v3660 = vadd.f32 %v3472, %v3659
        %3661 = vmatmul.f32.gmra.mxu0 %v3381
        %v3662 = vpop.f32.mrf.mxu0
        %v3663 = vadd.f32 %v3472, %v3662
        %3664 = vmatmul.f32.gmra.mxu0 %v3382
        %v3665 = vpop.f32.mrf.mxu0
        %v3666 = vadd.f32 %v3472, %v3665
        %3667 = vmatmul.f32.gmra.mxu0 %v3383
        %v3668 = vpop.f32.mrf.mxu0
        %v3669 = vadd.f32 %v3472, %v3668
        %3670 = vmatmul.f32.gmra.mxu0 %v3384
        %v3671 = vpop.f32.mrf.mxu0
        %v3672 = vadd.f32 %v3472, %v3671
        %3673 = vmatmul.f32.gmra.mxu0 %v3385
        %v3674 = vpop.f32.mrf.mxu0
        %v3675 = vadd.f32 %v3472, %v3674
        %3676 = vmatmul.f32.gmra.mxu0 %v3386
        %v3677 = vpop.f32.mrf.mxu0
        %v3678 = vadd.f32 %v3472, %v3677
        %3679 = vmatmul.f32.gmra.mxu0 %v3387
        %v3680 = vpop.f32.mrf.mxu0
        %v3681 = vadd.f32 %v3472, %v3680
        %3682 = vmatmul.f32.gmra.mxu0 %v3388
        %v3683 = vpop.f32.mrf.mxu0
        %v3684 = vadd.f32 %v3472, %v3683
        %3685 = vmatmul.f32.gmra.mxu0 %v3389
        %v3686 = vpop.f32.mrf.mxu0
        %v3687 = vadd.f32 %v3472, %v3686
        %3688 = vmatmul.f32.gmra.mxu0 %v3390
        %v3689 = vpop.f32.mrf.mxu0
        %v3690 = vadd.f32 %v3472, %v3689
        %3691 = vmatmul.f32.gmra.mxu0 %v3391
        %v3692 = vpop.f32.mrf.mxu0
        %v3693 = vadd.f32 %v3472, %v3692
        %3694 = vmatmul.f32.gmra.mxu0 %v3392
        %v3695 = vpop.f32.mrf.mxu0
        %v3696 = vadd.f32 %v3472, %v3695
        %3697 = vmatmul.f32.gmra.mxu0 %v3393
        %v3698 = vpop.f32.mrf.mxu0
        %v3699 = vadd.f32 %v3472, %v3698
        %3700 = vmatmul.f32.gmra.mxu0 %v3394
        %v3701 = vpop.f32.mrf.mxu0
        %v3702 = vadd.f32 %v3472, %v3701
        %3703 = vmatmul.f32.gmra.mxu0 %v3395
        %v3704 = vpop.f32.mrf.mxu0
        %v3705 = vadd.f32 %v3472, %v3704
        %3706 = vmatmul.f32.gmra.mxu0 %v3396
        %v3707 = vpop.f32.mrf.mxu0
        %v3708 = vadd.f32 %v3472, %v3707
        %3709 = vmatmul.f32.gmra.mxu0 %v3397
        %v3710 = vpop.f32.mrf.mxu0
        %v3711 = vadd.f32 %v3472, %v3710
        %3712 = vmatmul.f32.gmra.mxu0 %v3398
        %v3713 = vpop.f32.mrf.mxu0
        %v3714 = vadd.f32 %v3472, %v3713
        %3715 = vmatmul.f32.gmra.mxu0 %v3399
        %v3716 = vpop.f32.mrf.mxu0
        %v3717 = vadd.f32 %v3472, %v3716
        %3718 = vmatmul.f32.gmra.mxu0 %v3400
        %v3719 = vpop.f32.mrf.mxu0
        %v3720 = vadd.f32 %v3472, %v3719
        %3721 = vmatmul.f32.gmra.mxu0 %v3401
        %v3722 = vpop.f32.mrf.mxu0
        %v3723 = vadd.f32 %v3472, %v3722
        %3724 = vmatmul.f32.gmra.mxu0 %v3402
        %v3725 = vpop.f32.mrf.mxu0
        %v3726 = vadd.f32 %v3472, %v3725
        %3727 = vmatmul.f32.gmra.mxu0 %v3403
        %v3728 = vpop.f32.mrf.mxu0
        %v3729 = vadd.f32 %v3472, %v3728
        %3730 = vmatmul.f32.gmra.mxu0 %v3404
        %v3731 = vpop.f32.mrf.mxu0
        %v3732 = vadd.f32 %v3472, %v3731
        %3733 = vmatmul.f32.gmra.mxu0 %v3405
        %v3734 = vpop.f32.mrf.mxu0
        %v3735 = vadd.f32 %v3472, %v3734
        %3736 = vmatmul.f32.gmra.mxu0 %v3406
        %v3737 = vpop.f32.mrf.mxu0
        %v3738 = vadd.f32 %v3472, %v3737
        %3739 = vmatmul.f32.gmra.mxu0 %v3407
        %v3740 = vpop.f32.mrf.mxu0
        %v3741 = vadd.f32 %v3472, %v3740
        %3742 = vmatmul.f32.gmra.mxu0 %v3408
        %v3743 = vpop.f32.mrf.mxu0
        %v3744 = vadd.f32 %v3472, %v3743
        %3745 = vmatmul.f32.gmra.mxu0 %v3409
        %v3746 = vpop.f32.mrf.mxu0
        %v3747 = vadd.f32 %v3472, %v3746
        %3748 = vmatmul.f32.gmra.mxu0 %v3410
        %v3749 = vpop.f32.mrf.mxu0
        %v3750 = vadd.f32 %v3472, %v3749
        %3751 = vmatmul.f32.gmra.mxu0 %v3411
        %v3752 = vpop.f32.mrf.mxu0
        %v3753 = vadd.f32 %v3472, %v3752
        %3754 = vmatmul.f32.gmra.mxu0 %v3412
        %v3755 = vpop.f32.mrf.mxu0
        %v3756 = vadd.f32 %v3472, %v3755
        %3757 = vmatmul.f32.gmra.mxu0 %v3413
        %v3758 = vpop.f32.mrf.mxu0
        %v3759 = vadd.f32 %v3472, %v3758
        %3760 = vmatmul.f32.gmra.mxu0 %v3414
        %v3761 = vpop.f32.mrf.mxu0
        %v3762 = vadd.f32 %v3472, %v3761
        %3763 = vmatmul.f32.gmra.mxu0 %v3415
        %v3764 = vpop.f32.mrf.mxu0
        %v3765 = vadd.f32 %v3472, %v3764
        %3766 = vmatmul.f32.gmra.mxu0 %v3416
        %v3767 = vpop.f32.mrf.mxu0
        %v3768 = vadd.f32 %v3472, %v3767
        %3769 = vmatmul.f32.gmra.mxu0 %v3417
        %v3770 = vpop.f32.mrf.mxu0
        %v3771 = vadd.f32 %v3472, %v3770
        %3772 = vmatmul.f32.gmra.mxu0 %v3418
        %v3773 = vpop.f32.mrf.mxu0
        %v3774 = vadd.f32 %v3472, %v3773
        %3775 = vmatmul.f32.gmra.mxu0 %v3419
        %v3776 = vpop.f32.mrf.mxu0
        %v3777 = vadd.f32 %v3472, %v3776
        %3778 = vmatmul.f32.gmra.mxu0 %v3420
        %v3779 = vpop.f32.mrf.mxu0
        %v3780 = vadd.f32 %v3472, %v3779
        %3781 = vmatmul.f32.gmra.mxu0 %v3421
        %v3782 = vpop.f32.mrf.mxu0
        %v3783 = vadd.f32 %v3472, %v3782
        %3784 = vmatmul.f32.gmra.mxu0 %v3422
        %v3785 = vpop.f32.mrf.mxu0
        %v3786 = vadd.f32 %v3472, %v3785
        %3787 = vmatmul.f32.gmra.mxu0 %v3423
        %v3788 = vpop.f32.mrf.mxu0
        %v3789 = vadd.f32 %v3472, %v3788
        %3790 = vmatmul.f32.gmra.mxu0 %v3424
        %v3791 = vpop.f32.mrf.mxu0
        %v3792 = vadd.f32 %v3472, %v3791
        %3793 = vmatmul.f32.gmra.mxu0 %v3425
        %v3794 = vpop.f32.mrf.mxu0
        %v3795 = vadd.f32 %v3472, %v3794
        %3796 = vmatmul.f32.gmra.mxu0 %v3426
        %v3797 = vpop.f32.mrf.mxu0
        %v3798 = vadd.f32 %v3472, %v3797
        %3799 = vmatmul.f32.gmra.mxu0 %v3427
        %v3800 = vpop.f32.mrf.mxu0
        %v3801 = vadd.f32 %v3472, %v3800
        %3802 = vmatmul.f32.gmra.mxu0 %v3428
        %v3803 = vpop.f32.mrf.mxu0
        %v3804 = vadd.f32 %v3472, %v3803
        %3805 = vmatmul.f32.gmra.mxu0 %v3429
        %v3806 = vpop.f32.mrf.mxu0
        %v3807 = vadd.f32 %v3472, %v3806
        %3808 = vmatmul.f32.gmra.mxu0 %v3430
        %v3809 = vpop.f32.mrf.mxu0
        %v3810 = vadd.f32 %v3472, %v3809
        %3811 = vmatmul.f32.gmra.mxu0 %v3431
        %v3812 = vpop.f32.mrf.mxu0
        %v3813 = vadd.f32 %v3472, %v3812
        %3814 = vmatmul.f32.gmra.mxu0 %v3432
        %v3815 = vpop.f32.mrf.mxu0
        %v3816 = vadd.f32 %v3472, %v3815
        %3817 = vmatmul.f32.gmra.mxu0 %v3433
        %v3818 = vpop.f32.mrf.mxu0
        %v3819 = vadd.f32 %v3472, %v3818
        %3820 = vmatmul.f32.gmra.mxu0 %v3434
        %v3821 = vpop.f32.mrf.mxu0
        %v3822 = vadd.f32 %v3472, %v3821
        %3823 = vmatmul.f32.gmra.mxu0 %v3435
        %v3824 = vpop.f32.mrf.mxu0
        %v3825 = vadd.f32 %v3472, %v3824
        %3826 = vmatmul.f32.gmra.mxu0 %v3436
        %v3827 = vpop.f32.mrf.mxu0
        %v3828 = vadd.f32 %v3472, %v3827
        %3829 = vmatmul.f32.gmra.mxu0 %v3437
        %v3830 = vpop.f32.mrf.mxu0
        %v3831 = vadd.f32 %v3472, %v3830
        %3832 = vmatmul.f32.gmra.mxu0 %v3438
        %v3833 = vpop.f32.mrf.mxu0
        %v3834 = vadd.f32 %v3472, %v3833
        %3835 = vmatmul.f32.gmra.mxu0 %v3439
        %v3836 = vpop.f32.mrf.mxu0
        %v3837 = vadd.f32 %v3472, %v3836
        %3838 = vmatmul.f32.gmra.mxu0 %v3440
        %v3839 = vpop.f32.mrf.mxu0
        %v3840 = vadd.f32 %v3472, %v3839
        %3841 = vmatmul.f32.gmra.mxu0 %v3441
        %v3842 = vpop.f32.mrf.mxu0
        %v3843 = vadd.f32 %v3472, %v3842
        %3844 = vmatmul.f32.gmra.mxu0 %v3442
        %v3845 = vpop.f32.mrf.mxu0
        %v3846 = vadd.f32 %v3472, %v3845
        %3847 = vmatmul.f32.gmra.mxu0 %v3443
        %v3848 = vpop.f32.mrf.mxu0
        %v3849 = vadd.f32 %v3472, %v3848
        %3850 = vmatmul.f32.gmra.mxu0 %v3444
        %v3851 = vpop.f32.mrf.mxu0
        %v3852 = vadd.f32 %v3472, %v3851
        %3853 = vmatmul.f32.gmra.mxu0 %v3445
        %v3854 = vpop.f32.mrf.mxu0
        %v3855 = vadd.f32 %v3472, %v3854
        %3856 = vmatmul.f32.gmra.mxu0 %v3446
        %v3857 = vpop.f32.mrf.mxu0
        %v3858 = vadd.f32 %v3472, %v3857
        %3859 = vmatmul.f32.gmra.mxu0 %v3447
        %v3860 = vpop.f32.mrf.mxu0
        %v3861 = vadd.f32 %v3472, %v3860
        %3862 = vmatmul.f32.gmra.mxu0 %v3448
        %v3863 = vpop.f32.mrf.mxu0
        %v3864 = vadd.f32 %v3472, %v3863
        %3865 = vmatmul.f32.gmra.mxu0 %v3449
        %v3866 = vpop.f32.mrf.mxu0
        %v3867 = vadd.f32 %v3472, %v3866
        %3868 = vmatmul.f32.gmra.mxu0 %v3450
        %v3869 = vpop.f32.mrf.mxu0
        %v3870 = vadd.f32 %v3472, %v3869
        %3871 = vmatmul.f32.gmra.mxu0 %v3451
        %v3872 = vpop.f32.mrf.mxu0
        %v3873 = vadd.f32 %v3472, %v3872
        %3874 = vdwg.mxu0
        %3875 = vst [vmem:[%s191] sm:$0xff] %v3492
        %3876 = vst [vmem:[%s191 + $0x8] sm:$0xff] %v3495
        %3877 = vst [vmem:[%s191 + $0x10] sm:$0xff] %v3498
        %3878 = vst [vmem:[%s191 + $0x18] sm:$0xff] %v3501
        %3879 = vst [vmem:[%s191 + $0x20] sm:$0xff] %v3504
        %3880 = vst [vmem:[%s191 + $0x28] sm:$0xff] %v3507
        %3881 = vst [vmem:[%s191 + $0x30] sm:$0xff] %v3510
        %3882 = vst [vmem:[%s191 + $0x38] sm:$0xff] %v3513
        %3883 = vst [vmem:[%s191 + $0x40] sm:$0xff] %v3516
        %3884 = vst [vmem:[%s191 + $0x48] sm:$0xff] %v3519
        %3885 = vst [vmem:[%s191 + $0x50] sm:$0xff] %v3522
        %3886 = vst [vmem:[%s191 + $0x58] sm:$0xff] %v3525
        %3887 = vst [vmem:[%s191 + $0x60] sm:$0xff] %v3528
        %3888 = vst [vmem:[%s191 + $0x68] sm:$0xff] %v3531
        %3889 = vst [vmem:[%s191 + $0x70] sm:$0xff] %v3534
        %3890 = vst [vmem:[%s191 + $0x78] sm:$0xff] %v3537
        %3891 = vst [vmem:[%s191 + $0x80] sm:$0xff] %v3540
        %3892 = vst [vmem:[%s191 + $0x88] sm:$0xff] %v3543
        %3893 = vst [vmem:[%s191 + $0x90] sm:$0xff] %v3546
        %3894 = vst [vmem:[%s191 + $0x98] sm:$0xff] %v3549
        %3895 = vst [vmem:[%s191 + $0xa0] sm:$0xff] %v3552
        %3896 = vst [vmem:[%s191 + $0xa8] sm:$0xff] %v3555
        %3897 = vst [vmem:[%s191 + $0xb0] sm:$0xff] %v3558
        %3898 = vst [vmem:[%s191 + $0xb8] sm:$0xff] %v3561
        %3899 = vst [vmem:[%s191 + $0xc0] sm:$0xff] %v3564
        %3900 = vst [vmem:[%s191 + $0xc8] sm:$0xff] %v3567
        %3901 = vst [vmem:[%s191 + $0xd0] sm:$0xff] %v3570
        %3902 = vst [vmem:[%s191 + $0xd8] sm:$0xff] %v3573
        %3903 = vst [vmem:[%s191 + $0xe0] sm:$0xff] %v3576
        %3904 = vst [vmem:[%s191 + $0xe8] sm:$0xff] %v3579
        %3905 = vst [vmem:[%s191 + $0xf0] sm:$0xff] %v3582
        %3906 = vst [vmem:[%s191 + $0xf8] sm:$0xff] %v3585
        %3907 = vst [vmem:[%s191 + $0x100] sm:$0xff] %v3588
        %3908 = vst [vmem:[%s191 + $0x108] sm:$0xff] %v3591
        %3909 = vst [vmem:[%s191 + $0x110] sm:$0xff] %v3594
        %3910 = vst [vmem:[%s191 + $0x118] sm:$0xff] %v3597
        %3911 = vst [vmem:[%s191 + $0x120] sm:$0xff] %v3600
        %3912 = vst [vmem:[%s191 + $0x128] sm:$0xff] %v3603
        %3913 = vst [vmem:[%s191 + $0x130] sm:$0xff] %v3606
        %3914 = vst [vmem:[%s191 + $0x138] sm:$0xff] %v3609
        %3915 = vst [vmem:[%s191 + $0x140] sm:$0xff] %v3612
        %3916 = vst [vmem:[%s191 + $0x148] sm:$0xff] %v3615
        %3917 = vst [vmem:[%s191 + $0x150] sm:$0xff] %v3618
        %3918 = vst [vmem:[%s191 + $0x158] sm:$0xff] %v3621
        %3919 = vst [vmem:[%s191 + $0x160] sm:$0xff] %v3624
        %3920 = vst [vmem:[%s191 + $0x168] sm:$0xff] %v3627
        %3921 = vst [vmem:[%s191 + $0x170] sm:$0xff] %v3630
        %3922 = vst [vmem:[%s191 + $0x178] sm:$0xff] %v3633
        %3923 = vst [vmem:[%s191 + $0x180] sm:$0xff] %v3636
        %3924 = vst [vmem:[%s191 + $0x188] sm:$0xff] %v3639
        %3925 = vst [vmem:[%s191 + $0x190] sm:$0xff] %v3642
        %3926 = vst [vmem:[%s191 + $0x198] sm:$0xff] %v3645
        %3927 = vst [vmem:[%s191 + $0x1a0] sm:$0xff] %v3648
        %3928 = vst [vmem:[%s191 + $0x1a8] sm:$0xff] %v3651
        %3929 = vst [vmem:[%s191 + $0x1b0] sm:$0xff] %v3654
        %3930 = vst [vmem:[%s191 + $0x1b8] sm:$0xff] %v3657
        %3931 = vst [vmem:[%s191 + $0x1c0] sm:$0xff] %v3660
        %3932 = vst [vmem:[%s191 + $0x1c8] sm:$0xff] %v3663
        %3933 = vst [vmem:[%s191 + $0x1d0] sm:$0xff] %v3666
        %3934 = vst [vmem:[%s191 + $0x1d8] sm:$0xff] %v3669
        %3935 = vst [vmem:[%s191 + $0x1e0] sm:$0xff] %v3672
        %3936 = vst [vmem:[%s191 + $0x1e8] sm:$0xff] %v3675
        %3937 = vst [vmem:[%s191 + $0x1f0] sm:$0xff] %v3678
        %3938 = vst [vmem:[%s191 + $0x1f8] sm:$0xff] %v3681
        %3939 = vst [vmem:[%s191 + $0x200] sm:$0xff] %v3684
        %3940 = vst [vmem:[%s191 + $0x208] sm:$0xff] %v3687
        %3941 = vst [vmem:[%s191 + $0x210] sm:$0xff] %v3690
        %3942 = vst [vmem:[%s191 + $0x218] sm:$0xff] %v3693
        %3943 = vst [vmem:[%s191 + $0x220] sm:$0xff] %v3696
        %3944 = vst [vmem:[%s191 + $0x228] sm:$0xff] %v3699
        %3945 = vst [vmem:[%s191 + $0x230] sm:$0xff] %v3702
        %3946 = vst [vmem:[%s191 + $0x238] sm:$0xff] %v3705
        %3947 = vst [vmem:[%s191 + $0x240] sm:$0xff] %v3708
        %3948 = vst [vmem:[%s191 + $0x248] sm:$0xff] %v3711
        %3949 = vst [vmem:[%s191 + $0x250] sm:$0xff] %v3714
        %3950 = vst [vmem:[%s191 + $0x258] sm:$0xff] %v3717
        %3951 = vst [vmem:[%s191 + $0x260] sm:$0xff] %v3720
        %3952 = vst [vmem:[%s191 + $0x268] sm:$0xff] %v3723
        %3953 = vst [vmem:[%s191 + $0x270] sm:$0xff] %v3726
        %3954 = vst [vmem:[%s191 + $0x278] sm:$0xff] %v3729
        %3955 = vst [vmem:[%s191 + $0x280] sm:$0xff] %v3732
        %3956 = vst [vmem:[%s191 + $0x288] sm:$0xff] %v3735
        %3957 = vst [vmem:[%s191 + $0x290] sm:$0xff] %v3738
        %3958 = vst [vmem:[%s191 + $0x298] sm:$0xff] %v3741
        %3959 = vst [vmem:[%s191 + $0x2a0] sm:$0xff] %v3744
        %3960 = vst [vmem:[%s191 + $0x2a8] sm:$0xff] %v3747
        %3961 = vst [vmem:[%s191 + $0x2b0] sm:$0xff] %v3750
        %3962 = vst [vmem:[%s191 + $0x2b8] sm:$0xff] %v3753
        %3963 = vst [vmem:[%s191 + $0x2c0] sm:$0xff] %v3756
        %3964 = vst [vmem:[%s191 + $0x2c8] sm:$0xff] %v3759
        %3965 = vst [vmem:[%s191 + $0x2d0] sm:$0xff] %v3762
        %3966 = vst [vmem:[%s191 + $0x2d8] sm:$0xff] %v3765
        %3967 = vst [vmem:[%s191 + $0x2e0] sm:$0xff] %v3768
        %3968 = vst [vmem:[%s191 + $0x2e8] sm:$0xff] %v3771
        %3969 = vst [vmem:[%s191 + $0x2f0] sm:$0xff] %v3774
        %3970 = vst [vmem:[%s191 + $0x2f8] sm:$0xff] %v3777
        %3971 = vst [vmem:[%s191 + $0x300] sm:$0xff] %v3780
        %3972 = vst [vmem:[%s191 + $0x308] sm:$0xff] %v3783
        %3973 = vst [vmem:[%s191 + $0x310] sm:$0xff] %v3786
        %3974 = vst [vmem:[%s191 + $0x318] sm:$0xff] %v3789
        %3975 = vst [vmem:[%s191 + $0x320] sm:$0xff] %v3792
        %3976 = vst [vmem:[%s191 + $0x328] sm:$0xff] %v3795
        %3977 = vst [vmem:[%s191 + $0x330] sm:$0xff] %v3798
        %3978 = vst [vmem:[%s191 + $0x338] sm:$0xff] %v3801
        %3979 = vst [vmem:[%s191 + $0x340] sm:$0xff] %v3804
        %3980 = vst [vmem:[%s191 + $0x348] sm:$0xff] %v3807
        %3981 = vst [vmem:[%s191 + $0x350] sm:$0xff] %v3810
        %3982 = vst [vmem:[%s191 + $0x358] sm:$0xff] %v3813
        %3983 = vst [vmem:[%s191 + $0x360] sm:$0xff] %v3816
        %3984 = vst [vmem:[%s191 + $0x368] sm:$0xff] %v3819
        %3985 = vst [vmem:[%s191 + $0x370] sm:$0xff] %v3822
        %3986 = vst [vmem:[%s191 + $0x378] sm:$0xff] %v3825
        %3987 = vst [vmem:[%s191 + $0x380] sm:$0xff] %v3828
        %3988 = vst [vmem:[%s191 + $0x388] sm:$0xff] %v3831
        %3989 = vst [vmem:[%s191 + $0x390] sm:$0xff] %v3834
        %3990 = vst [vmem:[%s191 + $0x398] sm:$0xff] %v3837
        %3991 = vst [vmem:[%s191 + $0x3a0] sm:$0xff] %v3840
        %3992 = vst [vmem:[%s191 + $0x3a8] sm:$0xff] %v3843
        %3993 = vst [vmem:[%s191 + $0x3b0] sm:$0xff] %v3846
        %3994 = vst [vmem:[%s191 + $0x3b8] sm:$0xff] %v3849
        %3995 = vst [vmem:[%s191 + $0x3c0] sm:$0xff] %v3852
        %3996 = vst [vmem:[%s191 + $0x3c8] sm:$0xff] %v3855
        %3997 = vst [vmem:[%s191 + $0x3d0] sm:$0xff] %v3858
        %3998 = vst [vmem:[%s191 + $0x3d8] sm:$0xff] %v3861
        %3999 = vst [vmem:[%s191 + $0x3e0] sm:$0xff] %v3864
        %4000 = vst [vmem:[%s191 + $0x3e8] sm:$0xff] %v3867
        %4001 = vst [vmem:[%s191 + $0x3f0] sm:$0xff] %v3870
        %4002 = vst [vmem:[%s191 + $0x3f8] sm:$0xff] %v3873
        %s4003 = sand.u32 %s115, 1
        %s4004 = scalar_lea.sflag [#allocation3], %s4003
        %s4005 = sand.u32 %s115, 1
        %s4006 = smul.addr %s4005, 1024
        %s4007 = scalar_lea.vmem [#allocation2], %s4006
        // Predicated region
        $region37: #{tpu_custom_call.1} parent=35 // pred_check
          %p4008 = pneg %p125
        $region38: #{tpu_custom_call.1} parent=35 // pred_check_branch
          %4010 = sbr.rel (%p4008) target = $region40
        $region39: #{tpu_custom_call.1} parent=35 // pred_region
          %s4011 = smul.u32 128, %s18
          %4013 = vsyncadd %s4004, 0
          %s4014 = smul.addr %s4011, 8
          %s4015 = scalar_lea.hbm %s4, %s4014
          %s4016 = sshll.u32 %s4007, 4
          %s4017 = int_to_ptr.vmem [resolvable:$true] %s4016
          %s4018 = sshll.u32 %s4015, 4
          %s4019 = int_to_ptr.hbm [resolvable:$true] %s4018
          %4024 = dma.vmem_to_hbm [thread:$0]  %s4017, 16384, %s4019, %s4004, 128, 128, 8
        $region40: #{tpu_custom_call.1} parent=35 // pred_fallthru
          _
      $region36: #{tpu_custom_call.1} parent=5 // pred_fallthru
        _
      %p4025 = scmp.le.s32.totalorder 2, %s13
      // Predicated region
      $region41: #{tpu_custom_call.1} parent=5 // pred_check
        %p4026 = pneg %p4025
      $region42: #{tpu_custom_call.1} parent=5 // pred_check_branch
        %4028 = sbr.rel (%p4026) target = $region44
      $region43: #{tpu_custom_call.1} parent=5 // pred_region
        %s4029 = ssub.s32 %s13, 2
        // Predicated region
        $region45: #{tpu_custom_call.1} parent=43 // pred_check
          %p4030 = pneg %p131
        $region46: #{tpu_custom_call.1} parent=43 // pred_check_branch
          %4032 = sbr.rel (%p4030) target = $region48
        $region47: #{tpu_custom_call.1} parent=43 // pred_region
          %s4033 = sand.u32 %s116, 1
          %s4034 = scalar_lea.sflag [#allocation3], %s4033
          %s4035 = sand.u32 %s116, 1
          %s4036 = smul.addr %s4035, 1024
          %s4037 = scalar_lea.vmem [#allocation2], %s4036
          %4039 = dma.done %s4034, 16384
        $region48: #{tpu_custom_call.1} parent=43 // pred_fallthru
          _
      $region44: #{tpu_custom_call.1} parent=5 // pred_fallthru
        _
    $region6: #{tpu_custom_call.1} parent=1 // loop_footer
      %s17 = sadd.s32 1, %s13
    $region7: #{tpu_custom_call.1} parent=1 // loop_footer_branch
      %12 = sbr.rel target = $region3
    $region8: #{tpu_custom_call.1} parent=1 // loop_exit
      _
    %4040 = vsyncpa [#allocation3], 1
    %s4041 = scalar_lea.sflag [#allocation3], 1
    %4042 = vsyncpa %s4041, 1

</llo_original>
